<compile_context>
chip_gen: v5e
topology: v5e:2x2
jax: 0.10.0
libtpu: 0.0.40
codegen_flags: <defaults>
</compile_context>

<pallas_src>
import math
from functools import partial

import jax
import jax.numpy as jnp
from jax.experimental import pallas as pl
from jax.experimental.pallas import tpu as pltpu

LN_EPS = 1e-5                 # nn.LayerNorm default
MXU_DTYPE = jnp.bfloat16      # MXU operand dtype (f32 accumulation everywhere)
NEG_INF = -1e30               # additive mask constant (kept in f32)


# ------------------------------ tile helpers --------------------------------

def _row_tile(m, target=256):
    """Row (sublane-ish) tile: full if small, else a multiple-of-8 divisor."""
    if m <= target:
        return m
    for c in (256, 128, 64, 32, 16, 8):
        if m % c == 0:
            return c
    return m


def _col_tile(n, target=2048):
    """Lane-axis tile: full if it fits comfortably, else a multiple-of-128 divisor."""
    if n <= target:
        return n
    for c in (2048, 1024, 512, 256, 128):
        if n % c == 0:
            return c
    return n


# ----------------------------- Pallas kernels ------------------------------

def _linear_kernel(x_ref, w_ref, b_ref, o_ref):
    # x: (tm, K) f32, w: (K, tn) bf16, b: (1, tn) f32 -> o: (tm, tn) f32
    x = x_ref[...].astype(MXU_DTYPE)
    o_ref[...] = jnp.dot(x, w_ref[...], preferred_element_type=jnp.float32) + b_ref[...]


def linear(x2d, w, b):
    """Tiled matmul over (M, N); K (= d_model) kept whole per tile."""
    M, K = x2d.shape
    N = w.shape[1]
    tm, tn = _row_tile(M), _col_tile(N)
    return pl.pallas_call(
        _linear_kernel,
        out_shape=jax.ShapeDtypeStruct((M, N), jnp.float32),
        grid=(M // tm, N // tn),
        in_specs=[
            pl.BlockSpec((tm, K), lambda i, j: (i, 0)),
            pl.BlockSpec((K, tn), lambda i, j: (0, j)),
            pl.BlockSpec((1, tn), lambda i, j: (0, j)),
        ],
        out_specs=pl.BlockSpec((tm, tn), lambda i, j: (i, j)),
        compiler_params=pltpu.CompilerParams(
            dimension_semantics=("parallel", "parallel")),
    )(x2d, w, b.reshape(1, N))


def _qkv_proj_kernel(x_ref, w_ref, b_ref, q_ref, kv_ref, *, d_model):
    # Fused Q|K|V projection: one MXU pass against the concatenated (D, 3D) weight.
    x = x_ref[...].astype(MXU_DTYPE)
    y = jnp.dot(x, w_ref[...], preferred_element_type=jnp.float32) + b_ref[...]
    q_ref[...] = y[:, :d_model]
    kv_ref[...] = y[:, d_model:]


def qkv_proj(x2d, w_qkv, b_qkv, d_model):
    M, K = x2d.shape
    N = w_qkv.shape[1]  # 3 * d_model
    tm = _row_tile(M)
    return pl.pallas_call(
        partial(_qkv_proj_kernel, d_model=d_model),
        out_shape=(jax.ShapeDtypeStruct((M, d_model), jnp.float32),
                   jax.ShapeDtypeStruct((M, 2 * d_model), jnp.float32)),
        grid=(M // tm,),
        in_specs=[
            pl.BlockSpec((tm, K), lambda i: (i, 0)),
            pl.BlockSpec((K, N), lambda i: (0, 0)),
            pl.BlockSpec((1, N), lambda i: (0, 0)),
        ],
        out_specs=(pl.BlockSpec((tm, d_model), lambda i: (i, 0)),
                   pl.BlockSpec((tm, 2 * d_model), lambda i: (i, 0))),
        compiler_params=pltpu.CompilerParams(dimension_semantics=("parallel",)),
    )(x2d, w_qkv, b_qkv.reshape(1, N))


def _proj_add_ln_kernel(x_ref, w_ref, b_ref, res_ref, g_ref, bt_ref, o_ref):
    # Fused attention-output projection + residual add + LayerNorm (post-LN).
    x = x_ref[...].astype(MXU_DTYPE)
    y = (jnp.dot(x, w_ref[...], preferred_element_type=jnp.float32)
         + b_ref[...] + res_ref[...])
    mu = jnp.mean(y, axis=-1, keepdims=True)
    var = jnp.mean(jnp.square(y - mu), axis=-1, keepdims=True)
    o_ref[...] = (y - mu) * jax.lax.rsqrt(var + LN_EPS) * g_ref[...] + bt_ref[...]


def proj_add_layernorm(x2d, w, b, res2d, gamma, beta):
    M, K = x2d.shape
    D = w.shape[1]
    tm = _row_tile(M)
    return pl.pallas_call(
        _proj_add_ln_kernel,
        out_shape=jax.ShapeDtypeStruct((M, D), jnp.float32),
        grid=(M // tm,),
        in_specs=[
            pl.BlockSpec((tm, K), lambda i: (i, 0)),
            pl.BlockSpec((K, D), lambda i: (0, 0)),
            pl.BlockSpec((1, D), lambda i: (0, 0)),
            pl.BlockSpec((tm, D), lambda i: (i, 0)),
            pl.BlockSpec((1, D), lambda i: (0, 0)),
            pl.BlockSpec((1, D), lambda i: (0, 0)),
        ],
        out_specs=pl.BlockSpec((tm, D), lambda i: (i, 0)),
        compiler_params=pltpu.CompilerParams(dimension_semantics=("parallel",)),
    )(x2d, w, b.reshape(1, D), res2d, gamma.reshape(1, D), beta.reshape(1, D))


def _ffn_add_ln_kernel(x_ref, w1_ref, b1_ref, w2_ref, b2_ref, res_ref, g_ref, bt_ref,
                       o_ref, acc_ref):
    # Linear -> ReLU -> Linear accumulated over d_ffn chunks, then +residual, LayerNorm.
    f = pl.program_id(1)

    @pl.when(f == 0)
    def _():
        acc_ref[...] = jnp.zeros_like(acc_ref)

    x = x_ref[...].astype(MXU_DTYPE)
    h = jnp.dot(x, w1_ref[...], preferred_element_type=jnp.float32) + b1_ref[...]
    h = jnp.maximum(h, 0.0).astype(MXU_DTYPE)
    acc_ref[...] += jnp.dot(h, w2_ref[...], preferred_element_type=jnp.float32)

    @pl.when(f == pl.num_programs(1) - 1)
    def _():
        y = acc_ref[...] + b2_ref[...] + res_ref[...]
        mu = jnp.mean(y, axis=-1, keepdims=True)
        var = jnp.mean(jnp.square(y - mu), axis=-1, keepdims=True)
        o_ref[...] = (y - mu) * jax.lax.rsqrt(var + LN_EPS) * g_ref[...] + bt_ref[...]


def ffn_add_layernorm(x2d, w1, b1, w2, b2, res2d, gamma, beta):
    M, D = x2d.shape
    F = w1.shape[1]
    tm, tf = _row_tile(M), _col_tile(F)
    return pl.pallas_call(
        _ffn_add_ln_kernel,
        out_shape=jax.ShapeDtypeStruct((M, D), jnp.float32),
        grid=(M // tm, F // tf),
        in_specs=[
            pl.BlockSpec((tm, D), lambda i, f: (i, 0)),
            pl.BlockSpec((D, tf), lambda i, f: (0, f)),
            pl.BlockSpec((1, tf), lambda i, f: (0, f)),
            pl.BlockSpec((tf, D), lambda i, f: (f, 0)),
            pl.BlockSpec((1, D), lambda i, f: (0, 0)),
            pl.BlockSpec((tm, D), lambda i, f: (i, 0)),
            pl.BlockSpec((1, D), lambda i, f: (0, 0)),
            pl.BlockSpec((1, D), lambda i, f: (0, 0)),
        ],
        out_specs=pl.BlockSpec((tm, D), lambda i, f: (i, 0)),
        scratch_shapes=[pltpu.VMEM((tm, D), jnp.float32)],
        compiler_params=pltpu.CompilerParams(
            dimension_semantics=("parallel", "arbitrary")),
    )(x2d, w1, b1.reshape(1, F), w2, b2.reshape(1, D), res2d,
      gamma.reshape(1, D), beta.reshape(1, D))


def _mha_kernel(q_ref, kv_ref, o_ref, *, n_heads, scale, causal):
    # Per batch element: q (Sq, D), kv = K|V packed (Sk, 2D).  Heads are split by static
    # slicing on the VMEM tile; causal mask is generated in-kernel; single (Sq, D) store.
    d_model = q_ref.shape[-1]
    dh = d_model // n_heads
    sq, sk = q_ref.shape[1], kv_ref.shape[1]

    q = (q_ref[0] * scale).astype(MXU_DTYPE)      # fold 1/sqrt(Dh) into Q once
    kv = kv_ref[0].astype(MXU_DTYPE)

    if causal:
        row = jax.lax.broadcasted_iota(jnp.int32, (sq, sk), 0)
        col = jax.lax.broadcasted_iota(jnp.int32, (sq, sk), 1)
        neg = jnp.where(col > row, NEG_INF, 0.0).astype(jnp.float32)

    outs = []
    for h in range(n_heads):
        qh = q[:, h * dh:(h + 1) * dh]
        kh = kv[:, h * dh:(h + 1) * dh]
        vh = kv[:, d_model + h * dh:d_model + (h + 1) * dh]
        # contract last dims -> no explicit transpose of k
        s = jax.lax.dot_general(qh, kh, (((1,), (1,)), ((), ())),
                                preferred_element_type=jnp.float32)   # (Sq, Sk)
        if causal:
            s = s + neg
        s = s - jnp.max(s, axis=-1, keepdims=True)
        p = jnp.exp(s)
        p = p * pl.reciprocal(jnp.sum(p, axis=-1, keepdims=True), approx=True)
        outs.append(jnp.dot(p.astype(MXU_DTYPE), vh,
                            preferred_element_type=jnp.float32))      # (Sq, Dh)
    o_ref[0] = jnp.concatenate(outs, axis=-1)                          # (Sq, D) lane-dense


def attention(q, kv, n_heads, causal):
    # q: (B, Sq, D), kv: (B, Sk, 2D) packed K|V
    B, Sq, D = q.shape
    Sk = kv.shape[1]
    scale = 1.0 / math.sqrt(D // n_heads)
    return pl.pallas_call(
        partial(_mha_kernel, n_heads=n_heads, scale=scale, causal=causal),
        out_shape=jax.ShapeDtypeStruct((B, Sq, D), jnp.float32),
        grid=(B,),
        in_specs=[
            pl.BlockSpec((1, Sq, D), lambda b: (b, 0, 0)),
            pl.BlockSpec((1, Sk, 2 * D), lambda b: (b, 0, 0)),
        ],
        out_specs=pl.BlockSpec((1, Sq, D), lambda b: (b, 0, 0)),
        compiler_params=pltpu.CompilerParams(dimension_semantics=("parallel",)),
    )(q, kv)


# --------------------------- model building blocks --------------------------

def encoder_layer(p, x, n_heads):
    B, S, D = x.shape
    x2d = x.reshape(B * S, D)
    # self-attention sublayer: fused QKV -> attention -> fused proj+add+LN
    q2d, kv2d = qkv_proj(x2d, p["sa_wqkv"], p["sa_bqkv"], D)
    a = attention(q2d.reshape(B, S, D), kv2d.reshape(B, S, 2 * D), n_heads, causal=False)
    x2d = proj_add_layernorm(a.reshape(B * S, D), p["sa_wo"], p["sa_bo"],
                             x2d, p["ln1_g"], p["ln1_b"])
    # FFN sublayer: fused linear->relu->linear + add + LN
    x2d = ffn_add_layernorm(x2d, p["ffn_w1"], p["ffn_b1"], p["ffn_w2"], p["ffn_b2"],
                            x2d, p["ln2_g"], p["ln2_b"])
    return x2d.reshape(B, S, D)


def decoder_layer(p, y, enc_kv, n_heads):
    # enc_kv: (B, Ss, 2D) packed K|V of the encoder output for this layer (precomputed)
    B, S, D = y.shape
    y2d = y.reshape(B * S, D)
    # masked self-attention (causal mask generated inside the kernel)
    q2d, kv2d = qkv_proj(y2d, p["sa_wqkv"], p["sa_bqkv"], D)
    a = attention(q2d.reshape(B, S, D), kv2d.reshape(B, S, 2 * D), n_heads, causal=True)
    y2d = proj_add_layernorm(a.reshape(B * S, D), p["sa_wo"], p["sa_bo"],
                             y2d, p["ln1_g"], p["ln1_b"])
    # cross-attention: Q from decoder state, packed K|V from encoder output
    q2d = linear(y2d, p["ca_wq"], p["ca_bq"])
    a = attention(q2d.reshape(B, S, D), enc_kv, n_heads, causal=False)
    y2d = proj_add_layernorm(a.reshape(B * S, D), p["ca_wo"], p["ca_bo"],
                             y2d, p["ln2_g"], p["ln2_b"])
    # FFN sublayer
    y2d = ffn_add_layernorm(y2d, p["ffn_w1"], p["ffn_b1"], p["ffn_w2"], p["ffn_b2"],
                            y2d, p["ln3_g"], p["ln3_b"])
    return y2d.reshape(B, S, D)


def positional_encoding(max_len, d_model):
    pos = jnp.arange(max_len, dtype=jnp.float32)[:, None]
    div = jnp.exp(jnp.arange(0, d_model, 2, dtype=jnp.float32)
                  * (-math.log(10000.0) / d_model))
    pe = jnp.zeros((max_len, d_model), jnp.float32)
    pe = pe.at[:, 0::2].set(jnp.sin(pos * div))
    pe = pe.at[:, 1::2].set(jnp.cos(pos * div))
    return pe


def embed(emb_table, ids, d_model):
    # embedding gather + positional encoding kept in plain JAX (glue)
    S = ids.shape[1]
    x = jnp.take(emb_table, ids, axis=0) * math.sqrt(d_model)
    return x + positional_encoding(S, d_model)[None, :, :]
    # TODO(synk): dropout after embedding/sublayers is identity (inference mode).


def transformer_forward(params, src, tgt, *, d_model, n_heads):
    # TODO(synk): user-supplied src/tgt padding masks are not plumbed; the decoder uses an
    # in-kernel causal mask and the encoder/cross attention use no mask (matches the
    # reference usage with src_mask = all-visible, tgt_mask = causal).
    B, Ss = src.shape
    _, St = tgt.shape
    # encoder
    x = embed(params["enc_emb"], src, d_model)
    for lp in params["enc_layers"]:
        x = encoder_layer(lp, x, n_heads)
    enc2d = x.reshape(B * Ss, d_model)
    # decoder
    y = embed(params["dec_emb"], tgt, d_model)
    for lp in params["dec_layers"]:
        enc_kv = linear(enc2d, lp["ca_wkv"], lp["ca_bkv"]).reshape(B, Ss, 2 * d_model)
        y = decoder_layer(lp, y, enc_kv, n_heads)
    # out_proj (N-tiled so a large vocab weight is streamed, not VMEM-resident)
    logits = linear(y.reshape(B * St, d_model), params["out_w"], params["out_b"])
    return logits.reshape(B, St, -1)


# ------------------------------ parameter init ------------------------------

def _init_linear(key, fan_in, fan_out):
    # nn.Linear-style uniform init; weight stored pre-transposed as (in, out) in bf16
    kw, kb = jax.random.split(key)
    bound = 1.0 / math.sqrt(fan_in)
    w = jax.random.uniform(kw, (fan_in, fan_out), jnp.float32, -bound, bound)
    b = jax.random.uniform(kb, (fan_out,), jnp.float32, -bound, bound)
    return w.astype(MXU_DTYPE), b


def _init_self_attn(key, d_model):
    kq, kk, kv, ko = jax.random.split(key, 4)
    wq, bq = _init_linear(kq, d_model, d_model)
    wk, bk = _init_linear(kk, d_model, d_model)
    wv, bv = _init_linear(kv, d_model, d_model)
    wo, bo = _init_linear(ko, d_model, d_model)
    return {
        "wqkv": jnp.concatenate([wq, wk, wv], axis=1),
        "bqkv": jnp.concatenate([bq, bk, bv], axis=0),
        "wo": wo, "bo": bo,
    }


def _init_enc_layer(key, d_model, d_ffn):
    k1, k2, k3 = jax.random.split(key, 3)
    sa = _init_self_attn(k1, d_model)
    w1, b1 = _init_linear(k2, d_model, d_ffn)
    w2, b2 = _init_linear(k3, d_ffn, d_model)
    ones = jnp.ones((d_model,), jnp.float32)
    zeros = jnp.zeros((d_model,), jnp.float32)
    return {
        "sa_wqkv": sa["wqkv"], "sa_bqkv": sa["bqkv"], "sa_wo": sa["wo"], "sa_bo": sa["bo"],
        "ffn_w1": w1, "ffn_b1": b1, "ffn_w2": w2, "ffn_b2": b2,
        "ln1_g": ones, "ln1_b": zeros,
        "ln2_g": ones, "ln2_b": zeros,
    }


def _init_dec_layer(key, d_model, d_ffn):
    k_sa, k_ca, k_f1, k_f2 = jax.random.split(key, 4)
    sa = _init_self_attn(k_sa, d_model)
    kq, kk, kv, ko = jax.random.split(k_ca, 4)
    wq, bq = _init_linear(kq, d_model, d_model)
    wk, bk = _init_linear(kk, d_model, d_model)
    wv, bv = _init_linear(kv, d_model, d_model)
    wo, bo = _init_linear(ko, d_model, d_model)
    w1, b1 = _init_linear(k_f1, d_model, d_ffn)
    w2, b2 = _init_linear(k_f2, d_ffn, d_model)
    ones = jnp.ones((d_model,), jnp.float32)
    zeros = jnp.zeros((d_model,), jnp.float32)
    return {
        "sa_wqkv": sa["wqkv"], "sa_bqkv": sa["bqkv"], "sa_wo": sa["wo"], "sa_bo": sa["bo"],
        "ca_wq": wq, "ca_bq": bq,
        "ca_wkv": jnp.concatenate([wk, wv], axis=1),
        "ca_bkv": jnp.concatenate([bk, bv], axis=0),
        "ca_wo": wo, "ca_bo": bo,
        "ffn_w1": w1, "ffn_b1": b1, "ffn_w2": w2, "ffn_b2": b2,
        "ln1_g": ones, "ln1_b": zeros,
        "ln2_g": ones, "ln2_b": zeros,
        "ln3_g": ones, "ln3_b": zeros,
    }


def init_params(key, enc_vocab, dec_vocab, d_model, n_heads, d_ffn, num_layers):
    keys = jax.random.split(key, 3 + 2 * num_layers)
    out_w, out_b = _init_linear(keys[2], d_model, dec_vocab)
    return {
        "enc_emb": jax.random.normal(keys[0], (enc_vocab, d_model), jnp.float32) * 0.02,
        "dec_emb": jax.random.normal(keys[1], (dec_vocab, d_model), jnp.float32) * 0.02,
        "out_w": out_w, "out_b": out_b,
        "enc_layers": [_init_enc_layer(keys[3 + i], d_model, d_ffn)
                       for i in range(num_layers)],
        "dec_layers": [_init_dec_layer(keys[3 + num_layers + i], d_model, d_ffn)
                       for i in range(num_layers)],
    }


# ----------------------------------- main -----------------------------------

if __name__ == "__main__":
    ENC_VOCAB, DEC_VOCAB = 32, 40
    D_MODEL, N_HEADS, D_FFN, NUM_LAYERS = 32, 4, 64, 2
    B, S_SRC, S_TGT = 2, 8, 8

    root = jax.random.PRNGKey(0)
    kp, ks, kt = jax.random.split(root, 3)

    params = init_params(kp, ENC_VOCAB, DEC_VOCAB, D_MODEL, N_HEADS, D_FFN, NUM_LAYERS)

    src = jax.random.randint(ks, (B, S_SRC), 0, ENC_VOCAB, dtype=jnp.int32)
    tgt = jax.random.randint(kt, (B, S_TGT), 0, DEC_VOCAB, dtype=jnp.int32)

    fwd = jax.jit(partial(transformer_forward, d_model=D_MODEL, n_heads=N_HEADS))
    logits = jax.block_until_ready(fwd(params, src, tgt))

    assert logits.shape == (B, S_TGT, DEC_VOCAB), logits.shape
    assert bool(jnp.all(jnp.isfinite(logits)))
    print("KERNEL_OK")
</pallas_src>

<mosaic_0001>
module attributes {stable_mosaic.version = 11 : i64} {
  func.func @_qkv_proj_kernel(%arg0: i32, %arg1: memref<16x32xf32, #tpu.memory_space<vmem>>, %arg2: memref<32x96xbf16, #tpu.memory_space<vmem>>, %arg3: memref<1x96xf32, #tpu.memory_space<vmem>>, %arg4: memref<16x32xf32, #tpu.memory_space<vmem>>, %arg5: memref<16x64xf32, #tpu.memory_space<vmem>>) attributes {dimension_semantics = [#tpu.dimension_semantics<parallel>], iteration_bounds = array<i64: 1>, scalar_prefetch = 0 : i64, scratch_operands = 0 : i64, tpu.core_type = #tpu.core_type<tc>, window_params = [{transform_indices = @transform_0, window_bounds = array<i64: 16, 32>}, {pipeline_mode = #tpu.pipeline_mode<synchronous>, transform_indices = @transform_1, window_bounds = array<i64: 32, 96>}, {pipeline_mode = #tpu.pipeline_mode<synchronous>, transform_indices = @transform_2, window_bounds = array<i64: 1, 96>}, {transform_indices = @transform_3, window_bounds = array<i64: 16, 32>}, {transform_indices = @transform_4, window_bounds = array<i64: 16, 64>}]} {
    %c0 = arith.constant 0 : index
    %c0_0 = arith.constant 0 : index
    %0 = vector.load %arg1[%c0, %c0_0] : memref<16x32xf32, #tpu.memory_space<vmem>>, vector<16x32xf32>
    %1 = arith.truncf %0 : vector<16x32xf32> to vector<16x32xbf16>
    %c0_1 = arith.constant 0 : index
    %c0_2 = arith.constant 0 : index
    %2 = vector.load %arg2[%c0_1, %c0_2] : memref<32x96xbf16, #tpu.memory_space<vmem>>, vector<32x96xbf16>
    %cst = arith.constant dense<0.000000e+00> : vector<16x96xf32>
    %3 = tpu.matmul %1, %2, %cst {dimension_numbers = #tpu.dot_dimension_numbers<[1], [0], [0], [1], [0, 0, 1, 1], [], []>} : vector<16x32xbf16>, vector<32x96xbf16>, vector<16x96xf32> -> vector<16x96xf32>
    %c0_3 = arith.constant 0 : index
    %c0_4 = arith.constant 0 : index
    %4 = vector.load %arg3[%c0_3, %c0_4] : memref<1x96xf32, #tpu.memory_space<vmem>>, vector<1x96xf32>
    %5 = vector.broadcast %4 : vector<1x96xf32> to vector<16x96xf32>
    %6 = arith.addf %3, %5 : vector<16x96xf32>
    %7 = vector.extract_strided_slice %6 {offsets = [0, 0], sizes = [16, 32], strides = [1, 1]} : vector<16x96xf32> to vector<16x32xf32>
    %c0_5 = arith.constant 0 : index
    %c0_6 = arith.constant 0 : index
    %8 = vector.load %arg4[%c0_5, %c0_6] : memref<16x32xf32, #tpu.memory_space<vmem>>, vector<16x32xf32>
    tpu.vector_store %arg4[%c0_5, %c0_6], %7 {strides = array<i32>} : memref<16x32xf32, #tpu.memory_space<vmem>>, vector<16x32xf32>,
    %9 = vector.extract_strided_slice %6 {offsets = [0, 32], sizes = [16, 64], strides = [1, 1]} : vector<16x96xf32> to vector<16x64xf32>
    %c0_7 = arith.constant 0 : index
    %c0_8 = arith.constant 0 : index
    %10 = vector.load %arg5[%c0_7, %c0_8] : memref<16x64xf32, #tpu.memory_space<vmem>>, vector<16x64xf32>
    tpu.vector_store %arg5[%c0_7, %c0_8], %9 {strides = array<i32>} : memref<16x64xf32, #tpu.memory_space<vmem>>, vector<16x64xf32>,
    return
  }
  func.func @transform_0(%arg0: i32) -> (i32, i32) {
    %c0_i32 = arith.constant 0 : i32
    %c0_i32_0 = arith.constant 0 : i32
    return %arg0, %c0_i32 : i32, i32
  }
  func.func @transform_1(%arg0: i32) -> (i32, i32) {
    %c0_i32 = arith.constant 0 : i32
    %c0_i32_0 = arith.constant 0 : i32
    %c0_i32_1 = arith.constant 0 : i32
    return %c0_i32, %c0_i32_0 : i32, i32
  }
  func.func @transform_2(%arg0: i32) -> (i32, i32) {
    %c0_i32 = arith.constant 0 : i32
    %c0_i32_0 = arith.constant 0 : i32
    %c0_i32_1 = arith.constant 0 : i32
    return %c0_i32, %c0_i32_0 : i32, i32
  }
  func.func @transform_3(%arg0: i32) -> (i32, i32) {
    %c0_i32 = arith.constant 0 : i32
    %c0_i32_0 = arith.constant 0 : i32
    return %arg0, %c0_i32 : i32, i32
  }
  func.func @transform_4(%arg0: i32) -> (i32, i32) {
    %c0_i32 = arith.constant 0 : i32
    %c0_i32_0 = arith.constant 0 : i32
    return %arg0, %c0_i32 : i32, i32
  }
}

module attributes {stable_mosaic.version = 11 : i64} {
  func.func @_proj_add_ln_kernel(%arg0: i32, %arg1: memref<16x32xf32, #tpu.memory_space<vmem>>, %arg2: memref<32x32xbf16, #tpu.memory_space<vmem>>, %arg3: memref<1x32xf32, #tpu.memory_space<vmem>>, %arg4: memref<16x32xf32, #tpu.memory_space<vmem>>, %arg5: memref<1x32xf32, #tpu.memory_space<vmem>>, %arg6: memref<1x32xf32, #tpu.memory_space<vmem>>, %arg7: memref<16x32xf32, #tpu.memory_space<vmem>>) attributes {dimension_semantics = [#tpu.dimension_semantics<parallel>], iteration_bounds = array<i64: 1>, scalar_prefetch = 0 : i64, scratch_operands = 0 : i64, tpu.core_type = #tpu.core_type<tc>, window_params = [{transform_indices = @transform_0, window_bounds = array<i64: 16, 32>}, {pipeline_mode = #tpu.pipeline_mode<synchronous>, transform_indices = @transform_1, window_bounds = array<i64: 32, 32>}, {pipeline_mode = #tpu.pipeline_mode<synchronous>, transform_indices = @transform_2, window_bounds = array<i64: 1, 32>}, {transform_indices = @transform_3, window_bounds = array<i64: 16, 32>}, {pipeline_mode = #tpu.pipeline_mode<synchronous>, transform_indices = @transform_4, window_bounds = array<i64: 1, 32>}, {pipeline_mode = #tpu.pipeline_mode<synchronous>, transform_indices = @transform_5, window_bounds = array<i64: 1, 32>}, {transform_indices = @transform_6, window_bounds = array<i64: 16, 32>}]} {
    %c0 = arith.constant 0 : index
    %c0_0 = arith.constant 0 : index
    %0 = vector.load %arg1[%c0, %c0_0] : memref<16x32xf32, #tpu.memory_space<vmem>>, vector<16x32xf32>
    %1 = arith.truncf %0 : vector<16x32xf32> to vector<16x32xbf16>
    %c0_1 = arith.constant 0 : index
    %c0_2 = arith.constant 0 : index
    %2 = vector.load %arg2[%c0_1, %c0_2] : memref<32x32xbf16, #tpu.memory_space<vmem>>, vector<32x32xbf16>
    %cst = arith.constant dense<0.000000e+00> : vector<16x32xf32>
    %3 = tpu.matmul %1, %2, %cst {dimension_numbers = #tpu.dot_dimension_numbers<[1], [0], [0], [1], [0, 0, 1, 1], [], []>} : vector<16x32xbf16>, vector<32x32xbf16>, vector<16x32xf32> -> vector<16x32xf32>
    %c0_3 = arith.constant 0 : index
    %c0_4 = arith.constant 0 : index
    %4 = vector.load %arg3[%c0_3, %c0_4] : memref<1x32xf32, #tpu.memory_space<vmem>>, vector<1x32xf32>
    %5 = vector.broadcast %4 : vector<1x32xf32> to vector<16x32xf32>
    %6 = arith.addf %3, %5 : vector<16x32xf32>
    %c0_5 = arith.constant 0 : index
    %c0_6 = arith.constant 0 : index
    %7 = vector.load %arg4[%c0_5, %c0_6] : memref<16x32xf32, #tpu.memory_space<vmem>>, vector<16x32xf32>
    %8 = arith.addf %6, %7 : vector<16x32xf32>
    %cst_7 = arith.constant dense<0.000000e+00> : vector<16xf32>
    %9 = vector.multi_reduction <add>, %8, %cst_7 [1] : vector<16x32xf32> to vector<16xf32>
    %10 = vector.shape_cast %9 : vector<16xf32> to vector<16x1xf32>
    %cst_8 = arith.constant 3.200000e+01 : f32
    %11 = vector.broadcast %cst_8 : f32 to vector<16x1xf32>
    %12 = arith.divf %10, %11 : vector<16x1xf32>
    %13 = vector.broadcast %12 : vector<16x1xf32> to vector<16x32xf32>
    %14 = arith.subf %8, %13 : vector<16x32xf32>
    %15 = arith.mulf %14, %14 : vector<16x32xf32>
    %cst_9 = arith.constant dense<0.000000e+00> : vector<16xf32>
    %16 = vector.multi_reduction <add>, %15, %cst_9 [1] : vector<16x32xf32> to vector<16xf32>
    %17 = vector.shape_cast %16 : vector<16xf32> to vector<16x1xf32>
    %cst_10 = arith.constant 3.200000e+01 : f32
    %18 = vector.broadcast %cst_10 : f32 to vector<16x1xf32>
    %19 = arith.divf %17, %18 : vector<16x1xf32>
    %20 = vector.broadcast %12 : vector<16x1xf32> to vector<16x32xf32>
    %21 = arith.subf %8, %20 : vector<16x32xf32>
    %cst_11 = arith.constant 9.99999974E-6 : f32
    %22 = vector.broadcast %cst_11 : f32 to vector<16x1xf32>
    %23 = arith.addf %19, %22 : vector<16x1xf32>
    %24 = math.rsqrt %23 : vector<16x1xf32>
    %25 = vector.broadcast %24 : vector<16x1xf32> to vector<16x32xf32>
    %26 = arith.mulf %21, %25 : vector<16x32xf32>
    %c0_12 = arith.constant 0 : index
    %c0_13 = arith.constant 0 : index
    %27 = vector.load %arg5[%c0_12, %c0_13] : memref<1x32xf32, #tpu.memory_space<vmem>>, vector<1x32xf32>
    %28 = vector.broadcast %27 : vector<1x32xf32> to vector<16x32xf32>
    %29 = arith.mulf %26, %28 : vector<16x32xf32>
    %c0_14 = arith.constant 0 : index
    %c0_15 = arith.constant 0 : index
    %30 = vector.load %arg6[%c0_14, %c0_15] : memref<1x32xf32, #tpu.memory_space<vmem>>, vector<1x32xf32>
    %31 = vector.broadcast %30 : vector<1x32xf32> to vector<16x32xf32>
    %32 = arith.addf %29, %31 : vector<16x32xf32>
    %c0_16 = arith.constant 0 : index
    %c0_17 = arith.constant 0 : index
    %33 = vector.load %arg7[%c0_16, %c0_17] : memref<16x32xf32, #tpu.memory_space<vmem>>, vector<16x32xf32>
    tpu.vector_store %arg7[%c0_16, %c0_17], %32 {strides = array<i32>} : memref<16x32xf32, #tpu.memory_space<vmem>>, vector<16x32xf32>,
    return
  }
  func.func @transform_0(%arg0: i32) -> (i32, i32) {
    %c0_i32 = arith.constant 0 : i32
    %c0_i32_0 = arith.constant 0 : i32
    return %arg0, %c0_i32 : i32, i32
  }
  func.func @transform_1(%arg0: i32) -> (i32, i32) {
    %c0_i32 = arith.constant 0 : i32
    %c0_i32_0 = arith.constant 0 : i32
    %c0_i32_1 = arith.constant 0 : i32
    return %c0_i32, %c0_i32_0 : i32, i32
  }
  func.func @transform_2(%arg0: i32) -> (i32, i32) {
    %c0_i32 = arith.constant 0 : i32
    %c0_i32_0 = arith.constant 0 : i32
    %c0_i32_1 = arith.constant 0 : i32
    return %c0_i32, %c0_i32_0 : i32, i32
  }
  func.func @transform_3(%arg0: i32) -> (i32, i32) {
    %c0_i32 = arith.constant 0 : i32
    %c0_i32_0 = arith.constant 0 : i32
    return %arg0, %c0_i32 : i32, i32
  }
  func.func @transform_4(%arg0: i32) -> (i32, i32) {
    %c0_i32 = arith.constant 0 : i32
    %c0_i32_0 = arith.constant 0 : i32
    %c0_i32_1 = arith.constant 0 : i32
    return %c0_i32, %c0_i32_0 : i32, i32
  }
  func.func @transform_5(%arg0: i32) -> (i32, i32) {
    %c0_i32 = arith.constant 0 : i32
    %c0_i32_0 = arith.constant 0 : i32
    %c0_i32_1 = arith.constant 0 : i32
    return %c0_i32, %c0_i32_0 : i32, i32
  }
  func.func @transform_6(%arg0: i32) -> (i32, i32) {
    %c0_i32 = arith.constant 0 : i32
    %c0_i32_0 = arith.constant 0 : i32
    return %arg0, %c0_i32 : i32, i32
  }
}

module attributes {stable_mosaic.version = 11 : i64} {
  func.func @_mha_kernel(%arg0: i32, %arg1: memref<1x8x32xf32, #tpu.memory_space<vmem>>, %arg2: memref<1x8x64xf32, #tpu.memory_space<vmem>>, %arg3: memref<1x8x32xf32, #tpu.memory_space<vmem>>) attributes {dimension_semantics = [#tpu.dimension_semantics<parallel>], iteration_bounds = array<i64: 2>, scalar_prefetch = 0 : i64, scratch_operands = 0 : i64, tpu.core_type = #tpu.core_type<tc>, window_params = [{transform_indices = @transform_0, window_bounds = array<i64: 1, 8, 32>}, {transform_indices = @transform_1, window_bounds = array<i64: 1, 8, 64>}, {transform_indices = @transform_2, window_bounds = array<i64: 1, 8, 32>}]} {
    %c0 = arith.constant 0 : index
    %c0_0 = arith.constant 0 : index
    %c0_1 = arith.constant 0 : index
    %0 = vector.load %arg1[%c0, %c0_0, %c0_1] : memref<1x8x32xf32, #tpu.memory_space<vmem>>, vector<1x8x32xf32>
    %1 = vector.shape_cast %0 : vector<1x8x32xf32> to vector<8x32xf32>
    %cst = arith.constant 0.353553385 : f32
    %2 = vector.broadcast %cst : f32 to vector<8x32xf32>
    %3 = arith.mulf %1, %2 : vector<8x32xf32>
    %4 = arith.truncf %3 : vector<8x32xf32> to vector<8x32xbf16>
    %c0_2 = arith.constant 0 : index
    %c0_3 = arith.constant 0 : index
    %c0_4 = arith.constant 0 : index
    %5 = vector.load %arg2[%c0_2, %c0_3, %c0_4] : memref<1x8x64xf32, #tpu.memory_space<vmem>>, vector<1x8x64xf32>
    %6 = vector.shape_cast %5 : vector<1x8x64xf32> to vector<8x64xf32>
    %7 = arith.truncf %6 : vector<8x64xf32> to vector<8x64xbf16>
    %8 = vector.extract_strided_slice %4 {offsets = [0, 0], sizes = [8, 8], strides = [1, 1]} : vector<8x32xbf16> to vector<8x8xbf16>
    %9 = vector.extract_strided_slice %7 {offsets = [0, 0], sizes = [8, 8], strides = [1, 1]} : vector<8x64xbf16> to vector<8x8xbf16>
    %10 = vector.extract_strided_slice %7 {offsets = [0, 32], sizes = [8, 8], strides = [1, 1]} : vector<8x64xbf16> to vector<8x8xbf16>
    %cst_5 = arith.constant dense<0.000000e+00> : vector<8x8xf32>
    %11 = tpu.matmul %8, %9, %cst_5 {dimension_numbers = #tpu.dot_dimension_numbers<[1], [1], [0], [0], [0, 0, 1, 0], [], []>} : vector<8x8xbf16>, vector<8x8xbf16>, vector<8x8xf32> -> vector<8x8xf32>
    %cst_6 = arith.constant dense<0xFF800000> : vector<8xf32>
    %12 = vector.multi_reduction <maximumf>, %11, %cst_6 [1] : vector<8x8xf32> to vector<8xf32>
    %13 = vector.shape_cast %12 : vector<8xf32> to vector<8x1xf32>
    %14 = vector.broadcast %13 : vector<8x1xf32> to vector<8x8xf32>
    %15 = arith.subf %11, %14 : vector<8x8xf32>
    %16 = math.exp %15 : vector<8x8xf32>
    %cst_7 = arith.constant dense<0.000000e+00> : vector<8xf32>
    %17 = vector.multi_reduction <add>, %16, %cst_7 [1] : vector<8x8xf32> to vector<8xf32>
    %18 = vector.shape_cast %17 : vector<8xf32> to vector<8x1xf32>
    %19 = tpu.reciprocal %18 {approx = true} : vector<8x1xf32> -> vector<8x1xf32>
    %20 = vector.broadcast %19 : vector<8x1xf32> to vector<8x8xf32>
    %21 = arith.mulf %16, %20 : vector<8x8xf32>
    %22 = arith.truncf %21 : vector<8x8xf32> to vector<8x8xbf16>
    %cst_8 = arith.constant dense<0.000000e+00> : vector<8x8xf32>
    %23 = tpu.matmul %22, %10, %cst_8 {dimension_numbers = #tpu.dot_dimension_numbers<[1], [0], [0], [1], [0, 0, 1, 1], [], []>} : vector<8x8xbf16>, vector<8x8xbf16>, vector<8x8xf32> -> vector<8x8xf32>
    %24 = vector.extract_strided_slice %4 {offsets = [0, 8], sizes = [8, 8], strides = [1, 1]} : vector<8x32xbf16> to vector<8x8xbf16>
    %25 = vector.extract_strided_slice %7 {offsets = [0, 8], sizes = [8, 8], strides = [1, 1]} : vector<8x64xbf16> to vector<8x8xbf16>
    %26 = vector.extract_strided_slice %7 {offsets = [0, 40], sizes = [8, 8], strides = [1, 1]} : vector<8x64xbf16> to vector<8x8xbf16>
    %cst_9 = arith.constant dense<0.000000e+00> : vector<8x8xf32>
    %27 = tpu.matmul %24, %25, %cst_9 {dimension_numbers = #tpu.dot_dimension_numbers<[1], [1], [0], [0], [0, 0, 1, 0], [], []>} : vector<8x8xbf16>, vector<8x8xbf16>, vector<8x8xf32> -> vector<8x8xf32>
    %cst_10 = arith.constant dense<0xFF800000> : vector<8xf32>
    %28 = vector.multi_reduction <maximumf>, %27, %cst_10 [1] : vector<8x8xf32> to vector<8xf32>
    %29 = vector.shape_cast %28 : vector<8xf32> to vector<8x1xf32>
    %30 = vector.broadcast %29 : vector<8x1xf32> to vector<8x8xf32>
    %31 = arith.subf %27, %30 : vector<8x8xf32>
    %32 = math.exp %31 : vector<8x8xf32>
    %cst_11 = arith.constant dense<0.000000e+00> : vector<8xf32>
    %33 = vector.multi_reduction <add>, %32, %cst_11 [1] : vector<8x8xf32> to vector<8xf32>
    %34 = vector.shape_cast %33 : vector<8xf32> to vector<8x1xf32>
    %35 = tpu.reciprocal %34 {approx = true} : vector<8x1xf32> -> vector<8x1xf32>
    %36 = vector.broadcast %35 : vector<8x1xf32> to vector<8x8xf32>
    %37 = arith.mulf %32, %36 : vector<8x8xf32>
    %38 = arith.truncf %37 : vector<8x8xf32> to vector<8x8xbf16>
    %cst_12 = arith.constant dense<0.000000e+00> : vector<8x8xf32>
    %39 = tpu.matmul %38, %26, %cst_12 {dimension_numbers = #tpu.dot_dimension_numbers<[1], [0], [0], [1], [0, 0, 1, 1], [], []>} : vector<8x8xbf16>, vector<8x8xbf16>, vector<8x8xf32> -> vector<8x8xf32>
    %40 = vector.extract_strided_slice %4 {offsets = [0, 16], sizes = [8, 8], strides = [1, 1]} : vector<8x32xbf16> to vector<8x8xbf16>
    %41 = vector.extract_strided_slice %7 {offsets = [0, 16], sizes = [8, 8], strides = [1, 1]} : vector<8x64xbf16> to vector<8x8xbf16>
    %42 = vector.extract_strided_slice %7 {offsets = [0, 48], sizes = [8, 8], strides = [1, 1]} : vector<8x64xbf16> to vector<8x8xbf16>
    %cst_13 = arith.constant dense<0.000000e+00> : vector<8x8xf32>
    %43 = tpu.matmul %40, %41, %cst_13 {dimension_numbers = #tpu.dot_dimension_numbers<[1], [1], [0], [0], [0, 0, 1, 0], [], []>} : vector<8x8xbf16>, vector<8x8xbf16>, vector<8x8xf32> -> vector<8x8xf32>
    %cst_14 = arith.constant dense<0xFF800000> : vector<8xf32>
    %44 = vector.multi_reduction <maximumf>, %43, %cst_14 [1] : vector<8x8xf32> to vector<8xf32>
    %45 = vector.shape_cast %44 : vector<8xf32> to vector<8x1xf32>
    %46 = vector.broadcast %45 : vector<8x1xf32> to vector<8x8xf32>
    %47 = arith.subf %43, %46 : vector<8x8xf32>
    %48 = math.exp %47 : vector<8x8xf32>
    %cst_15 = arith.constant dense<0.000000e+00> : vector<8xf32>
    %49 = vector.multi_reduction <add>, %48, %cst_15 [1] : vector<8x8xf32> to vector<8xf32>
    %50 = vector.shape_cast %49 : vector<8xf32> to vector<8x1xf32>
    %51 = tpu.reciprocal %50 {approx = true} : vector<8x1xf32> -> vector<8x1xf32>
    %52 = vector.broadcast %51 : vector<8x1xf32> to vector<8x8xf32>
    %53 = arith.mulf %48, %52 : vector<8x8xf32>
    %54 = arith.truncf %53 : vector<8x8xf32> to vector<8x8xbf16>
    %cst_16 = arith.constant dense<0.000000e+00> : vector<8x8xf32>
    %55 = tpu.matmul %54, %42, %cst_16 {dimension_numbers = #tpu.dot_dimension_numbers<[1], [0], [0], [1], [0, 0, 1, 1], [], []>} : vector<8x8xbf16>, vector<8x8xbf16>, vector<8x8xf32> -> vector<8x8xf32>
    %56 = vector.extract_strided_slice %4 {offsets = [0, 24], sizes = [8, 8], strides = [1, 1]} : vector<8x32xbf16> to vector<8x8xbf16>
    %57 = vector.extract_strided_slice %7 {offsets = [0, 24], sizes = [8, 8], strides = [1, 1]} : vector<8x64xbf16> to vector<8x8xbf16>
    %58 = vector.extract_strided_slice %7 {offsets = [0, 56], sizes = [8, 8], strides = [1, 1]} : vector<8x64xbf16> to vector<8x8xbf16>
    %cst_17 = arith.constant dense<0.000000e+00> : vector<8x8xf32>
    %59 = tpu.matmul %56, %57, %cst_17 {dimension_numbers = #tpu.dot_dimension_numbers<[1], [1], [0], [0], [0, 0, 1, 0], [], []>} : vector<8x8xbf16>, vector<8x8xbf16>, vector<8x8xf32> -> vector<8x8xf32>
    %cst_18 = arith.constant dense<0xFF800000> : vector<8xf32>
    %60 = vector.multi_reduction <maximumf>, %59, %cst_18 [1] : vector<8x8xf32> to vector<8xf32>
    %61 = vector.shape_cast %60 : vector<8xf32> to vector<8x1xf32>
    %62 = vector.broadcast %61 : vector<8x1xf32> to vector<8x8xf32>
    %63 = arith.subf %59, %62 : vector<8x8xf32>
    %64 = math.exp %63 : vector<8x8xf32>
    %cst_19 = arith.constant dense<0.000000e+00> : vector<8xf32>
    %65 = vector.multi_reduction <add>, %64, %cst_19 [1] : vector<8x8xf32> to vector<8xf32>
    %66 = vector.shape_cast %65 : vector<8xf32> to vector<8x1xf32>
    %67 = tpu.reciprocal %66 {approx = true} : vector<8x1xf32> -> vector<8x1xf32>
    %68 = vector.broadcast %67 : vector<8x1xf32> to vector<8x8xf32>
    %69 = arith.mulf %64, %68 : vector<8x8xf32>
    %70 = arith.truncf %69 : vector<8x8xf32> to vector<8x8xbf16>
    %cst_20 = arith.constant dense<0.000000e+00> : vector<8x8xf32>
    %71 = tpu.matmul %70, %58, %cst_20 {dimension_numbers = #tpu.dot_dimension_numbers<[1], [0], [0], [1], [0, 0, 1, 1], [], []>} : vector<8x8xbf16>, vector<8x8xbf16>, vector<8x8xf32> -> vector<8x8xf32>
    %72 = tpu.concatenate %23, %39, %55, %71 in 1 : vector<8x8xf32>, vector<8x8xf32>, vector<8x8xf32>, vector<8x8xf32> -> vector<8x32xf32>
    %c0_21 = arith.constant 0 : index
    %c0_22 = arith.constant 0 : index
    %c0_23 = arith.constant 0 : index
    %73 = vector.load %arg3[%c0_21, %c0_22, %c0_23] : memref<1x8x32xf32, #tpu.memory_space<vmem>>, vector<1x8x32xf32>
    %74 = vector.shape_cast %73 : vector<1x8x32xf32> to vector<8x32xf32>
    %75 = vector.shape_cast %72 : vector<8x32xf32> to vector<1x8x32xf32>
    tpu.vector_store %arg3[%c0_21, %c0_22, %c0_23], %75 {strides = array<i32>} : memref<1x8x32xf32, #tpu.memory_space<vmem>>, vector<1x8x32xf32>,
    return
  }
  func.func @transform_0(%arg0: i32) -> (i32, i32, i32) {
    %c0_i32 = arith.constant 0 : i32
    %c0_i32_0 = arith.constant 0 : i32
    %c0_i32_1 = arith.constant 0 : i32
    return %arg0, %c0_i32, %c0_i32_0 : i32, i32, i32
  }
  func.func @transform_1(%arg0: i32) -> (i32, i32, i32) {
    %c0_i32 = arith.constant 0 : i32
    %c0_i32_0 = arith.constant 0 : i32
    %c0_i32_1 = arith.constant 0 : i32
    return %arg0, %c0_i32, %c0_i32_0 : i32, i32, i32
  }
  func.func @transform_2(%arg0: i32) -> (i32, i32, i32) {
    %c0_i32 = arith.constant 0 : i32
    %c0_i32_0 = arith.constant 0 : i32
    %c0_i32_1 = arith.constant 0 : i32
    return %arg0, %c0_i32, %c0_i32_0 : i32, i32, i32
  }
}

module attributes {stable_mosaic.version = 11 : i64} {
  func.func @_ffn_add_ln_kernel(%arg0: i32, %arg1: i32, %arg2: memref<16x32xf32, #tpu.memory_space<vmem>>, %arg3: memref<32x64xbf16, #tpu.memory_space<vmem>>, %arg4: memref<1x64xf32, #tpu.memory_space<vmem>>, %arg5: memref<64x32xbf16, #tpu.memory_space<vmem>>, %arg6: memref<1x32xf32, #tpu.memory_space<vmem>>, %arg7: memref<16x32xf32, #tpu.memory_space<vmem>>, %arg8: memref<1x32xf32, #tpu.memory_space<vmem>>, %arg9: memref<1x32xf32, #tpu.memory_space<vmem>>, %arg10: memref<16x32xf32, #tpu.memory_space<vmem>>, %arg11: memref<16x32xf32, #tpu.memory_space<vmem>>) attributes {dimension_semantics = [#tpu.dimension_semantics<parallel>, #tpu.dimension_semantics<arbitrary>], iteration_bounds = array<i64: 1, 1>, scalar_prefetch = 0 : i64, scratch_operands = 1 : i64, tpu.core_type = #tpu.core_type<tc>, window_params = [{transform_indices = @transform_0, window_bounds = array<i64: 16, 32>}, {transform_indices = @transform_1, window_bounds = array<i64: 32, 64>}, {transform_indices = @transform_2, window_bounds = array<i64: 1, 64>}, {transform_indices = @transform_3, window_bounds = array<i64: 64, 32>}, {pipeline_mode = #tpu.pipeline_mode<synchronous>, transform_indices = @transform_4, window_bounds = array<i64: 1, 32>}, {transform_indices = @transform_5, window_bounds = array<i64: 16, 32>}, {pipeline_mode = #tpu.pipeline_mode<synchronous>, transform_indices = @transform_6, window_bounds = array<i64: 1, 32>}, {pipeline_mode = #tpu.pipeline_mode<synchronous>, transform_indices = @transform_7, window_bounds = array<i64: 1, 32>}, {transform_indices = @transform_8, window_bounds = array<i64: 16, 32>}]} {
    %c0_i32 = arith.constant 0 : i32
    %0 = arith.cmpi eq, %arg1, %c0_i32 : i32
    %1 = arith.extui %0 : i1 to i32
    %c0_i32_0 = arith.constant 0 : i32
    %2 = arith.cmpi ne, %1, %c0_i32_0 : i32
    scf.if %2 {
      %cst_16 = arith.constant 0.000000e+00 : f32
      %21 = vector.broadcast %cst_16 : f32 to vector<16x32xf32>
      %c0_17 = arith.constant 0 : index
      %c0_18 = arith.constant 0 : index
      %22 = vector.load %arg11[%c0_17, %c0_18] : memref<16x32xf32, #tpu.memory_space<vmem>>, vector<16x32xf32>
      tpu.vector_store %arg11[%c0_17, %c0_18], %21 {strides = array<i32>} : memref<16x32xf32, #tpu.memory_space<vmem>>, vector<16x32xf32>,
    } else {
    }
    %c0 = arith.constant 0 : index
    %c0_1 = arith.constant 0 : index
    %3 = vector.load %arg2[%c0, %c0_1] : memref<16x32xf32, #tpu.memory_space<vmem>>, vector<16x32xf32>
    %4 = arith.truncf %3 : vector<16x32xf32> to vector<16x32xbf16>
    %c0_2 = arith.constant 0 : index
    %c0_3 = arith.constant 0 : index
    %5 = vector.load %arg3[%c0_2, %c0_3] : memref<32x64xbf16, #tpu.memory_space<vmem>>, vector<32x64xbf16>
    %cst = arith.constant dense<0.000000e+00> : vector<16x64xf32>
    %6 = tpu.matmul %4, %5, %cst {dimension_numbers = #tpu.dot_dimension_numbers<[1], [0], [0], [1], [0, 0, 1, 1], [], []>} : vector<16x32xbf16>, vector<32x64xbf16>, vector<16x64xf32> -> vector<16x64xf32>
    %c0_4 = arith.constant 0 : index
    %c0_5 = arith.constant 0 : index
    %7 = vector.load %arg4[%c0_4, %c0_5] : memref<1x64xf32, #tpu.memory_space<vmem>>, vector<1x64xf32>
    %8 = vector.broadcast %7 : vector<1x64xf32> to vector<16x64xf32>
    %9 = arith.addf %6, %8 : vector<16x64xf32>
    %cst_6 = arith.constant 0.000000e+00 : f32
    %10 = vector.broadcast %cst_6 : f32 to vector<16x64xf32>
    %11 = arith.maximumf %9, %10 : vector<16x64xf32>
    %12 = arith.truncf %11 : vector<16x64xf32> to vector<16x64xbf16>
    %c0_7 = arith.constant 0 : index
    %c0_8 = arith.constant 0 : index
    %13 = vector.load %arg11[%c0_7, %c0_8] : memref<16x32xf32, #tpu.memory_space<vmem>>, vector<16x32xf32>
    %c0_9 = arith.constant 0 : index
    %c0_10 = arith.constant 0 : index
    %14 = vector.load %arg5[%c0_9, %c0_10] : memref<64x32xbf16, #tpu.memory_space<vmem>>, vector<64x32xbf16>
    %cst_11 = arith.constant dense<0.000000e+00> : vector<16x32xf32>
    %15 = tpu.matmul %12, %14, %cst_11 {dimension_numbers = #tpu.dot_dimension_numbers<[1], [0], [0], [1], [0, 0, 1, 1], [], []>} : vector<16x64xbf16>, vector<64x32xbf16>, vector<16x32xf32> -> vector<16x32xf32>
    %16 = arith.addf %13, %15 : vector<16x32xf32>
    %c0_12 = arith.constant 0 : index
    %c0_13 = arith.constant 0 : index
    %17 = vector.load %arg11[%c0_12, %c0_13] : memref<16x32xf32, #tpu.memory_space<vmem>>, vector<16x32xf32>
    tpu.vector_store %arg11[%c0_12, %c0_13], %16 {strides = array<i32>} : memref<16x32xf32, #tpu.memory_space<vmem>>, vector<16x32xf32>,
    %c0_i32_14 = arith.constant 0 : i32
    %18 = arith.cmpi eq, %arg1, %c0_i32_14 : i32
    %19 = arith.extui %18 : i1 to i32
    %c0_i32_15 = arith.constant 0 : i32
    %20 = arith.cmpi ne, %19, %c0_i32_15 : i32
    scf.if %20 {
      %c0_16 = arith.constant 0 : index
      %c0_17 = arith.constant 0 : index
      %21 = vector.load %arg11[%c0_16, %c0_17] : memref<16x32xf32, #tpu.memory_space<vmem>>, vector<16x32xf32>
      %c0_18 = arith.constant 0 : index
      %c0_19 = arith.constant 0 : index
      %22 = vector.load %arg6[%c0_18, %c0_19] : memref<1x32xf32, #tpu.memory_space<vmem>>, vector<1x32xf32>
      %23 = vector.broadcast %22 : vector<1x32xf32> to vector<16x32xf32>
      %24 = arith.addf %21, %23 : vector<16x32xf32>
      %c0_20 = arith.constant 0 : index
      %c0_21 = arith.constant 0 : index
      %25 = vector.load %arg7[%c0_20, %c0_21] : memref<16x32xf32, #tpu.memory_space<vmem>>, vector<16x32xf32>
      %26 = arith.addf %24, %25 : vector<16x32xf32>
      %cst_22 = arith.constant dense<0.000000e+00> : vector<16xf32>
      %27 = vector.multi_reduction <add>, %26, %cst_22 [1] : vector<16x32xf32> to vector<16xf32>
      %28 = vector.shape_cast %27 : vector<16xf32> to vector<16x1xf32>
      %cst_23 = arith.constant 3.200000e+01 : f32
      %29 = vector.broadcast %cst_23 : f32 to vector<16x1xf32>
      %30 = arith.divf %28, %29 : vector<16x1xf32>
      %31 = vector.broadcast %30 : vector<16x1xf32> to vector<16x32xf32>
      %32 = arith.subf %26, %31 : vector<16x32xf32>
      %33 = arith.mulf %32, %32 : vector<16x32xf32>
      %cst_24 = arith.constant dense<0.000000e+00> : vector<16xf32>
      %34 = vector.multi_reduction <add>, %33, %cst_24 [1] : vector<16x32xf32> to vector<16xf32>
      %35 = vector.shape_cast %34 : vector<16xf32> to vector<16x1xf32>
      %cst_25 = arith.constant 3.200000e+01 : f32
      %36 = vector.broadcast %cst_25 : f32 to vector<16x1xf32>
      %37 = arith.divf %35, %36 : vector<16x1xf32>
      %38 = vector.broadcast %30 : vector<16x1xf32> to vector<16x32xf32>
      %39 = arith.subf %26, %38 : vector<16x32xf32>
      %cst_26 = arith.constant 9.99999974E-6 : f32
      %40 = vector.broadcast %cst_26 : f32 to vector<16x1xf32>
      %41 = arith.addf %37, %40 : vector<16x1xf32>
      %42 = math.rsqrt %41 : vector<16x1xf32>
      %43 = vector.broadcast %42 : vector<16x1xf32> to vector<16x32xf32>
      %44 = arith.mulf %39, %43 : vector<16x32xf32>
      %c0_27 = arith.constant 0 : index
      %c0_28 = arith.constant 0 : index
      %45 = vector.load %arg8[%c0_27, %c0_28] : memref<1x32xf32, #tpu.memory_space<vmem>>, vector<1x32xf32>
      %46 = vector.broadcast %45 : vector<1x32xf32> to vector<16x32xf32>
      %47 = arith.mulf %44, %46 : vector<16x32xf32>
      %c0_29 = arith.constant 0 : index
      %c0_30 = arith.constant 0 : index
      %48 = vector.load %arg9[%c0_29, %c0_30] : memref<1x32xf32, #tpu.memory_space<vmem>>, vector<1x32xf32>
      %49 = vector.broadcast %48 : vector<1x32xf32> to vector<16x32xf32>
      %50 = arith.addf %47, %49 : vector<16x32xf32>
      %c0_31 = arith.constant 0 : index
      %c0_32 = arith.constant 0 : index
      %51 = vector.load %arg10[%c0_31, %c0_32] : memref<16x32xf32, #tpu.memory_space<vmem>>, vector<16x32xf32>
      tpu.vector_store %arg10[%c0_31, %c0_32], %50 {strides = array<i32>} : memref<16x32xf32, #tpu.memory_space<vmem>>, vector<16x32xf32>,
    } else {
    }
    return
  }
  func.func @transform_0(%arg0: i32, %arg1: i32) -> (i32, i32) {
    %c0_i32 = arith.constant 0 : i32
    %c0_i32_0 = arith.constant 0 : i32
    return %arg0, %c0_i32 : i32, i32
  }
  func.func @transform_1(%arg0: i32, %arg1: i32) -> (i32, i32) {
    %c0_i32 = arith.constant 0 : i32
    %c0_i32_0 = arith.constant 0 : i32
    return %c0_i32, %arg1 : i32, i32
  }
  func.func @transform_2(%arg0: i32, %arg1: i32) -> (i32, i32) {
    %c0_i32 = arith.constant 0 : i32
    %c0_i32_0 = arith.constant 0 : i32
    return %c0_i32, %arg1 : i32, i32
  }
  func.func @transform_3(%arg0: i32, %arg1: i32) -> (i32, i32) {
    %c0_i32 = arith.constant 0 : i32
    %c0_i32_0 = arith.constant 0 : i32
    return %arg1, %c0_i32 : i32, i32
  }
  func.func @transform_4(%arg0: i32, %arg1: i32) -> (i32, i32) {
    %c0_i32 = arith.constant 0 : i32
    %c0_i32_0 = arith.constant 0 : i32
    %c0_i32_1 = arith.constant 0 : i32
    return %c0_i32, %c0_i32_0 : i32, i32
  }
  func.func @transform_5(%arg0: i32, %arg1: i32) -> (i32, i32) {
    %c0_i32 = arith.constant 0 : i32
    %c0_i32_0 = arith.constant 0 : i32
    return %arg0, %c0_i32 : i32, i32
  }
  func.func @transform_6(%arg0: i32, %arg1: i32) -> (i32, i32) {
    %c0_i32 = arith.constant 0 : i32
    %c0_i32_0 = arith.constant 0 : i32
    %c0_i32_1 = arith.constant 0 : i32
    return %c0_i32, %c0_i32_0 : i32, i32
  }
  func.func @transform_7(%arg0: i32, %arg1: i32) -> (i32, i32) {
    %c0_i32 = arith.constant 0 : i32
    %c0_i32_0 = arith.constant 0 : i32
    %c0_i32_1 = arith.constant 0 : i32
    return %c0_i32, %c0_i32_0 : i32, i32
  }
  func.func @transform_8(%arg0: i32, %arg1: i32) -> (i32, i32) {
    %c0_i32 = arith.constant 0 : i32
    %c0_i32_0 = arith.constant 0 : i32
    return %arg0, %c0_i32 : i32, i32
  }
}

module attributes {stable_mosaic.version = 11 : i64} {
  func.func @_mha_kernel(%arg0: i32, %arg1: memref<1x8x32xf32, #tpu.memory_space<vmem>>, %arg2: memref<1x8x64xf32, #tpu.memory_space<vmem>>, %arg3: memref<1x8x32xf32, #tpu.memory_space<vmem>>) attributes {dimension_semantics = [#tpu.dimension_semantics<parallel>], iteration_bounds = array<i64: 2>, scalar_prefetch = 0 : i64, scratch_operands = 0 : i64, tpu.core_type = #tpu.core_type<tc>, window_params = [{transform_indices = @transform_0, window_bounds = array<i64: 1, 8, 32>}, {transform_indices = @transform_1, window_bounds = array<i64: 1, 8, 64>}, {transform_indices = @transform_2, window_bounds = array<i64: 1, 8, 32>}]} {
    %c0 = arith.constant 0 : index
    %c0_0 = arith.constant 0 : index
    %c0_1 = arith.constant 0 : index
    %0 = vector.load %arg1[%c0, %c0_0, %c0_1] : memref<1x8x32xf32, #tpu.memory_space<vmem>>, vector<1x8x32xf32>
    %1 = vector.shape_cast %0 : vector<1x8x32xf32> to vector<8x32xf32>
    %cst = arith.constant 0.353553385 : f32
    %2 = vector.broadcast %cst : f32 to vector<8x32xf32>
    %3 = arith.mulf %1, %2 : vector<8x32xf32>
    %4 = arith.truncf %3 : vector<8x32xf32> to vector<8x32xbf16>
    %c0_2 = arith.constant 0 : index
    %c0_3 = arith.constant 0 : index
    %c0_4 = arith.constant 0 : index
    %5 = vector.load %arg2[%c0_2, %c0_3, %c0_4] : memref<1x8x64xf32, #tpu.memory_space<vmem>>, vector<1x8x64xf32>
    %6 = vector.shape_cast %5 : vector<1x8x64xf32> to vector<8x64xf32>
    %7 = arith.truncf %6 : vector<8x64xf32> to vector<8x64xbf16>
    %8 = tpu.iota {dimensions = array<i32: 0>} : vector<8x8xi32>
    %9 = tpu.iota {dimensions = array<i32: 1>} : vector<8x8xi32>
    %10 = arith.cmpi sgt, %9, %8 : vector<8x8xi32>
    %cst_5 = arith.constant -1.000000e+30 : f32
    %cst_6 = arith.constant 0.000000e+00 : f32
    %11 = vector.broadcast %cst_5 : f32 to vector<8x8xf32>
    %12 = vector.broadcast %cst_6 : f32 to vector<8x8xf32>
    %13 = arith.select %10, %11, %12 : vector<8x8xi1>, vector<8x8xf32>
    %14 = vector.extract_strided_slice %4 {offsets = [0, 0], sizes = [8, 8], strides = [1, 1]} : vector<8x32xbf16> to vector<8x8xbf16>
    %15 = vector.extract_strided_slice %7 {offsets = [0, 0], sizes = [8, 8], strides = [1, 1]} : vector<8x64xbf16> to vector<8x8xbf16>
    %16 = vector.extract_strided_slice %7 {offsets = [0, 32], sizes = [8, 8], strides = [1, 1]} : vector<8x64xbf16> to vector<8x8xbf16>
    %cst_7 = arith.constant dense<0.000000e+00> : vector<8x8xf32>
    %17 = tpu.matmul %14, %15, %cst_7 {dimension_numbers = #tpu.dot_dimension_numbers<[1], [1], [0], [0], [0, 0, 1, 0], [], []>} : vector<8x8xbf16>, vector<8x8xbf16>, vector<8x8xf32> -> vector<8x8xf32>
    %18 = arith.addf %17, %13 : vector<8x8xf32>
    %cst_8 = arith.constant dense<0xFF800000> : vector<8xf32>
    %19 = vector.multi_reduction <maximumf>, %18, %cst_8 [1] : vector<8x8xf32> to vector<8xf32>
    %20 = vector.shape_cast %19 : vector<8xf32> to vector<8x1xf32>
    %21 = vector.broadcast %20 : vector<8x1xf32> to vector<8x8xf32>
    %22 = arith.subf %18, %21 : vector<8x8xf32>
    %23 = math.exp %22 : vector<8x8xf32>
    %cst_9 = arith.constant dense<0.000000e+00> : vector<8xf32>
    %24 = vector.multi_reduction <add>, %23, %cst_9 [1] : vector<8x8xf32> to vector<8xf32>
    %25 = vector.shape_cast %24 : vector<8xf32> to vector<8x1xf32>
    %26 = tpu.reciprocal %25 {approx = true} : vector<8x1xf32> -> vector<8x1xf32>
    %27 = vector.broadcast %26 : vector<8x1xf32> to vector<8x8xf32>
    %28 = arith.mulf %23, %27 : vector<8x8xf32>
    %29 = arith.truncf %28 : vector<8x8xf32> to vector<8x8xbf16>
    %cst_10 = arith.constant dense<0.000000e+00> : vector<8x8xf32>
    %30 = tpu.matmul %29, %16, %cst_10 {dimension_numbers = #tpu.dot_dimension_numbers<[1], [0], [0], [1], [0, 0, 1, 1], [], []>} : vector<8x8xbf16>, vector<8x8xbf16>, vector<8x8xf32> -> vector<8x8xf32>
    %31 = vector.extract_strided_slice %4 {offsets = [0, 8], sizes = [8, 8], strides = [1, 1]} : vector<8x32xbf16> to vector<8x8xbf16>
    %32 = vector.extract_strided_slice %7 {offsets = [0, 8], sizes = [8, 8], strides = [1, 1]} : vector<8x64xbf16> to vector<8x8xbf16>
    %33 = vector.extract_strided_slice %7 {offsets = [0, 40], sizes = [8, 8], strides = [1, 1]} : vector<8x64xbf16> to vector<8x8xbf16>
    %cst_11 = arith.constant dense<0.000000e+00> : vector<8x8xf32>
    %34 = tpu.matmul %31, %32, %cst_11 {dimension_numbers = #tpu.dot_dimension_numbers<[1], [1], [0], [0], [0, 0, 1, 0], [], []>} : vector<8x8xbf16>, vector<8x8xbf16>, vector<8x8xf32> -> vector<8x8xf32>
    %35 = arith.addf %34, %13 : vector<8x8xf32>
    %cst_12 = arith.constant dense<0xFF800000> : vector<8xf32>
    %36 = vector.multi_reduction <maximumf>, %35, %cst_12 [1] : vector<8x8xf32> to vector<8xf32>
    %37 = vector.shape_cast %36 : vector<8xf32> to vector<8x1xf32>
    %38 = vector.broadcast %37 : vector<8x1xf32> to vector<8x8xf32>
    %39 = arith.subf %35, %38 : vector<8x8xf32>
    %40 = math.exp %39 : vector<8x8xf32>
    %cst_13 = arith.constant dense<0.000000e+00> : vector<8xf32>
    %41 = vector.multi_reduction <add>, %40, %cst_13 [1] : vector<8x8xf32> to vector<8xf32>
    %42 = vector.shape_cast %41 : vector<8xf32> to vector<8x1xf32>
    %43 = tpu.reciprocal %42 {approx = true} : vector<8x1xf32> -> vector<8x1xf32>
    %44 = vector.broadcast %43 : vector<8x1xf32> to vector<8x8xf32>
    %45 = arith.mulf %40, %44 : vector<8x8xf32>
    %46 = arith.truncf %45 : vector<8x8xf32> to vector<8x8xbf16>
    %cst_14 = arith.constant dense<0.000000e+00> : vector<8x8xf32>
    %47 = tpu.matmul %46, %33, %cst_14 {dimension_numbers = #tpu.dot_dimension_numbers<[1], [0], [0], [1], [0, 0, 1, 1], [], []>} : vector<8x8xbf16>, vector<8x8xbf16>, vector<8x8xf32> -> vector<8x8xf32>
    %48 = vector.extract_strided_slice %4 {offsets = [0, 16], sizes = [8, 8], strides = [1, 1]} : vector<8x32xbf16> to vector<8x8xbf16>
    %49 = vector.extract_strided_slice %7 {offsets = [0, 16], sizes = [8, 8], strides = [1, 1]} : vector<8x64xbf16> to vector<8x8xbf16>
    %50 = vector.extract_strided_slice %7 {offsets = [0, 48], sizes = [8, 8], strides = [1, 1]} : vector<8x64xbf16> to vector<8x8xbf16>
    %cst_15 = arith.constant dense<0.000000e+00> : vector<8x8xf32>
    %51 = tpu.matmul %48, %49, %cst_15 {dimension_numbers = #tpu.dot_dimension_numbers<[1], [1], [0], [0], [0, 0, 1, 0], [], []>} : vector<8x8xbf16>, vector<8x8xbf16>, vector<8x8xf32> -> vector<8x8xf32>
    %52 = arith.addf %51, %13 : vector<8x8xf32>
    %cst_16 = arith.constant dense<0xFF800000> : vector<8xf32>
    %53 = vector.multi_reduction <maximumf>, %52, %cst_16 [1] : vector<8x8xf32> to vector<8xf32>
    %54 = vector.shape_cast %53 : vector<8xf32> to vector<8x1xf32>
    %55 = vector.broadcast %54 : vector<8x1xf32> to vector<8x8xf32>
    %56 = arith.subf %52, %55 : vector<8x8xf32>
    %57 = math.exp %56 : vector<8x8xf32>
    %cst_17 = arith.constant dense<0.000000e+00> : vector<8xf32>
    %58 = vector.multi_reduction <add>, %57, %cst_17 [1] : vector<8x8xf32> to vector<8xf32>
    %59 = vector.shape_cast %58 : vector<8xf32> to vector<8x1xf32>
    %60 = tpu.reciprocal %59 {approx = true} : vector<8x1xf32> -> vector<8x1xf32>
    %61 = vector.broadcast %60 : vector<8x1xf32> to vector<8x8xf32>
    %62 = arith.mulf %57, %61 : vector<8x8xf32>
    %63 = arith.truncf %62 : vector<8x8xf32> to vector<8x8xbf16>
    %cst_18 = arith.constant dense<0.000000e+00> : vector<8x8xf32>
    %64 = tpu.matmul %63, %50, %cst_18 {dimension_numbers = #tpu.dot_dimension_numbers<[1], [0], [0], [1], [0, 0, 1, 1], [], []>} : vector<8x8xbf16>, vector<8x8xbf16>, vector<8x8xf32> -> vector<8x8xf32>
    %65 = vector.extract_strided_slice %4 {offsets = [0, 24], sizes = [8, 8], strides = [1, 1]} : vector<8x32xbf16> to vector<8x8xbf16>
    %66 = vector.extract_strided_slice %7 {offsets = [0, 24], sizes = [8, 8], strides = [1, 1]} : vector<8x64xbf16> to vector<8x8xbf16>
    %67 = vector.extract_strided_slice %7 {offsets = [0, 56], sizes = [8, 8], strides = [1, 1]} : vector<8x64xbf16> to vector<8x8xbf16>
    %cst_19 = arith.constant dense<0.000000e+00> : vector<8x8xf32>
    %68 = tpu.matmul %65, %66, %cst_19 {dimension_numbers = #tpu.dot_dimension_numbers<[1], [1], [0], [0], [0, 0, 1, 0], [], []>} : vector<8x8xbf16>, vector<8x8xbf16>, vector<8x8xf32> -> vector<8x8xf32>
    %69 = arith.addf %68, %13 : vector<8x8xf32>
    %cst_20 = arith.constant dense<0xFF800000> : vector<8xf32>
    %70 = vector.multi_reduction <maximumf>, %69, %cst_20 [1] : vector<8x8xf32> to vector<8xf32>
    %71 = vector.shape_cast %70 : vector<8xf32> to vector<8x1xf32>
    %72 = vector.broadcast %71 : vector<8x1xf32> to vector<8x8xf32>
    %73 = arith.subf %69, %72 : vector<8x8xf32>
    %74 = math.exp %73 : vector<8x8xf32>
    %cst_21 = arith.constant dense<0.000000e+00> : vector<8xf32>
    %75 = vector.multi_reduction <add>, %74, %cst_21 [1] : vector<8x8xf32> to vector<8xf32>
    %76 = vector.shape_cast %75 : vector<8xf32> to vector<8x1xf32>
    %77 = tpu.reciprocal %76 {approx = true} : vector<8x1xf32> -> vector<8x1xf32>
    %78 = vector.broadcast %77 : vector<8x1xf32> to vector<8x8xf32>
    %79 = arith.mulf %74, %78 : vector<8x8xf32>
    %80 = arith.truncf %79 : vector<8x8xf32> to vector<8x8xbf16>
    %cst_22 = arith.constant dense<0.000000e+00> : vector<8x8xf32>
    %81 = tpu.matmul %80, %67, %cst_22 {dimension_numbers = #tpu.dot_dimension_numbers<[1], [0], [0], [1], [0, 0, 1, 1], [], []>} : vector<8x8xbf16>, vector<8x8xbf16>, vector<8x8xf32> -> vector<8x8xf32>
    %82 = tpu.concatenate %30, %47, %64, %81 in 1 : vector<8x8xf32>, vector<8x8xf32>, vector<8x8xf32>, vector<8x8xf32> -> vector<8x32xf32>
    %c0_23 = arith.constant 0 : index
    %c0_24 = arith.constant 0 : index
    %c0_25 = arith.constant 0 : index
    %83 = vector.load %arg3[%c0_23, %c0_24, %c0_25] : memref<1x8x32xf32, #tpu.memory_space<vmem>>, vector<1x8x32xf32>
    %84 = vector.shape_cast %83 : vector<1x8x32xf32> to vector<8x32xf32>
    %85 = vector.shape_cast %82 : vector<8x32xf32> to vector<1x8x32xf32>
    tpu.vector_store %arg3[%c0_23, %c0_24, %c0_25], %85 {strides = array<i32>} : memref<1x8x32xf32, #tpu.memory_space<vmem>>, vector<1x8x32xf32>,
    return
  }
  func.func @transform_0(%arg0: i32) -> (i32, i32, i32) {
    %c0_i32 = arith.constant 0 : i32
    %c0_i32_0 = arith.constant 0 : i32
    %c0_i32_1 = arith.constant 0 : i32
    return %arg0, %c0_i32, %c0_i32_0 : i32, i32, i32
  }
  func.func @transform_1(%arg0: i32) -> (i32, i32, i32) {
    %c0_i32 = arith.constant 0 : i32
    %c0_i32_0 = arith.constant 0 : i32
    %c0_i32_1 = arith.constant 0 : i32
    return %arg0, %c0_i32, %c0_i32_0 : i32, i32, i32
  }
  func.func @transform_2(%arg0: i32) -> (i32, i32, i32) {
    %c0_i32 = arith.constant 0 : i32
    %c0_i32_0 = arith.constant 0 : i32
    %c0_i32_1 = arith.constant 0 : i32
    return %arg0, %c0_i32, %c0_i32_0 : i32, i32, i32
  }
}

module attributes {stable_mosaic.version = 11 : i64} {
  func.func @_linear_kernel(%arg0: i32, %arg1: i32, %arg2: memref<16x32xf32, #tpu.memory_space<vmem>>, %arg3: memref<32x32xbf16, #tpu.memory_space<vmem>>, %arg4: memref<1x32xf32, #tpu.memory_space<vmem>>, %arg5: memref<16x32xf32, #tpu.memory_space<vmem>>) attributes {dimension_semantics = [#tpu.dimension_semantics<parallel>, #tpu.dimension_semantics<parallel>], iteration_bounds = array<i64: 1, 1>, scalar_prefetch = 0 : i64, scratch_operands = 0 : i64, tpu.core_type = #tpu.core_type<tc>, window_params = [{transform_indices = @transform_0, window_bounds = array<i64: 16, 32>}, {transform_indices = @transform_1, window_bounds = array<i64: 32, 32>}, {transform_indices = @transform_2, window_bounds = array<i64: 1, 32>}, {transform_indices = @transform_3, window_bounds = array<i64: 16, 32>}]} {
    %c0 = arith.constant 0 : index
    %c0_0 = arith.constant 0 : index
    %0 = vector.load %arg2[%c0, %c0_0] : memref<16x32xf32, #tpu.memory_space<vmem>>, vector<16x32xf32>
    %1 = arith.truncf %0 : vector<16x32xf32> to vector<16x32xbf16>
    %c0_1 = arith.constant 0 : index
    %c0_2 = arith.constant 0 : index
    %2 = vector.load %arg3[%c0_1, %c0_2] : memref<32x32xbf16, #tpu.memory_space<vmem>>, vector<32x32xbf16>
    %cst = arith.constant dense<0.000000e+00> : vector<16x32xf32>
    %3 = tpu.matmul %1, %2, %cst {dimension_numbers = #tpu.dot_dimension_numbers<[1], [0], [0], [1], [0, 0, 1, 1], [], []>} : vector<16x32xbf16>, vector<32x32xbf16>, vector<16x32xf32> -> vector<16x32xf32>
    %c0_3 = arith.constant 0 : index
    %c0_4 = arith.constant 0 : index
    %4 = vector.load %arg4[%c0_3, %c0_4] : memref<1x32xf32, #tpu.memory_space<vmem>>, vector<1x32xf32>
    %5 = vector.broadcast %4 : vector<1x32xf32> to vector<16x32xf32>
    %6 = arith.addf %3, %5 : vector<16x32xf32>
    %c0_5 = arith.constant 0 : index
    %c0_6 = arith.constant 0 : index
    %7 = vector.load %arg5[%c0_5, %c0_6] : memref<16x32xf32, #tpu.memory_space<vmem>>, vector<16x32xf32>
    tpu.vector_store %arg5[%c0_5, %c0_6], %6 {strides = array<i32>} : memref<16x32xf32, #tpu.memory_space<vmem>>, vector<16x32xf32>,
    return
  }
  func.func @transform_0(%arg0: i32, %arg1: i32) -> (i32, i32) {
    %c0_i32 = arith.constant 0 : i32
    %c0_i32_0 = arith.constant 0 : i32
    return %arg0, %c0_i32 : i32, i32
  }
  func.func @transform_1(%arg0: i32, %arg1: i32) -> (i32, i32) {
    %c0_i32 = arith.constant 0 : i32
    %c0_i32_0 = arith.constant 0 : i32
    return %c0_i32, %arg1 : i32, i32
  }
  func.func @transform_2(%arg0: i32, %arg1: i32) -> (i32, i32) {
    %c0_i32 = arith.constant 0 : i32
    %c0_i32_0 = arith.constant 0 : i32
    return %c0_i32, %arg1 : i32, i32
  }
  func.func @transform_3(%arg0: i32, %arg1: i32) -> (i32, i32) {
    %c0_i32 = arith.constant 0 : i32
    return %arg0, %arg1 : i32, i32
  }
}

module attributes {stable_mosaic.version = 11 : i64} {
  func.func @_linear_kernel(%arg0: i32, %arg1: i32, %arg2: memref<16x32xf32, #tpu.memory_space<vmem>>, %arg3: memref<32x64xbf16, #tpu.memory_space<vmem>>, %arg4: memref<1x64xf32, #tpu.memory_space<vmem>>, %arg5: memref<16x64xf32, #tpu.memory_space<vmem>>) attributes {dimension_semantics = [#tpu.dimension_semantics<parallel>, #tpu.dimension_semantics<parallel>], iteration_bounds = array<i64: 1, 1>, scalar_prefetch = 0 : i64, scratch_operands = 0 : i64, tpu.core_type = #tpu.core_type<tc>, window_params = [{transform_indices = @transform_0, window_bounds = array<i64: 16, 32>}, {transform_indices = @transform_1, window_bounds = array<i64: 32, 64>}, {transform_indices = @transform_2, window_bounds = array<i64: 1, 64>}, {transform_indices = @transform_3, window_bounds = array<i64: 16, 64>}]} {
    %c0 = arith.constant 0 : index
    %c0_0 = arith.constant 0 : index
    %0 = vector.load %arg2[%c0, %c0_0] : memref<16x32xf32, #tpu.memory_space<vmem>>, vector<16x32xf32>
    %1 = arith.truncf %0 : vector<16x32xf32> to vector<16x32xbf16>
    %c0_1 = arith.constant 0 : index
    %c0_2 = arith.constant 0 : index
    %2 = vector.load %arg3[%c0_1, %c0_2] : memref<32x64xbf16, #tpu.memory_space<vmem>>, vector<32x64xbf16>
    %cst = arith.constant dense<0.000000e+00> : vector<16x64xf32>
    %3 = tpu.matmul %1, %2, %cst {dimension_numbers = #tpu.dot_dimension_numbers<[1], [0], [0], [1], [0, 0, 1, 1], [], []>} : vector<16x32xbf16>, vector<32x64xbf16>, vector<16x64xf32> -> vector<16x64xf32>
    %c0_3 = arith.constant 0 : index
    %c0_4 = arith.constant 0 : index
    %4 = vector.load %arg4[%c0_3, %c0_4] : memref<1x64xf32, #tpu.memory_space<vmem>>, vector<1x64xf32>
    %5 = vector.broadcast %4 : vector<1x64xf32> to vector<16x64xf32>
    %6 = arith.addf %3, %5 : vector<16x64xf32>
    %c0_5 = arith.constant 0 : index
    %c0_6 = arith.constant 0 : index
    %7 = vector.load %arg5[%c0_5, %c0_6] : memref<16x64xf32, #tpu.memory_space<vmem>>, vector<16x64xf32>
    tpu.vector_store %arg5[%c0_5, %c0_6], %6 {strides = array<i32>} : memref<16x64xf32, #tpu.memory_space<vmem>>, vector<16x64xf32>,
    return
  }
  func.func @transform_0(%arg0: i32, %arg1: i32) -> (i32, i32) {
    %c0_i32 = arith.constant 0 : i32
    %c0_i32_0 = arith.constant 0 : i32
    return %arg0, %c0_i32 : i32, i32
  }
  func.func @transform_1(%arg0: i32, %arg1: i32) -> (i32, i32) {
    %c0_i32 = arith.constant 0 : i32
    %c0_i32_0 = arith.constant 0 : i32
    return %c0_i32, %arg1 : i32, i32
  }
  func.func @transform_2(%arg0: i32, %arg1: i32) -> (i32, i32) {
    %c0_i32 = arith.constant 0 : i32
    %c0_i32_0 = arith.constant 0 : i32
    return %c0_i32, %arg1 : i32, i32
  }
  func.func @transform_3(%arg0: i32, %arg1: i32) -> (i32, i32) {
    %c0_i32 = arith.constant 0 : i32
    return %arg0, %arg1 : i32, i32
  }
}

module attributes {stable_mosaic.version = 11 : i64} {
  func.func @_proj_add_ln_kernel(%arg0: i32, %arg1: memref<16x32xf32, #tpu.memory_space<vmem>>, %arg2: memref<32x32xbf16, #tpu.memory_space<vmem>>, %arg3: memref<1x32xf32, #tpu.memory_space<vmem>>, %arg4: memref<16x32xf32, #tpu.memory_space<vmem>>, %arg5: memref<1x32xf32, #tpu.memory_space<vmem>>, %arg6: memref<1x32xf32, #tpu.memory_space<vmem>>, %arg7: memref<16x32xf32, #tpu.memory_space<vmem>>) attributes {dimension_semantics = [#tpu.dimension_semantics<parallel>], iteration_bounds = array<i64: 1>, scalar_prefetch = 0 : i64, scratch_operands = 0 : i64, tpu.core_type = #tpu.core_type<tc>, window_params = [{transform_indices = @transform_0, window_bounds = array<i64: 16, 32>}, {pipeline_mode = #tpu.pipeline_mode<synchronous>, transform_indices = @transform_1, window_bounds = array<i64: 32, 32>}, {pipeline_mode = #tpu.pipeline_mode<synchronous>, transform_indices = @transform_2, window_bounds = array<i64: 1, 32>}, {transform_indices = @transform_3, window_bounds = array<i64: 16, 32>}, {pipeline_mode = #tpu.pipeline_mode<synchronous>, transform_indices = @transform_4, window_bounds = array<i64: 1, 32>}, {pipeline_mode = #tpu.pipeline_mode<synchronous>, transform_indices = @transform_5, window_bounds = array<i64: 1, 32>}, {transform_indices = @transform_6, window_bounds = array<i64: 16, 32>}]} {
    %c0 = arith.constant 0 : index
    %c0_0 = arith.constant 0 : index
    %0 = vector.load %arg1[%c0, %c0_0] : memref<16x32xf32, #tpu.memory_space<vmem>>, vector<16x32xf32>
    %1 = arith.truncf %0 : vector<16x32xf32> to vector<16x32xbf16>
    %c0_1 = arith.constant 0 : index
    %c0_2 = arith.constant 0 : index
    %2 = vector.load %arg2[%c0_1, %c0_2] : memref<32x32xbf16, #tpu.memory_space<vmem>>, vector<32x32xbf16>
    %cst = arith.constant dense<0.000000e+00> : vector<16x32xf32>
    %3 = tpu.matmul %1, %2, %cst {dimension_numbers = #tpu.dot_dimension_numbers<[1], [0], [0], [1], [0, 0, 1, 1], [], []>} : vector<16x32xbf16>, vector<32x32xbf16>, vector<16x32xf32> -> vector<16x32xf32>
    %c0_3 = arith.constant 0 : index
    %c0_4 = arith.constant 0 : index
    %4 = vector.load %arg3[%c0_3, %c0_4] : memref<1x32xf32, #tpu.memory_space<vmem>>, vector<1x32xf32>
    %5 = vector.broadcast %4 : vector<1x32xf32> to vector<16x32xf32>
    %6 = arith.addf %3, %5 : vector<16x32xf32>
    %c0_5 = arith.constant 0 : index
    %c0_6 = arith.constant 0 : index
    %7 = vector.load %arg4[%c0_5, %c0_6] : memref<16x32xf32, #tpu.memory_space<vmem>>, vector<16x32xf32>
    %8 = arith.addf %6, %7 : vector<16x32xf32>
    %cst_7 = arith.constant dense<0.000000e+00> : vector<16xf32>
    %9 = vector.multi_reduction <add>, %8, %cst_7 [1] : vector<16x32xf32> to vector<16xf32>
    %10 = vector.shape_cast %9 : vector<16xf32> to vector<16x1xf32>
    %cst_8 = arith.constant 3.200000e+01 : f32
    %11 = vector.broadcast %cst_8 : f32 to vector<16x1xf32>
    %12 = arith.divf %10, %11 : vector<16x1xf32>
    %13 = vector.broadcast %12 : vector<16x1xf32> to vector<16x32xf32>
    %14 = arith.subf %8, %13 : vector<16x32xf32>
    %15 = arith.mulf %14, %14 : vector<16x32xf32>
    %cst_9 = arith.constant dense<0.000000e+00> : vector<16xf32>
    %16 = vector.multi_reduction <add>, %15, %cst_9 [1] : vector<16x32xf32> to vector<16xf32>
    %17 = vector.shape_cast %16 : vector<16xf32> to vector<16x1xf32>
    %cst_10 = arith.constant 3.200000e+01 : f32
    %18 = vector.broadcast %cst_10 : f32 to vector<16x1xf32>
    %19 = arith.divf %17, %18 : vector<16x1xf32>
    %20 = vector.broadcast %12 : vector<16x1xf32> to vector<16x32xf32>
    %21 = arith.subf %8, %20 : vector<16x32xf32>
    %cst_11 = arith.constant 9.99999974E-6 : f32
    %22 = vector.broadcast %cst_11 : f32 to vector<16x1xf32>
    %23 = arith.addf %19, %22 : vector<16x1xf32>
    %24 = math.rsqrt %23 : vector<16x1xf32>
    %25 = vector.broadcast %24 : vector<16x1xf32> to vector<16x32xf32>
    %26 = arith.mulf %21, %25 : vector<16x32xf32>
    %c0_12 = arith.constant 0 : index
    %c0_13 = arith.constant 0 : index
    %27 = vector.load %arg5[%c0_12, %c0_13] : memref<1x32xf32, #tpu.memory_space<vmem>>, vector<1x32xf32>
    %28 = vector.broadcast %27 : vector<1x32xf32> to vector<16x32xf32>
    %29 = arith.mulf %26, %28 : vector<16x32xf32>
    %c0_14 = arith.constant 0 : index
    %c0_15 = arith.constant 0 : index
    %30 = vector.load %arg6[%c0_14, %c0_15] : memref<1x32xf32, #tpu.memory_space<vmem>>, vector<1x32xf32>
    %31 = vector.broadcast %30 : vector<1x32xf32> to vector<16x32xf32>
    %32 = arith.addf %29, %31 : vector<16x32xf32>
    %c0_16 = arith.constant 0 : index
    %c0_17 = arith.constant 0 : index
    %33 = vector.load %arg7[%c0_16, %c0_17] : memref<16x32xf32, #tpu.memory_space<vmem>>, vector<16x32xf32>
    tpu.vector_store %arg7[%c0_16, %c0_17], %32 {strides = array<i32>} : memref<16x32xf32, #tpu.memory_space<vmem>>, vector<16x32xf32>,
    return
  }
  func.func @transform_0(%arg0: i32) -> (i32, i32) {
    %c0_i32 = arith.constant 0 : i32
    %c0_i32_0 = arith.constant 0 : i32
    return %arg0, %c0_i32 : i32, i32
  }
  func.func @transform_1(%arg0: i32) -> (i32, i32) {
    %c0_i32 = arith.constant 0 : i32
    %c0_i32_0 = arith.constant 0 : i32
    %c0_i32_1 = arith.constant 0 : i32
    return %c0_i32, %c0_i32_0 : i32, i32
  }
  func.func @transform_2(%arg0: i32) -> (i32, i32) {
    %c0_i32 = arith.constant 0 : i32
    %c0_i32_0 = arith.constant 0 : i32
    %c0_i32_1 = arith.constant 0 : i32
    return %c0_i32, %c0_i32_0 : i32, i32
  }
  func.func @transform_3(%arg0: i32) -> (i32, i32) {
    %c0_i32 = arith.constant 0 : i32
    %c0_i32_0 = arith.constant 0 : i32
    return %arg0, %c0_i32 : i32, i32
  }
  func.func @transform_4(%arg0: i32) -> (i32, i32) {
    %c0_i32 = arith.constant 0 : i32
    %c0_i32_0 = arith.constant 0 : i32
    %c0_i32_1 = arith.constant 0 : i32
    return %c0_i32, %c0_i32_0 : i32, i32
  }
  func.func @transform_5(%arg0: i32) -> (i32, i32) {
    %c0_i32 = arith.constant 0 : i32
    %c0_i32_0 = arith.constant 0 : i32
    %c0_i32_1 = arith.constant 0 : i32
    return %c0_i32, %c0_i32_0 : i32, i32
  }
  func.func @transform_6(%arg0: i32) -> (i32, i32) {
    %c0_i32 = arith.constant 0 : i32
    %c0_i32_0 = arith.constant 0 : i32
    return %arg0, %c0_i32 : i32, i32
  }
}

module attributes {stable_mosaic.version = 11 : i64} {
  func.func @_qkv_proj_kernel(%arg0: i32, %arg1: memref<16x32xf32, #tpu.memory_space<vmem>>, %arg2: memref<32x96xbf16, #tpu.memory_space<vmem>>, %arg3: memref<1x96xf32, #tpu.memory_space<vmem>>, %arg4: memref<16x32xf32, #tpu.memory_space<vmem>>, %arg5: memref<16x64xf32, #tpu.memory_space<vmem>>) attributes {dimension_semantics = [#tpu.dimension_semantics<parallel>], iteration_bounds = array<i64: 1>, scalar_prefetch = 0 : i64, scratch_operands = 0 : i64, tpu.core_type = #tpu.core_type<tc>, window_params = [{transform_indices = @transform_0, window_bounds = array<i64: 16, 32>}, {pipeline_mode = #tpu.pipeline_mode<synchronous>, transform_indices = @transform_1, window_bounds = array<i64: 32, 96>}, {pipeline_mode = #tpu.pipeline_mode<synchronous>, transform_indices = @transform_2, window_bounds = array<i64: 1, 96>}, {transform_indices = @transform_3, window_bounds = array<i64: 16, 32>}, {transform_indices = @transform_4, window_bounds = array<i64: 16, 64>}]} {
    %c0 = arith.constant 0 : index
    %c0_0 = arith.constant 0 : index
    %0 = vector.load %arg1[%c0, %c0_0] : memref<16x32xf32, #tpu.memory_space<vmem>>, vector<16x32xf32>
    %1 = arith.truncf %0 : vector<16x32xf32> to vector<16x32xbf16>
    %c0_1 = arith.constant 0 : index
    %c0_2 = arith.constant 0 : index
    %2 = vector.load %arg2[%c0_1, %c0_2] : memref<32x96xbf16, #tpu.memory_space<vmem>>, vector<32x96xbf16>
    %cst = arith.constant dense<0.000000e+00> : vector<16x96xf32>
    %3 = tpu.matmul %1, %2, %cst {dimension_numbers = #tpu.dot_dimension_numbers<[1], [0], [0], [1], [0, 0, 1, 1], [], []>} : vector<16x32xbf16>, vector<32x96xbf16>, vector<16x96xf32> -> vector<16x96xf32>
    %c0_3 = arith.constant 0 : index
    %c0_4 = arith.constant 0 : index
    %4 = vector.load %arg3[%c0_3, %c0_4] : memref<1x96xf32, #tpu.memory_space<vmem>>, vector<1x96xf32>
    %5 = vector.broadcast %4 : vector<1x96xf32> to vector<16x96xf32>
    %6 = arith.addf %3, %5 : vector<16x96xf32>
    %7 = vector.extract_strided_slice %6 {offsets = [0, 0], sizes = [16, 32], strides = [1, 1]} : vector<16x96xf32> to vector<16x32xf32>
    %c0_5 = arith.constant 0 : index
    %c0_6 = arith.constant 0 : index
    %8 = vector.load %arg4[%c0_5, %c0_6] : memref<16x32xf32, #tpu.memory_space<vmem>>, vector<16x32xf32>
    tpu.vector_store %arg4[%c0_5, %c0_6], %7 {strides = array<i32>} : memref<16x32xf32, #tpu.memory_space<vmem>>, vector<16x32xf32>,
    %9 = vector.extract_strided_slice %6 {offsets = [0, 32], sizes = [16, 64], strides = [1, 1]} : vector<16x96xf32> to vector<16x64xf32>
    %c0_7 = arith.constant 0 : index
    %c0_8 = arith.constant 0 : index
    %10 = vector.load %arg5[%c0_7, %c0_8] : memref<16x64xf32, #tpu.memory_space<vmem>>, vector<16x64xf32>
    tpu.vector_store %arg5[%c0_7, %c0_8], %9 {strides = array<i32>} : memref<16x64xf32, #tpu.memory_space<vmem>>, vector<16x64xf32>,
    return
  }
  func.func @transform_0(%arg0: i32) -> (i32, i32) {
    %c0_i32 = arith.constant 0 : i32
    %c0_i32_0 = arith.constant 0 : i32
    return %arg0, %c0_i32 : i32, i32
  }
  func.func @transform_1(%arg0: i32) -> (i32, i32) {
    %c0_i32 = arith.constant 0 : i32
    %c0_i32_0 = arith.constant 0 : i32
    %c0_i32_1 = arith.constant 0 : i32
    return %c0_i32, %c0_i32_0 : i32, i32
  }
  func.func @transform_2(%arg0: i32) -> (i32, i32) {
    %c0_i32 = arith.constant 0 : i32
    %c0_i32_0 = arith.constant 0 : i32
    %c0_i32_1 = arith.constant 0 : i32
    return %c0_i32, %c0_i32_0 : i32, i32
  }
  func.func @transform_3(%arg0: i32) -> (i32, i32) {
    %c0_i32 = arith.constant 0 : i32
    %c0_i32_0 = arith.constant 0 : i32
    return %arg0, %c0_i32 : i32, i32
  }
  func.func @transform_4(%arg0: i32) -> (i32, i32) {
    %c0_i32 = arith.constant 0 : i32
    %c0_i32_0 = arith.constant 0 : i32
    return %arg0, %c0_i32 : i32, i32
  }
}

module attributes {stable_mosaic.version = 11 : i64} {
  func.func @_linear_kernel(%arg0: i32, %arg1: i32, %arg2: memref<16x32xf32, #tpu.memory_space<vmem>>, %arg3: memref<32x32xbf16, #tpu.memory_space<vmem>>, %arg4: memref<1x32xf32, #tpu.memory_space<vmem>>, %arg5: memref<16x32xf32, #tpu.memory_space<vmem>>) attributes {dimension_semantics = [#tpu.dimension_semantics<parallel>, #tpu.dimension_semantics<parallel>], iteration_bounds = array<i64: 1, 1>, scalar_prefetch = 0 : i64, scratch_operands = 0 : i64, tpu.core_type = #tpu.core_type<tc>, window_params = [{transform_indices = @transform_0, window_bounds = array<i64: 16, 32>}, {transform_indices = @transform_1, window_bounds = array<i64: 32, 32>}, {transform_indices = @transform_2, window_bounds = array<i64: 1, 32>}, {transform_indices = @transform_3, window_bounds = array<i64: 16, 32>}]} {
    %c0 = arith.constant 0 : index
    %c0_0 = arith.constant 0 : index
    %0 = vector.load %arg2[%c0, %c0_0] : memref<16x32xf32, #tpu.memory_space<vmem>>, vector<16x32xf32>
    %1 = arith.truncf %0 : vector<16x32xf32> to vector<16x32xbf16>
    %c0_1 = arith.constant 0 : index
    %c0_2 = arith.constant 0 : index
    %2 = vector.load %arg3[%c0_1, %c0_2] : memref<32x32xbf16, #tpu.memory_space<vmem>>, vector<32x32xbf16>
    %cst = arith.constant dense<0.000000e+00> : vector<16x32xf32>
    %3 = tpu.matmul %1, %2, %cst {dimension_numbers = #tpu.dot_dimension_numbers<[1], [0], [0], [1], [0, 0, 1, 1], [], []>} : vector<16x32xbf16>, vector<32x32xbf16>, vector<16x32xf32> -> vector<16x32xf32>
    %c0_3 = arith.constant 0 : index
    %c0_4 = arith.constant 0 : index
    %4 = vector.load %arg4[%c0_3, %c0_4] : memref<1x32xf32, #tpu.memory_space<vmem>>, vector<1x32xf32>
    %5 = vector.broadcast %4 : vector<1x32xf32> to vector<16x32xf32>
    %6 = arith.addf %3, %5 : vector<16x32xf32>
    %c0_5 = arith.constant 0 : index
    %c0_6 = arith.constant 0 : index
    %7 = vector.load %arg5[%c0_5, %c0_6] : memref<16x32xf32, #tpu.memory_space<vmem>>, vector<16x32xf32>
    tpu.vector_store %arg5[%c0_5, %c0_6], %6 {strides = array<i32>} : memref<16x32xf32, #tpu.memory_space<vmem>>, vector<16x32xf32>,
    return
  }
  func.func @transform_0(%arg0: i32, %arg1: i32) -> (i32, i32) {
    %c0_i32 = arith.constant 0 : i32
    %c0_i32_0 = arith.constant 0 : i32
    return %arg0, %c0_i32 : i32, i32
  }
  func.func @transform_1(%arg0: i32, %arg1: i32) -> (i32, i32) {
    %c0_i32 = arith.constant 0 : i32
    %c0_i32_0 = arith.constant 0 : i32
    return %c0_i32, %arg1 : i32, i32
  }
  func.func @transform_2(%arg0: i32, %arg1: i32) -> (i32, i32) {
    %c0_i32 = arith.constant 0 : i32
    %c0_i32_0 = arith.constant 0 : i32
    return %c0_i32, %arg1 : i32, i32
  }
  func.func @transform_3(%arg0: i32, %arg1: i32) -> (i32, i32) {
    %c0_i32 = arith.constant 0 : i32
    return %arg0, %arg1 : i32, i32
  }
}

module attributes {stable_mosaic.version = 11 : i64} {
  func.func @_linear_kernel(%arg0: i32, %arg1: i32, %arg2: memref<16x32xf32, #tpu.memory_space<vmem>>, %arg3: memref<32x64xbf16, #tpu.memory_space<vmem>>, %arg4: memref<1x64xf32, #tpu.memory_space<vmem>>, %arg5: memref<16x64xf32, #tpu.memory_space<vmem>>) attributes {dimension_semantics = [#tpu.dimension_semantics<parallel>, #tpu.dimension_semantics<parallel>], iteration_bounds = array<i64: 1, 1>, scalar_prefetch = 0 : i64, scratch_operands = 0 : i64, tpu.core_type = #tpu.core_type<tc>, window_params = [{transform_indices = @transform_0, window_bounds = array<i64: 16, 32>}, {transform_indices = @transform_1, window_bounds = array<i64: 32, 64>}, {transform_indices = @transform_2, window_bounds = array<i64: 1, 64>}, {transform_indices = @transform_3, window_bounds = array<i64: 16, 64>}]} {
    %c0 = arith.constant 0 : index
    %c0_0 = arith.constant 0 : index
    %0 = vector.load %arg2[%c0, %c0_0] : memref<16x32xf32, #tpu.memory_space<vmem>>, vector<16x32xf32>
    %1 = arith.truncf %0 : vector<16x32xf32> to vector<16x32xbf16>
    %c0_1 = arith.constant 0 : index
    %c0_2 = arith.constant 0 : index
    %2 = vector.load %arg3[%c0_1, %c0_2] : memref<32x64xbf16, #tpu.memory_space<vmem>>, vector<32x64xbf16>
    %cst = arith.constant dense<0.000000e+00> : vector<16x64xf32>
    %3 = tpu.matmul %1, %2, %cst {dimension_numbers = #tpu.dot_dimension_numbers<[1], [0], [0], [1], [0, 0, 1, 1], [], []>} : vector<16x32xbf16>, vector<32x64xbf16>, vector<16x64xf32> -> vector<16x64xf32>
    %c0_3 = arith.constant 0 : index
    %c0_4 = arith.constant 0 : index
    %4 = vector.load %arg4[%c0_3, %c0_4] : memref<1x64xf32, #tpu.memory_space<vmem>>, vector<1x64xf32>
    %5 = vector.broadcast %4 : vector<1x64xf32> to vector<16x64xf32>
    %6 = arith.addf %3, %5 : vector<16x64xf32>
    %c0_5 = arith.constant 0 : index
    %c0_6 = arith.constant 0 : index
    %7 = vector.load %arg5[%c0_5, %c0_6] : memref<16x64xf32, #tpu.memory_space<vmem>>, vector<16x64xf32>
    tpu.vector_store %arg5[%c0_5, %c0_6], %6 {strides = array<i32>} : memref<16x64xf32, #tpu.memory_space<vmem>>, vector<16x64xf32>,
    return
  }
  func.func @transform_0(%arg0: i32, %arg1: i32) -> (i32, i32) {
    %c0_i32 = arith.constant 0 : i32
    %c0_i32_0 = arith.constant 0 : i32
    return %arg0, %c0_i32 : i32, i32
  }
  func.func @transform_1(%arg0: i32, %arg1: i32) -> (i32, i32) {
    %c0_i32 = arith.constant 0 : i32
    %c0_i32_0 = arith.constant 0 : i32
    return %c0_i32, %arg1 : i32, i32
  }
  func.func @transform_2(%arg0: i32, %arg1: i32) -> (i32, i32) {
    %c0_i32 = arith.constant 0 : i32
    %c0_i32_0 = arith.constant 0 : i32
    return %c0_i32, %arg1 : i32, i32
  }
  func.func @transform_3(%arg0: i32, %arg1: i32) -> (i32, i32) {
    %c0_i32 = arith.constant 0 : i32
    return %arg0, %arg1 : i32, i32
  }
}

module attributes {stable_mosaic.version = 11 : i64} {
  func.func @_ffn_add_ln_kernel(%arg0: i32, %arg1: i32, %arg2: memref<16x32xf32, #tpu.memory_space<vmem>>, %arg3: memref<32x64xbf16, #tpu.memory_space<vmem>>, %arg4: memref<1x64xf32, #tpu.memory_space<vmem>>, %arg5: memref<64x32xbf16, #tpu.memory_space<vmem>>, %arg6: memref<1x32xf32, #tpu.memory_space<vmem>>, %arg7: memref<16x32xf32, #tpu.memory_space<vmem>>, %arg8: memref<1x32xf32, #tpu.memory_space<vmem>>, %arg9: memref<1x32xf32, #tpu.memory_space<vmem>>, %arg10: memref<16x32xf32, #tpu.memory_space<vmem>>, %arg11: memref<16x32xf32, #tpu.memory_space<vmem>>) attributes {dimension_semantics = [#tpu.dimension_semantics<parallel>, #tpu.dimension_semantics<arbitrary>], iteration_bounds = array<i64: 1, 1>, scalar_prefetch = 0 : i64, scratch_operands = 1 : i64, tpu.core_type = #tpu.core_type<tc>, window_params = [{transform_indices = @transform_0, window_bounds = array<i64: 16, 32>}, {transform_indices = @transform_1, window_bounds = array<i64: 32, 64>}, {transform_indices = @transform_2, window_bounds = array<i64: 1, 64>}, {transform_indices = @transform_3, window_bounds = array<i64: 64, 32>}, {pipeline_mode = #tpu.pipeline_mode<synchronous>, transform_indices = @transform_4, window_bounds = array<i64: 1, 32>}, {transform_indices = @transform_5, window_bounds = array<i64: 16, 32>}, {pipeline_mode = #tpu.pipeline_mode<synchronous>, transform_indices = @transform_6, window_bounds = array<i64: 1, 32>}, {pipeline_mode = #tpu.pipeline_mode<synchronous>, transform_indices = @transform_7, window_bounds = array<i64: 1, 32>}, {transform_indices = @transform_8, window_bounds = array<i64: 16, 32>}]} {
    %c0_i32 = arith.constant 0 : i32
    %0 = arith.cmpi eq, %arg1, %c0_i32 : i32
    %1 = arith.extui %0 : i1 to i32
    %c0_i32_0 = arith.constant 0 : i32
    %2 = arith.cmpi ne, %1, %c0_i32_0 : i32
    scf.if %2 {
      %cst_16 = arith.constant 0.000000e+00 : f32
      %21 = vector.broadcast %cst_16 : f32 to vector<16x32xf32>
      %c0_17 = arith.constant 0 : index
      %c0_18 = arith.constant 0 : index
      %22 = vector.load %arg11[%c0_17, %c0_18] : memref<16x32xf32, #tpu.memory_space<vmem>>, vector<16x32xf32>
      tpu.vector_store %arg11[%c0_17, %c0_18], %21 {strides = array<i32>} : memref<16x32xf32, #tpu.memory_space<vmem>>, vector<16x32xf32>,
    } else {
    }
    %c0 = arith.constant 0 : index
    %c0_1 = arith.constant 0 : index
    %3 = vector.load %arg2[%c0, %c0_1] : memref<16x32xf32, #tpu.memory_space<vmem>>, vector<16x32xf32>
    %4 = arith.truncf %3 : vector<16x32xf32> to vector<16x32xbf16>
    %c0_2 = arith.constant 0 : index
    %c0_3 = arith.constant 0 : index
    %5 = vector.load %arg3[%c0_2, %c0_3] : memref<32x64xbf16, #tpu.memory_space<vmem>>, vector<32x64xbf16>
    %cst = arith.constant dense<0.000000e+00> : vector<16x64xf32>
    %6 = tpu.matmul %4, %5, %cst {dimension_numbers = #tpu.dot_dimension_numbers<[1], [0], [0], [1], [0, 0, 1, 1], [], []>} : vector<16x32xbf16>, vector<32x64xbf16>, vector<16x64xf32> -> vector<16x64xf32>
    %c0_4 = arith.constant 0 : index
    %c0_5 = arith.constant 0 : index
    %7 = vector.load %arg4[%c0_4, %c0_5] : memref<1x64xf32, #tpu.memory_space<vmem>>, vector<1x64xf32>
    %8 = vector.broadcast %7 : vector<1x64xf32> to vector<16x64xf32>
    %9 = arith.addf %6, %8 : vector<16x64xf32>
    %cst_6 = arith.constant 0.000000e+00 : f32
    %10 = vector.broadcast %cst_6 : f32 to vector<16x64xf32>
    %11 = arith.maximumf %9, %10 : vector<16x64xf32>
    %12 = arith.truncf %11 : vector<16x64xf32> to vector<16x64xbf16>
    %c0_7 = arith.constant 0 : index
    %c0_8 = arith.constant 0 : index
    %13 = vector.load %arg11[%c0_7, %c0_8] : memref<16x32xf32, #tpu.memory_space<vmem>>, vector<16x32xf32>
    %c0_9 = arith.constant 0 : index
    %c0_10 = arith.constant 0 : index
    %14 = vector.load %arg5[%c0_9, %c0_10] : memref<64x32xbf16, #tpu.memory_space<vmem>>, vector<64x32xbf16>
    %cst_11 = arith.constant dense<0.000000e+00> : vector<16x32xf32>
    %15 = tpu.matmul %12, %14, %cst_11 {dimension_numbers = #tpu.dot_dimension_numbers<[1], [0], [0], [1], [0, 0, 1, 1], [], []>} : vector<16x64xbf16>, vector<64x32xbf16>, vector<16x32xf32> -> vector<16x32xf32>
    %16 = arith.addf %13, %15 : vector<16x32xf32>
    %c0_12 = arith.constant 0 : index
    %c0_13 = arith.constant 0 : index
    %17 = vector.load %arg11[%c0_12, %c0_13] : memref<16x32xf32, #tpu.memory_space<vmem>>, vector<16x32xf32>
    tpu.vector_store %arg11[%c0_12, %c0_13], %16 {strides = array<i32>} : memref<16x32xf32, #tpu.memory_space<vmem>>, vector<16x32xf32>,
    %c0_i32_14 = arith.constant 0 : i32
    %18 = arith.cmpi eq, %arg1, %c0_i32_14 : i32
    %19 = arith.extui %18 : i1 to i32
    %c0_i32_15 = arith.constant 0 : i32
    %20 = arith.cmpi ne, %19, %c0_i32_15 : i32
    scf.if %20 {
      %c0_16 = arith.constant 0 : index
      %c0_17 = arith.constant 0 : index
      %21 = vector.load %arg11[%c0_16, %c0_17] : memref<16x32xf32, #tpu.memory_space<vmem>>, vector<16x32xf32>
      %c0_18 = arith.constant 0 : index
      %c0_19 = arith.constant 0 : index
      %22 = vector.load %arg6[%c0_18, %c0_19] : memref<1x32xf32, #tpu.memory_space<vmem>>, vector<1x32xf32>
      %23 = vector.broadcast %22 : vector<1x32xf32> to vector<16x32xf32>
      %24 = arith.addf %21, %23 : vector<16x32xf32>
      %c0_20 = arith.constant 0 : index
      %c0_21 = arith.constant 0 : index
      %25 = vector.load %arg7[%c0_20, %c0_21] : memref<16x32xf32, #tpu.memory_space<vmem>>, vector<16x32xf32>
      %26 = arith.addf %24, %25 : vector<16x32xf32>
      %cst_22 = arith.constant dense<0.000000e+00> : vector<16xf32>
      %27 = vector.multi_reduction <add>, %26, %cst_22 [1] : vector<16x32xf32> to vector<16xf32>
      %28 = vector.shape_cast %27 : vector<16xf32> to vector<16x1xf32>
      %cst_23 = arith.constant 3.200000e+01 : f32
      %29 = vector.broadcast %cst_23 : f32 to vector<16x1xf32>
      %30 = arith.divf %28, %29 : vector<16x1xf32>
      %31 = vector.broadcast %30 : vector<16x1xf32> to vector<16x32xf32>
      %32 = arith.subf %26, %31 : vector<16x32xf32>
      %33 = arith.mulf %32, %32 : vector<16x32xf32>
      %cst_24 = arith.constant dense<0.000000e+00> : vector<16xf32>
      %34 = vector.multi_reduction <add>, %33, %cst_24 [1] : vector<16x32xf32> to vector<16xf32>
      %35 = vector.shape_cast %34 : vector<16xf32> to vector<16x1xf32>
      %cst_25 = arith.constant 3.200000e+01 : f32
      %36 = vector.broadcast %cst_25 : f32 to vector<16x1xf32>
      %37 = arith.divf %35, %36 : vector<16x1xf32>
      %38 = vector.broadcast %30 : vector<16x1xf32> to vector<16x32xf32>
      %39 = arith.subf %26, %38 : vector<16x32xf32>
      %cst_26 = arith.constant 9.99999974E-6 : f32
      %40 = vector.broadcast %cst_26 : f32 to vector<16x1xf32>
      %41 = arith.addf %37, %40 : vector<16x1xf32>
      %42 = math.rsqrt %41 : vector<16x1xf32>
      %43 = vector.broadcast %42 : vector<16x1xf32> to vector<16x32xf32>
      %44 = arith.mulf %39, %43 : vector<16x32xf32>
      %c0_27 = arith.constant 0 : index
      %c0_28 = arith.constant 0 : index
      %45 = vector.load %arg8[%c0_27, %c0_28] : memref<1x32xf32, #tpu.memory_space<vmem>>, vector<1x32xf32>
      %46 = vector.broadcast %45 : vector<1x32xf32> to vector<16x32xf32>
      %47 = arith.mulf %44, %46 : vector<16x32xf32>
      %c0_29 = arith.constant 0 : index
      %c0_30 = arith.constant 0 : index
      %48 = vector.load %arg9[%c0_29, %c0_30] : memref<1x32xf32, #tpu.memory_space<vmem>>, vector<1x32xf32>
      %49 = vector.broadcast %48 : vector<1x32xf32> to vector<16x32xf32>
      %50 = arith.addf %47, %49 : vector<16x32xf32>
      %c0_31 = arith.constant 0 : index
      %c0_32 = arith.constant 0 : index
      %51 = vector.load %arg10[%c0_31, %c0_32] : memref<16x32xf32, #tpu.memory_space<vmem>>, vector<16x32xf32>
      tpu.vector_store %arg10[%c0_31, %c0_32], %50 {strides = array<i32>} : memref<16x32xf32, #tpu.memory_space<vmem>>, vector<16x32xf32>,
    } else {
    }
    return
  }
  func.func @transform_0(%arg0: i32, %arg1: i32) -> (i32, i32) {
    %c0_i32 = arith.constant 0 : i32
    %c0_i32_0 = arith.constant 0 : i32
    return %arg0, %c0_i32 : i32, i32
  }
  func.func @transform_1(%arg0: i32, %arg1: i32) -> (i32, i32) {
    %c0_i32 = arith.constant 0 : i32
    %c0_i32_0 = arith.constant 0 : i32
    return %c0_i32, %arg1 : i32, i32
  }
  func.func @transform_2(%arg0: i32, %arg1: i32) -> (i32, i32) {
    %c0_i32 = arith.constant 0 : i32
    %c0_i32_0 = arith.constant 0 : i32
    return %c0_i32, %arg1 : i32, i32
  }
  func.func @transform_3(%arg0: i32, %arg1: i32) -> (i32, i32) {
    %c0_i32 = arith.constant 0 : i32
    %c0_i32_0 = arith.constant 0 : i32
    return %arg1, %c0_i32 : i32, i32
  }
  func.func @transform_4(%arg0: i32, %arg1: i32) -> (i32, i32) {
    %c0_i32 = arith.constant 0 : i32
    %c0_i32_0 = arith.constant 0 : i32
    %c0_i32_1 = arith.constant 0 : i32
    return %c0_i32, %c0_i32_0 : i32, i32
  }
  func.func @transform_5(%arg0: i32, %arg1: i32) -> (i32, i32) {
    %c0_i32 = arith.constant 0 : i32
    %c0_i32_0 = arith.constant 0 : i32
    return %arg0, %c0_i32 : i32, i32
  }
  func.func @transform_6(%arg0: i32, %arg1: i32) -> (i32, i32) {
    %c0_i32 = arith.constant 0 : i32
    %c0_i32_0 = arith.constant 0 : i32
    %c0_i32_1 = arith.constant 0 : i32
    return %c0_i32, %c0_i32_0 : i32, i32
  }
  func.func @transform_7(%arg0: i32, %arg1: i32) -> (i32, i32) {
    %c0_i32 = arith.constant 0 : i32
    %c0_i32_0 = arith.constant 0 : i32
    %c0_i32_1 = arith.constant 0 : i32
    return %c0_i32, %c0_i32_0 : i32, i32
  }
  func.func @transform_8(%arg0: i32, %arg1: i32) -> (i32, i32) {
    %c0_i32 = arith.constant 0 : i32
    %c0_i32_0 = arith.constant 0 : i32
    return %arg0, %c0_i32 : i32, i32
  }
}

module attributes {stable_mosaic.version = 11 : i64} {
  func.func @_linear_kernel(%arg0: i32, %arg1: i32, %arg2: memref<16x32xf32, #tpu.memory_space<vmem>>, %arg3: memref<32x40xbf16, #tpu.memory_space<vmem>>, %arg4: memref<1x40xf32, #tpu.memory_space<vmem>>, %arg5: memref<16x40xf32, #tpu.memory_space<vmem>>) attributes {dimension_semantics = [#tpu.dimension_semantics<parallel>, #tpu.dimension_semantics<parallel>], iteration_bounds = array<i64: 1, 1>, scalar_prefetch = 0 : i64, scratch_operands = 0 : i64, tpu.core_type = #tpu.core_type<tc>, window_params = [{transform_indices = @transform_0, window_bounds = array<i64: 16, 32>}, {transform_indices = @transform_1, window_bounds = array<i64: 32, 40>}, {transform_indices = @transform_2, window_bounds = array<i64: 1, 40>}, {transform_indices = @transform_3, window_bounds = array<i64: 16, 40>}]} {
    %c0 = arith.constant 0 : index
    %c0_0 = arith.constant 0 : index
    %0 = vector.load %arg2[%c0, %c0_0] : memref<16x32xf32, #tpu.memory_space<vmem>>, vector<16x32xf32>
    %1 = arith.truncf %0 : vector<16x32xf32> to vector<16x32xbf16>
    %c0_1 = arith.constant 0 : index
    %c0_2 = arith.constant 0 : index
    %2 = vector.load %arg3[%c0_1, %c0_2] : memref<32x40xbf16, #tpu.memory_space<vmem>>, vector<32x40xbf16>
    %cst = arith.constant dense<0.000000e+00> : vector<16x40xf32>
    %3 = tpu.matmul %1, %2, %cst {dimension_numbers = #tpu.dot_dimension_numbers<[1], [0], [0], [1], [0, 0, 1, 1], [], []>} : vector<16x32xbf16>, vector<32x40xbf16>, vector<16x40xf32> -> vector<16x40xf32>
    %c0_3 = arith.constant 0 : index
    %c0_4 = arith.constant 0 : index
    %4 = vector.load %arg4[%c0_3, %c0_4] : memref<1x40xf32, #tpu.memory_space<vmem>>, vector<1x40xf32>
    %5 = vector.broadcast %4 : vector<1x40xf32> to vector<16x40xf32>
    %6 = arith.addf %3, %5 : vector<16x40xf32>
    %c0_5 = arith.constant 0 : index
    %c0_6 = arith.constant 0 : index
    %7 = vector.load %arg5[%c0_5, %c0_6] : memref<16x40xf32, #tpu.memory_space<vmem>>, vector<16x40xf32>
    tpu.vector_store %arg5[%c0_5, %c0_6], %6 {strides = array<i32>} : memref<16x40xf32, #tpu.memory_space<vmem>>, vector<16x40xf32>,
    return
  }
  func.func @transform_0(%arg0: i32, %arg1: i32) -> (i32, i32) {
    %c0_i32 = arith.constant 0 : i32
    %c0_i32_0 = arith.constant 0 : i32
    return %arg0, %c0_i32 : i32, i32
  }
  func.func @transform_1(%arg0: i32, %arg1: i32) -> (i32, i32) {
    %c0_i32 = arith.constant 0 : i32
    %c0_i32_0 = arith.constant 0 : i32
    return %c0_i32, %arg1 : i32, i32
  }
  func.func @transform_2(%arg0: i32, %arg1: i32) -> (i32, i32) {
    %c0_i32 = arith.constant 0 : i32
    %c0_i32_0 = arith.constant 0 : i32
    return %c0_i32, %arg1 : i32, i32
  }
  func.func @transform_3(%arg0: i32, %arg1: i32) -> (i32, i32) {
    %c0_i32 = arith.constant 0 : i32
    return %arg0, %arg1 : i32, i32
  }
}

</mosaic_0001>

<llo_original>
// kernel: transformer_forward.27
$region0: #{transformer_forward.27}
  #allocation0 [shape = 'u32[]', space=smem, size = 0x4, offset = 0x4, fixed_abs, tag = 'smem constant byte address 0x4 - core index']
  #allocation1 [shape = 'u32[72,128]{1,0:T(1,128)}', space=vmem, size = 0x9000, scoped, tag = 'internal scratch']
  %s0 = inlined_call_operand.vmem [shape: f32[16,32], index: 0, kind: input, shape index: {}]
  %s1 = inlined_call_operand.vmem [shape: bf16[32,32], index: 1, kind: input, shape index: {}]
  %s2 = inlined_call_operand.vmem [shape: f32[1,32], index: 2, kind: input, shape index: {}]
  %s3 = inlined_call_operand.vmem [shape: f32[16,32], index: 3, kind: input, shape index: {}]
  %s4 = inlined_call_operand.vmem [shape: f32[1,32], index: 4, kind: input, shape index: {}]
  %s5 = inlined_call_operand.vmem [shape: f32[1,32], index: 5, kind: input, shape index: {}]
  %s6 = inlined_call_operand.vmem [shape: f32[16,32], index: 6, kind: output, shape index: {}]
  %s7 = sld [smem:[#allocation0]]
  $region34: #{transformer_forward.27} parent=0
    _
  %s9 = ssub.s32 1, %s7
  %s10 = scalar_select 0, %s9, %s7
  // Predicated region
  $region2: #{transformer_forward.27} parent=0 // pred_check
    _
  $region3: #{transformer_forward.27} parent=0 // pred_check_branch
    %12 = sbr.rel (0) target = $region5
  $region4: #{transformer_forward.27} parent=0 // pred_region
    _
  $region5: #{transformer_forward.27} parent=0 // pred_fallthru
    _
  // Predicated region
  $region6: #{transformer_forward.27} parent=0 // pred_check
    _
  $region7: #{transformer_forward.27} parent=0 // pred_check_branch
    %14 = sbr.rel (0) target = $region9
  $region8: #{transformer_forward.27} parent=0 // pred_region
    _
  $region9: #{transformer_forward.27} parent=0 // pred_fallthru
    _
  // Predicated region
  $region10: #{transformer_forward.27} parent=0 // pred_check
    _
  $region11: #{transformer_forward.27} parent=0 // pred_check_branch
    %16 = sbr.rel (0) target = $region13
  $region12: #{transformer_forward.27} parent=0 // pred_region
    _
  $region13: #{transformer_forward.27} parent=0 // pred_fallthru
    _
  // Predicated region
  $region14: #{transformer_forward.27} parent=0 // pred_check
    _
  $region15: #{transformer_forward.27} parent=0 // pred_check_branch
    %18 = sbr.rel (0) target = $region17
  $region16: #{transformer_forward.27} parent=0 // pred_region
    _
  $region17: #{transformer_forward.27} parent=0 // pred_fallthru
    _
  // Predicated region
  $region18: #{transformer_forward.27} parent=0 // pred_check
    _
  $region19: #{transformer_forward.27} parent=0 // pred_check_branch
    %20 = sbr.rel (0) target = $region21
  $region20: #{transformer_forward.27} parent=0 // pred_region
    _
  $region21: #{transformer_forward.27} parent=0 // pred_fallthru
    _
  // Predicated region
  $region22: #{transformer_forward.27} parent=0 // pred_check
    _
  $region23: #{transformer_forward.27} parent=0 // pred_check_branch
    %22 = sbr.rel (0) target = $region25
  $region24: #{transformer_forward.27} parent=0 // pred_region
    _
  $region25: #{transformer_forward.27} parent=0 // pred_fallthru
    _
  %v24 = vld [vmem:[%s0] sm:$0xff]
  %v25 = vld [vmem:[%s0 + $0x8] sm:$0xff]
  %v26 = vpack.c.bf16 %v25, %v24
  %v27 = vld [vmem:[%s1] sm:$0xf]
  %v28 = vld [vmem:[%s1 + $0x4] sm:$0xf]
  %v29 = vld [vmem:[%s1 + $0x8] sm:$0xf]
  %v30 = vld [vmem:[%s1 + $0xc] sm:$0xf]
  %v31 = vld [vmem:[%s2] sm:$0x1]
  %v33 = vperm.slane %v31, 0
  %v39 = vunpack.c.l.b16 %v27
  %v40 = vunpack.c.l.b16 %v28
  %v41 = vunpack.c.l.b16 %v29
  %v42 = vunpack.c.l.b16 %v30
  %v43 = vpack.c.b16 %v40, %v39
  %v44 = vpack.c.b16 %v42, %v41
  %vm47 = vcmask 261120
  %v49 = vsel %vm47, %v26, 0
  %51 = vmatpush.bf16.msra.mxu0 0
  %52 = vmatpush.bf16.msra.mxu0 0
  %53 = vmatpush.bf16.msra.mxu0 0
  %54 = vmatpush.bf16.msra.mxu0 0
  %55 = vmatpush.bf16.msra.mxu0 0
  %56 = vmatpush.bf16.msra.mxu0 0
  %57 = vmatpush.bf16.msra.mxu0 %v44
  %58 = vmatpush.bf16.msra.mxu0 %v43
  %59 = vmatmul.bf16.gmra.mxu0 %v49
  %v60 = vpop.f32.mrf.mxu0
  %v61 = vadd.f32 %v33, %v60
  %v62 = vpop.f32.mrf.mxu0
  %v63 = vadd.f32 %v33, %v62
  %64 = vdwg.mxu0
  %v65 = vld [vmem:[%s3] sm:$0xff]
  %v66 = vld [vmem:[%s3 + $0x8] sm:$0xff]
  %v67 = vadd.f32 %v61, %v65
  %v68 = vadd.f32 %v63, %v66
  %v69 = vsel %vm47, %v67, 0.0
  %70 = vadd.xlane.f32.xlu0 %v69
  %v71 = vpop.xlane.xlu0 %70
  %v72 = vsel %vm47, %v68, 0.0
  %73 = vadd.xlane.f32.xlu0 %v72
  %v74 = vpop.xlane.xlu0 %73
  %v75 = vrcp.pop 32.0
  %v76 = vmul.f32 32.0, %v75
  %v77 = vsub.f32 1.0, %v76
  %v78 = vmul.f32 %v75, %v77
  %v79 = vadd.f32 %v75, %v78
  %vm80 = vweird.f32 %v75
  %v81 = vsel %vm80, %v75, %v79
  %v82 = vmul.f32 %v71, %v81
  %v83 = vmul.f32 %v74, %v81
  %v84 = vsub.f32 %v67, %v82
  %v85 = vsub.f32 %v68, %v83
  %v86 = vmul.f32 %v84, %v84
  %v87 = vmul.f32 %v85, %v85
  %v88 = vsel %vm47, %v86, 0.0
  %89 = vadd.xlane.f32.xlu0 %v88
  %v90 = vpop.xlane.xlu0 %89
  %v91 = vsel %vm47, %v87, 0.0
  %92 = vadd.xlane.f32.xlu0 %v91
  %v93 = vpop.xlane.xlu0 %92
  %v94 = vmul.f32 %v90, %v81
  %v95 = vmul.f32 %v93, %v81
  %v96 = vadd.f32 %v94, 1e-05
  %v97 = vadd.f32 %v95, 1e-05
  %v98 = vrsqrt.pop %v96
  %v99 = vmul.f32 %v98, %v96
  %v100 = vmul.f32 %v99, %v98
  %v101 = vmul.f32 0.5, %v100
  %v102 = vsub.f32 1.5, %v101
  %v103 = vmul.f32 %v98, %v102
  %vm104 = vweird.f32 %v96
  %vm105 = vweird.f32 %v98
  %vm106 = vmor %vm104, %vm105
  %v107 = vsel %vm106, %v98, %v103
  %v108 = vrsqrt.pop %v97
  %v109 = vmul.f32 %v108, %v97
  %v110 = vmul.f32 %v109, %v108
  %v111 = vmul.f32 0.5, %v110
  %v112 = vsub.f32 1.5, %v111
  %v113 = vmul.f32 %v108, %v112
  %vm114 = vweird.f32 %v97
  %vm115 = vweird.f32 %v108
  %vm116 = vmor %vm114, %vm115
  %v117 = vsel %vm116, %v108, %v113
  %v118 = vmul.f32 %v84, %v107
  %v119 = vmul.f32 %v85, %v117
  %v120 = vld [vmem:[%s4] sm:$0x1]
  %v122 = vperm.slane %v120, 0
  %v124 = vmul.f32 %v118, %v122
  %v125 = vmul.f32 %v119, %v122
  %v126 = vld [vmem:[%s5] sm:$0x1]
  %v128 = vperm.slane %v126, 0
  %v130 = vadd.f32 %v124, %v128
  %v131 = vadd.f32 %v125, %v128
  %132 = vst.msk [vmem:[%s6] sm:$0xff] %vm47, %v130
  %133 = vst.msk [vmem:[%s6 + $0x8] sm:$0xff] %vm47, %v131
  // Predicated region
  $region26: #{transformer_forward.27} parent=0 // pred_check
    _
  $region27: #{transformer_forward.27} parent=0 // pred_check_branch
    %135 = sbr.rel (0) target = $region29
  $region28: #{transformer_forward.27} parent=0 // pred_region
    _
  $region29: #{transformer_forward.27} parent=0 // pred_fallthru
    _
  // Predicated region
  $region30: #{transformer_forward.27} parent=0 // pred_check
    _
  $region31: #{transformer_forward.27} parent=0 // pred_check_branch
    %137 = sbr.rel (0) target = $region33
  $region32: #{transformer_forward.27} parent=0 // pred_region
    _
  $region33: #{transformer_forward.27} parent=0 // pred_fallthru
    _

// kernel: transformer_forward.25
$region0: #{transformer_forward.25}
  #allocation0 [shape = 'u32[]', space=smem, size = 0x4, offset = 0x4, fixed_abs, tag = 'smem constant byte address 0x4 - core index']
  #allocation1 [shape = 'u32[72,128]{1,0:T(1,128)}', space=vmem, size = 0x9000, scoped, tag = 'internal scratch']
  %s0 = inlined_call_operand.vmem [shape: f32[16,32], index: 0, kind: input, shape index: {}]
  %s1 = inlined_call_operand.vmem [shape: bf16[32,96], index: 1, kind: input, shape index: {}]
  %s2 = inlined_call_operand.vmem [shape: f32[1,96], index: 2, kind: input, shape index: {}]
  %s3 = inlined_call_operand.vmem [shape: f32[16,32], index: 3, kind: output, shape index: {0}]
  %s4 = inlined_call_operand.vmem [shape: f32[16,64], index: 4, kind: output, shape index: {1}]
  %5 = xla_tuple %s3, %s4
  %s6 = sld [smem:[#allocation0]]
  $region30: #{transformer_forward.25} parent=0
    _
  %s8 = ssub.s32 1, %s6
  %s9 = scalar_select 0, %s8, %s6
  // Predicated region
  $region2: #{transformer_forward.25} parent=0 // pred_check
    _
  $region3: #{transformer_forward.25} parent=0 // pred_check_branch
    %11 = sbr.rel (0) target = $region5
  $region4: #{transformer_forward.25} parent=0 // pred_region
    _
  $region5: #{transformer_forward.25} parent=0 // pred_fallthru
    _
  // Predicated region
  $region6: #{transformer_forward.25} parent=0 // pred_check
    _
  $region7: #{transformer_forward.25} parent=0 // pred_check_branch
    %13 = sbr.rel (0) target = $region9
  $region8: #{transformer_forward.25} parent=0 // pred_region
    _
  $region9: #{transformer_forward.25} parent=0 // pred_fallthru
    _
  // Predicated region
  $region10: #{transformer_forward.25} parent=0 // pred_check
    _
  $region11: #{transformer_forward.25} parent=0 // pred_check_branch
    %15 = sbr.rel (0) target = $region13
  $region12: #{transformer_forward.25} parent=0 // pred_region
    _
  $region13: #{transformer_forward.25} parent=0 // pred_fallthru
    _
  %v17 = vld [vmem:[%s0] sm:$0xff]
  %v18 = vld [vmem:[%s0 + $0x8] sm:$0xff]
  %v19 = vpack.c.bf16 %v18, %v17
  %v20 = vld [vmem:[%s1] sm:$0xf]
  %v21 = vld [vmem:[%s1 + $0x4] sm:$0xf]
  %v22 = vld [vmem:[%s1 + $0x8] sm:$0xf]
  %v23 = vld [vmem:[%s1 + $0xc] sm:$0xf]
  %v24 = vld [vmem:[%s2] sm:$0x1]
  %v26 = vperm.slane %v24, 0
  %v32 = vunpack.c.l.b16 %v20
  %v33 = vunpack.c.l.b16 %v21
  %v34 = vunpack.c.l.b16 %v22
  %v35 = vunpack.c.l.b16 %v23
  %v36 = vpack.c.b16 %v33, %v32
  %v37 = vpack.c.b16 %v35, %v34
  %vm40 = vcmask 261120
  %v42 = vsel %vm40, %v19, 0
  %44 = vmatpush.bf16.msra.mxu0 0
  %45 = vmatpush.bf16.msra.mxu0 0
  %46 = vmatpush.bf16.msra.mxu0 0
  %47 = vmatpush.bf16.msra.mxu0 0
  %48 = vmatpush.bf16.msra.mxu0 0
  %49 = vmatpush.bf16.msra.mxu0 0
  %50 = vmatpush.bf16.msra.mxu0 %v37
  %51 = vmatpush.bf16.msra.mxu0 %v36
  %52 = vmatmul.bf16.gmra.mxu0 %v42
  %v53 = vpop.f32.mrf.mxu0
  %v54 = vadd.f32 %v26, %v53
  %v55 = vpop.f32.mrf.mxu0
  %v56 = vadd.f32 %v26, %v55
  %57 = vdwg.mxu0
  %58 = vst.msk [vmem:[%s3] sm:$0xff] %vm40, %v54
  %59 = vst.msk [vmem:[%s3 + $0x8] sm:$0xff] %vm40, %v56
  %62 = vrot.lane.b32.xlu0 %v54, 96
  %v63 = vpop.permute.xlu0 %62
  %64 = vrot.lane.b32.xlu0 %v56, 96
  %v65 = vpop.permute.xlu0 %64
  %vm68 = vcmask 523264
  %69 = vst.msk [vmem:[%s4] sm:$0xff] %vm68, %v63
  %70 = vst.msk [vmem:[%s4 + $0x8] sm:$0xff] %vm68, %v65
  // Predicated region
  $region14: #{transformer_forward.25} parent=0 // pred_check
    _
  $region15: #{transformer_forward.25} parent=0 // pred_check_branch
    %72 = sbr.rel (0) target = $region17
  $region16: #{transformer_forward.25} parent=0 // pred_region
    _
  $region17: #{transformer_forward.25} parent=0 // pred_fallthru
    _
  // Predicated region
  $region18: #{transformer_forward.25} parent=0 // pred_check
    _
  $region19: #{transformer_forward.25} parent=0 // pred_check_branch
    %74 = sbr.rel (0) target = $region21
  $region20: #{transformer_forward.25} parent=0 // pred_region
    _
  $region21: #{transformer_forward.25} parent=0 // pred_fallthru
    _
  // Predicated region
  $region22: #{transformer_forward.25} parent=0 // pred_check
    _
  $region23: #{transformer_forward.25} parent=0 // pred_check_branch
    %76 = sbr.rel (0) target = $region25
  $region24: #{transformer_forward.25} parent=0 // pred_region
    _
  $region25: #{transformer_forward.25} parent=0 // pred_fallthru
    _
  // Predicated region
  $region26: #{transformer_forward.25} parent=0 // pred_check
    _
  $region27: #{transformer_forward.25} parent=0 // pred_check_branch
    %78 = sbr.rel (0) target = $region29
  $region28: #{transformer_forward.25} parent=0 // pred_region
    _
  $region29: #{transformer_forward.25} parent=0 // pred_fallthru
    _

// kernel: transformer_forward.26
$region0: #{transformer_forward.26}
  #allocation0 [shape = 'u32[]', space=smem, size = 0x4, offset = 0x4, fixed_abs, tag = 'smem constant byte address 0x4 - core index']
  #allocation1 [shape = 'u32[72,128]{1,0:T(1,128)}', space=vmem, size = 0x9000, scoped, tag = 'internal scratch']
  %s0 = inlined_call_operand.vmem [shape: f32[2,8,32], index: 0, kind: input, shape index: {}]
  %s1 = inlined_call_operand.vmem [shape: f32[2,8,64], index: 1, kind: input, shape index: {}]
  %s2 = inlined_call_operand.vmem [shape: f32[2,8,32], index: 2, kind: output, shape index: {}]
  %s3 = sld [smem:[#allocation0]]
  $region41: #{transformer_forward.26} parent=0
    _
  %s5 = ssub.s32 1, %s3
  %s6 = scalar_select 0, %s5, %s3
  loop: start=0, step=1, limit=4
  $region2: #{transformer_forward.26} parent=0 // loop_pre_header
    _
  $region3: #{transformer_forward.26} parent=0 // loop_header
    %s8 = sphi 0, %s12
    %p9 = scmp.ge.s32.totalorder %s8, 4
    %s18 = sphi 0, %s20
    %s21 = sphi 0, %s18
    %s22 = sphi 0, %s21
    %s38 = sphi 0, %s22
    %s44 = sphi 0, %s46
    %s47 = sphi 0, %s44
    %s48 = sphi 0, %s47
    %s64 = sphi 0, %s48
    %s70 = sphi 0, %s72
    %s73 = sphi 0, %s70
    %s74 = sphi 0, %s73
    %s90 = sphi 0, %s74
  $region4: #{transformer_forward.26} parent=0 // loop_header_branch
    %11 = sbr.rel (%p9) target = $region8
  $region5: #{transformer_forward.26} parent=0 // loop_body
    %s13 = ssub.s32 %s8, 1
    %s14 = ssub.s32 %s8, 2
    %s15 = sadd.s32 %s8, 1
    %s16 = ssub.s32 %s8, %s15
    %p17 = scmp.eq.s32.totalorder %s16, 0
    %s19 = sadd.s32 %s18, 1
    %s20 = scalar_select %p17, %s18, %s19
    %p23 = pneg %p17
    %p24 = scmp.eq.s32.totalorder %s8, 1
    %p25 = por %p23, %p24
    %p26 = scmp.ne.s32.totalorder %s18, %s21
    %p27 = scmp.eq.s32.totalorder %s8, 0
    %p28 = por %p26, %p27
    %p29 = scmp.ne.s32.totalorder %s18, %s21
    %p30 = scmp.eq.s32.totalorder %s13, 1
    %p31 = por %p29, %p30
    %p32 = scmp.ne.s32.totalorder %s21, %s22
    %p33 = scmp.eq.s32.totalorder %s13, 0
    %p34 = por %p32, %p33
    %p35 = scmp.ne.s32.totalorder %s21, %s22
    %p36 = scmp.eq.s32.totalorder %s14, 1
    %p37 = por %p35, %p36
    %p39 = scmp.ne.s32.totalorder %s22, %s38
    %p40 = scmp.eq.s32.totalorder %s14, 0
    %p41 = por %p39, %p40
    %s42 = ssub.s32 %s8, %s15
    %p43 = scmp.eq.s32.totalorder %s42, 0
    %s45 = sadd.s32 %s44, 1
    %s46 = scalar_select %p43, %s44, %s45
    %p49 = pneg %p43
    %p50 = scmp.eq.s32.totalorder %s8, 1
    %p51 = por %p49, %p50
    %p52 = scmp.ne.s32.totalorder %s44, %s47
    %p53 = scmp.eq.s32.totalorder %s8, 0
    %p54 = por %p52, %p53
    %p55 = scmp.ne.s32.totalorder %s44, %s47
    %p56 = scmp.eq.s32.totalorder %s13, 1
    %p57 = por %p55, %p56
    %p58 = scmp.ne.s32.totalorder %s47, %s48
    %p59 = scmp.eq.s32.totalorder %s13, 0
    %p60 = por %p58, %p59
    %p61 = scmp.ne.s32.totalorder %s47, %s48
    %p62 = scmp.eq.s32.totalorder %s14, 1
    %p63 = por %p61, %p62
    %p65 = scmp.ne.s32.totalorder %s48, %s64
    %p66 = scmp.eq.s32.totalorder %s14, 0
    %p67 = por %p65, %p66
    %s68 = ssub.s32 %s8, %s15
    %p69 = scmp.eq.s32.totalorder %s68, 0
    %s71 = sadd.s32 %s70, 1
    %s72 = scalar_select %p69, %s70, %s71
    %p75 = pneg %p69
    %p76 = scmp.eq.s32.totalorder %s8, 1
    %p77 = por %p75, %p76
    %p78 = scmp.ne.s32.totalorder %s70, %s73
    %p79 = scmp.eq.s32.totalorder %s8, 0
    %p80 = por %p78, %p79
    %p81 = scmp.ne.s32.totalorder %s70, %s73
    %p82 = scmp.eq.s32.totalorder %s13, 1
    %p83 = por %p81, %p82
    %p84 = scmp.ne.s32.totalorder %s73, %s74
    %p85 = scmp.eq.s32.totalorder %s13, 0
    %p86 = por %p84, %p85
    %p87 = scmp.ne.s32.totalorder %s73, %s74
    %p88 = scmp.eq.s32.totalorder %s14, 1
    %p89 = por %p87, %p88
    %p91 = scmp.ne.s32.totalorder %s74, %s90
    %p92 = scmp.eq.s32.totalorder %s14, 0
    %p93 = por %p91, %p92
    %p94 = scmp.le.s32.totalorder 1, %s8
    %p95 = scmp.lt.s32.totalorder %s8, 3
    %p96 = pnand %p94, %p95
    %p97 = pneg %p96
    // Predicated region
    $region9: #{transformer_forward.26} parent=5 // pred_check
      _
    $region10: #{transformer_forward.26} parent=5 // pred_check_branch
      %99 = sbr.rel (%p96) target = $region12
    $region11: #{transformer_forward.26} parent=5 // pred_region
      %s100 = ssub.s32 %s8, 1
    $region12: #{transformer_forward.26} parent=5 // pred_fallthru
      _
    %p101 = scmp.lt.s32.totalorder %s8, 2
    // Predicated region
    $region13: #{transformer_forward.26} parent=5 // pred_check
      %p102 = pneg %p101
    $region14: #{transformer_forward.26} parent=5 // pred_check_branch
      %104 = sbr.rel (%p102) target = $region16
    $region15: #{transformer_forward.26} parent=5 // pred_region
      // Predicated region
      $region17: #{transformer_forward.26} parent=15 // pred_check
        %p105 = pneg %p28
      $region18: #{transformer_forward.26} parent=15 // pred_check_branch
        %107 = sbr.rel (%p105) target = $region20
      $region19: #{transformer_forward.26} parent=15 // pred_region
        %p108 = scmp.lt.s32.totalorder %s8, 1
        %s109 = scalar_select %p108, %s8, 1
        %s110 = smul.addr %s109, 8
        %s111 = scalar_lea.vmem %s0, %s110
      $region20: #{transformer_forward.26} parent=15 // pred_fallthru
        _
      // Predicated region
      $region21: #{transformer_forward.26} parent=15 // pred_check
        %p112 = pneg %p54
      $region22: #{transformer_forward.26} parent=15 // pred_check_branch
        %114 = sbr.rel (%p112) target = $region24
      $region23: #{transformer_forward.26} parent=15 // pred_region
        %p115 = scmp.lt.s32.totalorder %s8, 1
        %s116 = scalar_select %p115, %s8, 1
        %s117 = smul.addr %s116, 8
        %s118 = scalar_lea.vmem %s1, %s117
      $region24: #{transformer_forward.26} parent=15 // pred_fallthru
        _
    $region16: #{transformer_forward.26} parent=5 // pred_fallthru
      _
    %p119 = scmp.le.s32.totalorder 1, %s8
    %p120 = scmp.lt.s32.totalorder %s8, 3
    %p121 = pnand %p119, %p120
    %p122 = pneg %p121
    // Predicated region
    $region25: #{transformer_forward.26} parent=5 // pred_check
      _
    $region26: #{transformer_forward.26} parent=5 // pred_check_branch
      %124 = sbr.rel (%p121) target = $region28
    $region27: #{transformer_forward.26} parent=5 // pred_region
      %s125 = ssub.s32 %s8, 1
      %p126 = scmp.lt.s32.totalorder %s13, 1
      %s127 = scalar_select %p126, %s13, 1
      %s128 = smul.addr %s127, 8
      %s129 = scalar_lea.vmem %s0, %s128
      %p130 = pneg %p34
      %p131 = pneg %p31
      %p132 = scmp.lt.s32.totalorder %s13, 1
      %s133 = scalar_select %p132, %s13, 1
      %s134 = smul.addr %s133, 8
      %s135 = scalar_lea.vmem %s1, %s134
      %p136 = pneg %p60
      %p137 = pneg %p57
      %p138 = pneg %p86
      %p139 = pneg %p83
      %p140 = scmp.lt.s32.totalorder %s13, 1
      %s141 = scalar_select %p140, %s13, 1
      %s142 = smul.addr %s141, 8
      %s143 = scalar_lea.vmem %s2, %s142
      %p144 = scmp.lt.s32.totalorder %s13, 1
      %s145 = scalar_select %p144, %s13, 1
      %s146 = smul.addr %s145, 8
      %s147 = scalar_lea.vmem %s0, %s146
      %p148 = scmp.lt.s32.totalorder %s13, 1
      %s149 = scalar_select %p148, %s13, 1
      %s150 = smul.addr %s149, 8
      %s151 = scalar_lea.vmem %s1, %s150
      %p152 = scmp.lt.s32.totalorder %s13, 1
      %s153 = scalar_select %p152, %s13, 1
      %s154 = smul.addr %s153, 8
      %s155 = scalar_lea.vmem %s2, %s154
      %v157 = vld [vmem:[%s147] sm:$0xff]
      %v158 = vmul.f32 %v157, 0.35355338
      %v159 = vpack.c.bf16 %v158, %v158
      %v160 = vld [vmem:[%s151] sm:$0xff]
      %v161 = vpack.c.bf16 %v160, %v160
      %vm162 = vcmask 64512
      %v164 = vsel %vm162, %v159, 0
      %v167 = vsel %vm162, %v161, 0
      %169 = vmatpush.bf16.xpose.msra.mxu0 0
      %170 = vmatpush.bf16.xpose.msra.mxu0 0
      %171 = vmatpush.bf16.xpose.msra.mxu0 0
      %172 = vmatpush.bf16.xpose.msra.mxu0 0
      %173 = vmatpush.bf16.xpose.msra.mxu0 0
      %174 = vmatpush.bf16.xpose.msra.mxu0 0
      %175 = vmatpush.bf16.xpose.msra.mxu0 0
      %176 = vmatpush.bf16.xpose.msra.mxu0 %v167
      %177 = vmatmul.bf16.gmra.mxu0 %v164
      %v178 = vpop.f32.mrf.mxu0
      %v179 = vadd.f32 0.0, %v178
      %v180 = vpop.f32.mrf.mxu0
      %181 = vdwg.mxu0
      %v182 = vsel %vm162, %v179, -inf
      %183 = vmax.xlane.f32.xlu0 %v182
      %v184 = vpop.xlane.xlu0 %183
      %v185 = vsub.f32 %v179, %v184
      %v186 = vmul.f32 %v185, 1.442695
      %v187 = vpow.pop %v186
      %v188 = vsel %vm162, %v187, 0.0
      %189 = vadd.xlane.f32.xlu0 %v188
      %v190 = vpop.xlane.xlu0 %189
      %v191 = vrcp.pop %v190
      %v192 = vmul.f32 %v187, %v191
      %v193 = vpack.c.bf16 %v192, %v192
      %v195 = vunpack.c.l.b16 %v161
      %v196 = vpack.c.b16 %v195, %v195
      %197 = vrot.lane.b32.xlu0 %v196, 96
      %v198 = vpop.permute.xlu0 %197
      %v200 = vsel %vm162, %v193, 0
      %vm202 = vcmask 1043456
      %v204 = vsel %vm202, %v198, 0
      %206 = vmatpush.bf16.msra.mxu0 0
      %207 = vmatpush.bf16.msra.mxu0 0
      %208 = vmatpush.bf16.msra.mxu0 0
      %209 = vmatpush.bf16.msra.mxu0 0
      %210 = vmatpush.bf16.msra.mxu0 0
      %211 = vmatpush.bf16.msra.mxu0 0
      %212 = vmatpush.bf16.msra.mxu0 0
      %213 = vmatpush.bf16.msra.mxu0 %v204
      %214 = vmatmul.bf16.gmra.mxu0 %v200
      %v215 = vpop.f32.mrf.mxu0
      %v216 = vadd.f32 0.0, %v215
      %v217 = vpop.f32.mrf.mxu0
      %218 = vdwg.mxu0
      %v220 = vunpack.c.l.b16 %v159
      %v221 = vpack.c.b16 %v220, %v220
      %222 = vrot.lane.b32.xlu0 %v221, 120
      %v223 = vpop.permute.xlu0 %222
      %224 = vrot.lane.b32.xlu0 %v196, 120
      %v225 = vpop.permute.xlu0 %224
      %v227 = vsel %vm162, %v223, 0
      %v230 = vsel %vm162, %v225, 0
      %232 = vmatpush.bf16.xpose.msra.mxu0 0
      %233 = vmatpush.bf16.xpose.msra.mxu0 0
      %234 = vmatpush.bf16.xpose.msra.mxu0 0
      %235 = vmatpush.bf16.xpose.msra.mxu0 0
      %236 = vmatpush.bf16.xpose.msra.mxu0 0
      %237 = vmatpush.bf16.xpose.msra.mxu0 0
      %238 = vmatpush.bf16.xpose.msra.mxu0 0
      %239 = vmatpush.bf16.xpose.msra.mxu0 %v230
      %240 = vmatmul.bf16.gmra.mxu0 %v227
      %v241 = vpop.f32.mrf.mxu0
      %v242 = vadd.f32 0.0, %v241
      %v243 = vpop.f32.mrf.mxu0
      %244 = vdwg.mxu0
      %v245 = vsel %vm162, %v242, -inf
      %246 = vmax.xlane.f32.xlu0 %v245
      %v247 = vpop.xlane.xlu0 %246
      %v248 = vsub.f32 %v242, %v247
      %v249 = vmul.f32 %v248, 1.442695
      %v250 = vpow.pop %v249
      %v251 = vsel %vm162, %v250, 0.0
      %252 = vadd.xlane.f32.xlu0 %v251
      %v253 = vpop.xlane.xlu0 %252
      %v254 = vrcp.pop %v253
      %v255 = vmul.f32 %v250, %v254
      %v256 = vpack.c.bf16 %v255, %v255
      %257 = vrot.lane.b32.xlu0 %v196, 88
      %v258 = vpop.permute.xlu0 %257
      %v260 = vsel %vm162, %v256, 0
      %v263 = vsel %vm202, %v258, 0
      %265 = vmatpush.bf16.msra.mxu0 0
      %266 = vmatpush.bf16.msra.mxu0 0
      %267 = vmatpush.bf16.msra.mxu0 0
      %268 = vmatpush.bf16.msra.mxu0 0
      %269 = vmatpush.bf16.msra.mxu0 0
      %270 = vmatpush.bf16.msra.mxu0 0
      %271 = vmatpush.bf16.msra.mxu0 0
      %272 = vmatpush.bf16.msra.mxu0 %v263
      %273 = vmatmul.bf16.gmra.mxu0 %v260
      %v274 = vpop.f32.mrf.mxu0
      %v275 = vadd.f32 0.0, %v274
      %v276 = vpop.f32.mrf.mxu0
      %277 = vdwg.mxu0
      %278 = vrot.lane.b32.xlu0 %v221, 112
      %v279 = vpop.permute.xlu0 %278
      %280 = vrot.lane.b32.xlu0 %v196, 112
      %v281 = vpop.permute.xlu0 %280
      %v283 = vsel %vm162, %v279, 0
      %v286 = vsel %vm162, %v281, 0
      %288 = vmatpush.bf16.xpose.msra.mxu0 0
      %289 = vmatpush.bf16.xpose.msra.mxu0 0
      %290 = vmatpush.bf16.xpose.msra.mxu0 0
      %291 = vmatpush.bf16.xpose.msra.mxu0 0
      %292 = vmatpush.bf16.xpose.msra.mxu0 0
      %293 = vmatpush.bf16.xpose.msra.mxu0 0
      %294 = vmatpush.bf16.xpose.msra.mxu0 0
      %295 = vmatpush.bf16.xpose.msra.mxu0 %v286
      %296 = vmatmul.bf16.gmra.mxu0 %v283
      %v297 = vpop.f32.mrf.mxu0
      %v298 = vadd.f32 0.0, %v297
      %v299 = vpop.f32.mrf.mxu0
      %300 = vdwg.mxu0
      %v301 = vsel %vm162, %v298, -inf
      %302 = vmax.xlane.f32.xlu0 %v301
      %v303 = vpop.xlane.xlu0 %302
      %v304 = vsub.f32 %v298, %v303
      %v305 = vmul.f32 %v304, 1.442695
      %v306 = vpow.pop %v305
      %v307 = vsel %vm162, %v306, 0.0
      %308 = vadd.xlane.f32.xlu0 %v307
      %v309 = vpop.xlane.xlu0 %308
      %v310 = vrcp.pop %v309
      %v311 = vmul.f32 %v306, %v310
      %v312 = vpack.c.bf16 %v311, %v311
      %313 = vrot.lane.b32.xlu0 %v196, 80
      %v314 = vpop.permute.xlu0 %313
      %v316 = vsel %vm162, %v312, 0
      %v319 = vsel %vm202, %v314, 0
      %321 = vmatpush.bf16.msra.mxu0 0
      %322 = vmatpush.bf16.msra.mxu0 0
      %323 = vmatpush.bf16.msra.mxu0 0
      %324 = vmatpush.bf16.msra.mxu0 0
      %325 = vmatpush.bf16.msra.mxu0 0
      %326 = vmatpush.bf16.msra.mxu0 0
      %327 = vmatpush.bf16.msra.mxu0 0
      %328 = vmatpush.bf16.msra.mxu0 %v319
      %329 = vmatmul.bf16.gmra.mxu0 %v316
      %v330 = vpop.f32.mrf.mxu0
      %v331 = vadd.f32 0.0, %v330
      %v332 = vpop.f32.mrf.mxu0
      %333 = vdwg.mxu0
      %334 = vrot.lane.b32.xlu0 %v221, 104
      %v335 = vpop.permute.xlu0 %334
      %336 = vrot.lane.b32.xlu0 %v196, 104
      %v337 = vpop.permute.xlu0 %336
      %v339 = vsel %vm162, %v335, 0
      %v342 = vsel %vm162, %v337, 0
      %344 = vmatpush.bf16.xpose.msra.mxu0 0
      %345 = vmatpush.bf16.xpose.msra.mxu0 0
      %346 = vmatpush.bf16.xpose.msra.mxu0 0
      %347 = vmatpush.bf16.xpose.msra.mxu0 0
      %348 = vmatpush.bf16.xpose.msra.mxu0 0
      %349 = vmatpush.bf16.xpose.msra.mxu0 0
      %350 = vmatpush.bf16.xpose.msra.mxu0 0
      %351 = vmatpush.bf16.xpose.msra.mxu0 %v342
      %352 = vmatmul.bf16.gmra.mxu0 %v339
      %v353 = vpop.f32.mrf.mxu0
      %v354 = vadd.f32 0.0, %v353
      %v355 = vpop.f32.mrf.mxu0
      %356 = vdwg.mxu0
      %v357 = vsel %vm162, %v354, -inf
      %358 = vmax.xlane.f32.xlu0 %v357
      %v359 = vpop.xlane.xlu0 %358
      %v360 = vsub.f32 %v354, %v359
      %v361 = vmul.f32 %v360, 1.442695
      %v362 = vpow.pop %v361
      %v363 = vsel %vm162, %v362, 0.0
      %364 = vadd.xlane.f32.xlu0 %v363
      %v365 = vpop.xlane.xlu0 %364
      %v366 = vrcp.pop %v365
      %v367 = vmul.f32 %v362, %v366
      %v368 = vpack.c.bf16 %v367, %v367
      %369 = vrot.lane.b32.xlu0 %v196, 72
      %v370 = vpop.permute.xlu0 %369
      %v372 = vsel %vm162, %v368, 0
      %v375 = vsel %vm202, %v370, 0
      %377 = vmatpush.bf16.msra.mxu0 0
      %378 = vmatpush.bf16.msra.mxu0 0
      %379 = vmatpush.bf16.msra.mxu0 0
      %380 = vmatpush.bf16.msra.mxu0 0
      %381 = vmatpush.bf16.msra.mxu0 0
      %382 = vmatpush.bf16.msra.mxu0 0
      %383 = vmatpush.bf16.msra.mxu0 0
      %384 = vmatpush.bf16.msra.mxu0 %v375
      %385 = vmatmul.bf16.gmra.mxu0 %v372
      %v386 = vpop.f32.mrf.mxu0
      %v387 = vadd.f32 0.0, %v386
      %v388 = vpop.f32.mrf.mxu0
      %389 = vdwg.mxu0
      %391 = vrot.lane.b32.xlu0 %v275, 8
      %v392 = vpop.permute.xlu0 %391
      %395 = vrot.lane.b32.xlu0 %v331, 16
      %v396 = vpop.permute.xlu0 %395
      %399 = vrot.lane.b32.xlu0 %v387, 24
      %v400 = vpop.permute.xlu0 %399
      %v402 = vsel %vm162, %v216, %v392
      %vm403 = vcmask 130048
      %v404 = vsel %vm403, %v402, %v396
      %vm405 = vcmask 195584
      %v406 = vsel %vm405, %v404, %v400
      %vm407 = vcmask 261120
      %408 = vst.msk [vmem:[%s155] sm:$0xff] %vm407, %v406
      %p409 = scmp.lt.s32.totalorder %s13, 1
      %s410 = scalar_select %p409, %s13, 1
      %s411 = smul.addr %s410, 8
      %s412 = scalar_lea.vmem %s2, %s411
      // Predicated region
      $region29: #{transformer_forward.26} parent=27 // pred_check
        %p413 = pneg %p83
      $region30: #{transformer_forward.26} parent=27 // pred_check_branch
        %415 = sbr.rel (%p413) target = $region32
      $region31: #{transformer_forward.26} parent=27 // pred_region
        _
      $region32: #{transformer_forward.26} parent=27 // pred_fallthru
        _
    $region28: #{transformer_forward.26} parent=5 // pred_fallthru
      _
    %p416 = scmp.le.s32.totalorder 2, %s8
    // Predicated region
    $region33: #{transformer_forward.26} parent=5 // pred_check
      %p417 = pneg %p416
    $region34: #{transformer_forward.26} parent=5 // pred_check_branch
      %419 = sbr.rel (%p417) target = $region36
    $region35: #{transformer_forward.26} parent=5 // pred_region
      %s420 = ssub.s32 %s8, 2
      // Predicated region
      $region37: #{transformer_forward.26} parent=35 // pred_check
        %p421 = pneg %p89
      $region38: #{transformer_forward.26} parent=35 // pred_check_branch
        %423 = sbr.rel (%p421) target = $region40
      $region39: #{transformer_forward.26} parent=35 // pred_region
        %p424 = scmp.lt.s32.totalorder %s14, 1
        %s425 = scalar_select %p424, %s14, 1
        %s426 = smul.addr %s425, 8
        %s427 = scalar_lea.vmem %s2, %s426
      $region40: #{transformer_forward.26} parent=35 // pred_fallthru
        _
    $region36: #{transformer_forward.26} parent=5 // pred_fallthru
      _
  $region6: #{transformer_forward.26} parent=0 // loop_footer
    %s12 = sadd.s32 1, %s8
  $region7: #{transformer_forward.26} parent=0 // loop_footer_branch
    %7 = sbr.rel target = $region3
  $region8: #{transformer_forward.26} parent=0 // loop_exit
    _

// kernel: transformer_forward.28
$region0: #{transformer_forward.28}
  #allocation0 [shape = 'u32[]', space=smem, size = 0x4, offset = 0x4, fixed_abs, tag = 'smem constant byte address 0x4 - core index']
  #allocation1 [shape = 'u32[72,128]{1,0:T(1,128)}', space=vmem, size = 0x9000, scoped, tag = 'internal scratch']
  #allocation2 [shape = 'f32[16,32]{1,0:T(8,128)}', space=vmem, size = 0x2000, scoped, tag = 'scratch operand']
  %s0 = inlined_call_operand.vmem [shape: f32[16,32], index: 0, kind: input, shape index: {}, may-alias: {0,5}]
  %s1 = inlined_call_operand.vmem [shape: bf16[32,64], index: 1, kind: input, shape index: {}]
  %s2 = inlined_call_operand.vmem [shape: f32[1,64], index: 2, kind: input, shape index: {}]
  %s3 = inlined_call_operand.vmem [shape: bf16[64,32], index: 3, kind: input, shape index: {}]
  %s4 = inlined_call_operand.vmem [shape: f32[1,32], index: 4, kind: input, shape index: {}]
  %s5 = inlined_call_operand.vmem [shape: f32[16,32], index: 5, kind: input, shape index: {}, may-alias: {0,5}]
  %s6 = inlined_call_operand.vmem [shape: f32[1,32], index: 6, kind: input, shape index: {}]
  %s7 = inlined_call_operand.vmem [shape: f32[1,32], index: 7, kind: input, shape index: {}]
  %s8 = inlined_call_operand.vmem [shape: f32[16,32], index: 8, kind: output, shape index: {}]
  %s9 = sld [smem:[#allocation0]]
  $region50: #{transformer_forward.28} parent=0
    _
  %s11 = ssub.s32 1, %s9
  %s12 = scalar_select 0, %s11, %s9
  // Predicated region
  $region2: #{transformer_forward.28} parent=0 // pred_check
    _
  $region3: #{transformer_forward.28} parent=0 // pred_check_branch
    %14 = sbr.rel (0) target = $region5
  $region4: #{transformer_forward.28} parent=0 // pred_region
    _
  $region5: #{transformer_forward.28} parent=0 // pred_fallthru
    _
  // Predicated region
  $region6: #{transformer_forward.28} parent=0 // pred_check
    _
  $region7: #{transformer_forward.28} parent=0 // pred_check_branch
    %16 = sbr.rel (0) target = $region9
  $region8: #{transformer_forward.28} parent=0 // pred_region
    _
  $region9: #{transformer_forward.28} parent=0 // pred_fallthru
    _
  // Predicated region
  $region10: #{transformer_forward.28} parent=0 // pred_check
    _
  $region11: #{transformer_forward.28} parent=0 // pred_check_branch
    %18 = sbr.rel (0) target = $region13
  $region12: #{transformer_forward.28} parent=0 // pred_region
    _
  $region13: #{transformer_forward.28} parent=0 // pred_fallthru
    _
  // Predicated region
  $region14: #{transformer_forward.28} parent=0 // pred_check
    _
  $region15: #{transformer_forward.28} parent=0 // pred_check_branch
    %20 = sbr.rel (0) target = $region17
  $region16: #{transformer_forward.28} parent=0 // pred_region
    _
  $region17: #{transformer_forward.28} parent=0 // pred_fallthru
    _
  // Predicated region
  $region18: #{transformer_forward.28} parent=0 // pred_check
    _
  $region19: #{transformer_forward.28} parent=0 // pred_check_branch
    %22 = sbr.rel (0) target = $region21
  $region20: #{transformer_forward.28} parent=0 // pred_region
    _
  $region21: #{transformer_forward.28} parent=0 // pred_fallthru
    _
  // Predicated region
  $region22: #{transformer_forward.28} parent=0 // pred_check
    _
  $region23: #{transformer_forward.28} parent=0 // pred_check_branch
    %24 = sbr.rel (0) target = $region25
  $region24: #{transformer_forward.28} parent=0 // pred_region
    _
  $region25: #{transformer_forward.28} parent=0 // pred_fallthru
    _
  // Predicated region
  $region26: #{transformer_forward.28} parent=0 // pred_check
    _
  $region27: #{transformer_forward.28} parent=0 // pred_check_branch
    %26 = sbr.rel (0) target = $region29
  $region28: #{transformer_forward.28} parent=0 // pred_region
    _
  $region29: #{transformer_forward.28} parent=0 // pred_fallthru
    _
  // Predicated region
  $region30: #{transformer_forward.28} parent=0 // pred_check
    _
  $region31: #{transformer_forward.28} parent=0 // pred_check_branch
    %28 = sbr.rel (0) target = $region33
  $region32: #{transformer_forward.28} parent=0 // pred_region
    _
  $region33: #{transformer_forward.28} parent=0 // pred_fallthru
    _
  %p30 = scmp.eq.s32.totalorder 0, 0
  // Predicated region
  $region34: #{transformer_forward.28} parent=0 // pred_check
    %p31 = pneg %p30
  $region35: #{transformer_forward.28} parent=0 // pred_check_branch
    %33 = sbr.rel (%p31) target = $region37
  $region36: #{transformer_forward.28} parent=0 // pred_region
    %vm34 = vcmask 261120
    %35 = vst.msk [vmem:[#allocation2] sm:$0xff] %vm34, 0.0
    %36 = vst.msk [vmem:[#allocation2 + $0x8] sm:$0xff] %vm34, 0.0
  $region37: #{transformer_forward.28} parent=0 // pred_fallthru
    _
  %v37 = vld [vmem:[%s0] sm:$0xff]
  %v38 = vld [vmem:[%s0 + $0x8] sm:$0xff]
  %v39 = vpack.c.bf16 %v38, %v37
  %v40 = vld [vmem:[%s1] sm:$0xf]
  %v41 = vld [vmem:[%s1 + $0x4] sm:$0xf]
  %v42 = vld [vmem:[%s1 + $0x8] sm:$0xf]
  %v43 = vld [vmem:[%s1 + $0xc] sm:$0xf]
  %v44 = vld [vmem:[%s2] sm:$0x1]
  %v46 = vperm.slane %v44, 0
  %v52 = vunpack.c.l.b16 %v40
  %v53 = vunpack.c.l.b16 %v41
  %v54 = vunpack.c.l.b16 %v42
  %v55 = vunpack.c.l.b16 %v43
  %v56 = vpack.c.b16 %v53, %v52
  %v57 = vpack.c.b16 %v55, %v54
  %vm60 = vcmask 261120
  %v62 = vsel %vm60, %v39, 0
  %64 = vmatpush.bf16.msra.mxu0 0
  %65 = vmatpush.bf16.msra.mxu0 0
  %66 = vmatpush.bf16.msra.mxu0 0
  %67 = vmatpush.bf16.msra.mxu0 0
  %68 = vmatpush.bf16.msra.mxu0 0
  %69 = vmatpush.bf16.msra.mxu0 0
  %70 = vmatpush.bf16.msra.mxu0 %v57
  %71 = vmatpush.bf16.msra.mxu0 %v56
  %72 = vmatmul.bf16.gmra.mxu0 %v62
  %v73 = vpop.f32.mrf.mxu0
  %v74 = vadd.f32 %v46, %v73
  %v75 = vpop.f32.mrf.mxu0
  %v76 = vadd.f32 %v46, %v75
  %77 = vdwg.mxu0
  %v78 = vmax.f32 %v74, 0.0
  %v79 = vmax.f32 %v76, 0.0
  %v80 = vpack.c.bf16 %v79, %v78
  %v81 = vld [vmem:[#allocation2] sm:$0xff]
  %v82 = vld [vmem:[#allocation2 + $0x8] sm:$0xff]
  %v83 = vld [vmem:[%s3] sm:$0xf]
  %v84 = vld [vmem:[%s3 + $0x4] sm:$0xf]
  %v85 = vld [vmem:[%s3 + $0x8] sm:$0xf]
  %v86 = vld [vmem:[%s3 + $0xc] sm:$0xf]
  %v87 = vld [vmem:[%s3 + $0x10] sm:$0xf]
  %v88 = vld [vmem:[%s3 + $0x14] sm:$0xf]
  %v89 = vld [vmem:[%s3 + $0x18] sm:$0xf]
  %v90 = vld [vmem:[%s3 + $0x1c] sm:$0xf]
  %v99 = vunpack.c.l.b16 %v83
  %v100 = vunpack.c.l.b16 %v84
  %v101 = vunpack.c.l.b16 %v85
  %v102 = vunpack.c.l.b16 %v86
  %v103 = vunpack.c.l.b16 %v87
  %v104 = vunpack.c.l.b16 %v88
  %v105 = vunpack.c.l.b16 %v89
  %v106 = vunpack.c.l.b16 %v90
  %v107 = vpack.c.b16 %v100, %v99
  %v108 = vpack.c.b16 %v102, %v101
  %v109 = vpack.c.b16 %v104, %v103
  %v110 = vpack.c.b16 %v106, %v105
  %vm115 = vcmask 523264
  %v117 = vsel %vm115, %v80, 0
  %119 = vmatpush.bf16.msra.mxu0 0
  %120 = vmatpush.bf16.msra.mxu0 0
  %121 = vmatpush.bf16.msra.mxu0 0
  %122 = vmatpush.bf16.msra.mxu0 0
  %123 = vmatpush.bf16.msra.mxu0 %v110
  %124 = vmatpush.bf16.msra.mxu0 %v109
  %125 = vmatpush.bf16.msra.mxu0 %v108
  %126 = vmatpush.bf16.msra.mxu0 %v107
  %127 = vmatmul.bf16.gmra.mxu0 %v117
  %v128 = vpop.f32.mrf.mxu0
  %v129 = vadd.f32 0.0, %v128
  %v130 = vpop.f32.mrf.mxu0
  %v131 = vadd.f32 0.0, %v130
  %132 = vdwg.mxu0
  %v133 = vadd.f32 %v81, %v129
  %v134 = vadd.f32 %v82, %v131
  %135 = vst.msk [vmem:[#allocation2] sm:$0xff] %vm60, %v133
  %136 = vst.msk [vmem:[#allocation2 + $0x8] sm:$0xff] %vm60, %v134
  // Predicated region
  $region38: #{transformer_forward.28} parent=0 // pred_check
    %p137 = pneg %p30
  $region39: #{transformer_forward.28} parent=0 // pred_check_branch
    %139 = sbr.rel (%p137) target = $region41
  $region40: #{transformer_forward.28} parent=0 // pred_region
    %v140 = vld [vmem:[#allocation2] sm:$0xff]
    %v141 = vld [vmem:[#allocation2 + $0x8] sm:$0xff]
    %v142 = vld [vmem:[%s4] sm:$0x1]
    %v144 = vperm.slane %v142, 0
    %v146 = vadd.f32 %v140, %v144
    %v147 = vadd.f32 %v141, %v144
    %v148 = vld [vmem:[%s5] sm:$0xff]
    %v149 = vld [vmem:[%s5 + $0x8] sm:$0xff]
    %v150 = vadd.f32 %v146, %v148
    %v151 = vadd.f32 %v147, %v149
    %v152 = vsel %vm60, %v150, 0.0
    %153 = vadd.xlane.f32.xlu0 %v152
    %v154 = vpop.xlane.xlu0 %153
    %v155 = vsel %vm60, %v151, 0.0
    %156 = vadd.xlane.f32.xlu0 %v155
    %v157 = vpop.xlane.xlu0 %156
    %v158 = vrcp.pop 32.0
    %v159 = vmul.f32 32.0, %v158
    %v160 = vsub.f32 1.0, %v159
    %v161 = vmul.f32 %v158, %v160
    %v162 = vadd.f32 %v158, %v161
    %vm163 = vweird.f32 %v158
    %v164 = vsel %vm163, %v158, %v162
    %v165 = vmul.f32 %v154, %v164
    %v166 = vmul.f32 %v157, %v164
    %v167 = vsub.f32 %v150, %v165
    %v168 = vsub.f32 %v151, %v166
    %v169 = vmul.f32 %v167, %v167
    %v170 = vmul.f32 %v168, %v168
    %v171 = vsel %vm60, %v169, 0.0
    %172 = vadd.xlane.f32.xlu0 %v171
    %v173 = vpop.xlane.xlu0 %172
    %v174 = vsel %vm60, %v170, 0.0
    %175 = vadd.xlane.f32.xlu0 %v174
    %v176 = vpop.xlane.xlu0 %175
    %v177 = vmul.f32 %v173, %v164
    %v178 = vmul.f32 %v176, %v164
    %v179 = vadd.f32 %v177, 1e-05
    %v180 = vadd.f32 %v178, 1e-05
    %v181 = vrsqrt.pop %v179
    %v182 = vmul.f32 %v181, %v179
    %v183 = vmul.f32 %v182, %v181
    %v184 = vmul.f32 0.5, %v183
    %v185 = vsub.f32 1.5, %v184
    %v186 = vmul.f32 %v181, %v185
    %vm187 = vweird.f32 %v179
    %vm188 = vweird.f32 %v181
    %vm189 = vmor %vm187, %vm188
    %v190 = vsel %vm189, %v181, %v186
    %v191 = vrsqrt.pop %v180
    %v192 = vmul.f32 %v191, %v180
    %v193 = vmul.f32 %v192, %v191
    %v194 = vmul.f32 0.5, %v193
    %v195 = vsub.f32 1.5, %v194
    %v196 = vmul.f32 %v191, %v195
    %vm197 = vweird.f32 %v180
    %vm198 = vweird.f32 %v191
    %vm199 = vmor %vm197, %vm198
    %v200 = vsel %vm199, %v191, %v196
    %v201 = vmul.f32 %v167, %v190
    %v202 = vmul.f32 %v168, %v200
    %v203 = vld [vmem:[%s6] sm:$0x1]
    %v205 = vperm.slane %v203, 0
    %v207 = vmul.f32 %v201, %v205
    %v208 = vmul.f32 %v202, %v205
    %v209 = vld [vmem:[%s7] sm:$0x1]
    %v211 = vperm.slane %v209, 0
    %v213 = vadd.f32 %v207, %v211
    %v214 = vadd.f32 %v208, %v211
    %215 = vst.msk [vmem:[%s8] sm:$0xff] %vm60, %v213
    %216 = vst.msk [vmem:[%s8 + $0x8] sm:$0xff] %vm60, %v214
  $region41: #{transformer_forward.28} parent=0 // pred_fallthru
    _
  // Predicated region
  $region42: #{transformer_forward.28} parent=0 // pred_check
    _
  $region43: #{transformer_forward.28} parent=0 // pred_check_branch
    %218 = sbr.rel (0) target = $region45
  $region44: #{transformer_forward.28} parent=0 // pred_region
    _
  $region45: #{transformer_forward.28} parent=0 // pred_fallthru
    _
  // Predicated region
  $region46: #{transformer_forward.28} parent=0 // pred_check
    _
  $region47: #{transformer_forward.28} parent=0 // pred_check_branch
    %220 = sbr.rel (0) target = $region49
  $region48: #{transformer_forward.28} parent=0 // pred_region
    _
  $region49: #{transformer_forward.28} parent=0 // pred_fallthru
    _

// kernel: transformer_forward.37
$region0: #{transformer_forward.37}
  #allocation0 [shape = 'u32[]', space=smem, size = 0x4, offset = 0x4, fixed_abs, tag = 'smem constant byte address 0x4 - core index']
  #allocation1 [shape = 'u32[72,128]{1,0:T(1,128)}', space=vmem, size = 0x9000, scoped, tag = 'internal scratch']
  %s0 = inlined_call_operand.vmem [shape: f32[16,32], index: 0, kind: input, shape index: {}]
  %s1 = inlined_call_operand.vmem [shape: bf16[32,32], index: 1, kind: input, shape index: {}]
  %s2 = inlined_call_operand.vmem [shape: f32[1,32], index: 2, kind: input, shape index: {}]
  %s3 = inlined_call_operand.vmem [shape: f32[16,32], index: 3, kind: output, shape index: {}]
  %s4 = sld [smem:[#allocation0]]
  $region22: #{transformer_forward.37} parent=0
    _
  %s6 = ssub.s32 1, %s4
  %s7 = scalar_select 0, %s6, %s4
  // Predicated region
  $region2: #{transformer_forward.37} parent=0 // pred_check
    _
  $region3: #{transformer_forward.37} parent=0 // pred_check_branch
    %9 = sbr.rel (0) target = $region5
  $region4: #{transformer_forward.37} parent=0 // pred_region
    _
  $region5: #{transformer_forward.37} parent=0 // pred_fallthru
    _
  // Predicated region
  $region6: #{transformer_forward.37} parent=0 // pred_check
    _
  $region7: #{transformer_forward.37} parent=0 // pred_check_branch
    %11 = sbr.rel (0) target = $region9
  $region8: #{transformer_forward.37} parent=0 // pred_region
    _
  $region9: #{transformer_forward.37} parent=0 // pred_fallthru
    _
  // Predicated region
  $region10: #{transformer_forward.37} parent=0 // pred_check
    _
  $region11: #{transformer_forward.37} parent=0 // pred_check_branch
    %13 = sbr.rel (0) target = $region13
  $region12: #{transformer_forward.37} parent=0 // pred_region
    _
  $region13: #{transformer_forward.37} parent=0 // pred_fallthru
    _
  %v15 = vld [vmem:[%s0] sm:$0xff]
  %v16 = vld [vmem:[%s0 + $0x8] sm:$0xff]
  %v17 = vpack.c.bf16 %v16, %v15
  %v18 = vld [vmem:[%s1] sm:$0xf]
  %v19 = vld [vmem:[%s1 + $0x4] sm:$0xf]
  %v20 = vld [vmem:[%s1 + $0x8] sm:$0xf]
  %v21 = vld [vmem:[%s1 + $0xc] sm:$0xf]
  %v22 = vld [vmem:[%s2] sm:$0x1]
  %v24 = vperm.slane %v22, 0
  %v30 = vunpack.c.l.b16 %v18
  %v31 = vunpack.c.l.b16 %v19
  %v32 = vunpack.c.l.b16 %v20
  %v33 = vunpack.c.l.b16 %v21
  %v34 = vpack.c.b16 %v31, %v30
  %v35 = vpack.c.b16 %v33, %v32
  %vm38 = vcmask 261120
  %v40 = vsel %vm38, %v17, 0
  %42 = vmatpush.bf16.msra.mxu0 0
  %43 = vmatpush.bf16.msra.mxu0 0
  %44 = vmatpush.bf16.msra.mxu0 0
  %45 = vmatpush.bf16.msra.mxu0 0
  %46 = vmatpush.bf16.msra.mxu0 0
  %47 = vmatpush.bf16.msra.mxu0 0
  %48 = vmatpush.bf16.msra.mxu0 %v35
  %49 = vmatpush.bf16.msra.mxu0 %v34
  %50 = vmatmul.bf16.gmra.mxu0 %v40
  %v51 = vpop.f32.mrf.mxu0
  %v52 = vadd.f32 %v24, %v51
  %v53 = vpop.f32.mrf.mxu0
  %v54 = vadd.f32 %v24, %v53
  %55 = vdwg.mxu0
  %56 = vst.msk [vmem:[%s3] sm:$0xff] %vm38, %v52
  %57 = vst.msk [vmem:[%s3 + $0x8] sm:$0xff] %vm38, %v54
  // Predicated region
  $region14: #{transformer_forward.37} parent=0 // pred_check
    _
  $region15: #{transformer_forward.37} parent=0 // pred_check_branch
    %59 = sbr.rel (0) target = $region17
  $region16: #{transformer_forward.37} parent=0 // pred_region
    _
  $region17: #{transformer_forward.37} parent=0 // pred_fallthru
    _
  // Predicated region
  $region18: #{transformer_forward.37} parent=0 // pred_check
    _
  $region19: #{transformer_forward.37} parent=0 // pred_check_branch
    %61 = sbr.rel (0) target = $region21
  $region20: #{transformer_forward.37} parent=0 // pred_region
    _
  $region21: #{transformer_forward.37} parent=0 // pred_fallthru
    _

// kernel: transformer_forward.33
$region0: #{transformer_forward.33}
  #allocation0 [shape = 'u32[]', space=smem, size = 0x4, offset = 0x4, fixed_abs, tag = 'smem constant byte address 0x4 - core index']
  #allocation1 [shape = 'u32[72,128]{1,0:T(1,128)}', space=vmem, size = 0x9000, scoped, tag = 'internal scratch']
  %s0 = inlined_call_operand.vmem [shape: f32[16,32], index: 0, kind: input, shape index: {}]
  %s1 = inlined_call_operand.vmem [shape: bf16[32,64], index: 1, kind: input, shape index: {}]
  %s2 = inlined_call_operand.vmem [shape: f32[1,64], index: 2, kind: input, shape index: {}]
  %s3 = inlined_call_operand.vmem [shape: f32[16,64], index: 3, kind: output, shape index: {}]
  %s4 = sld [smem:[#allocation0]]
  $region22: #{transformer_forward.33} parent=0
    _
  %s6 = ssub.s32 1, %s4
  %s7 = scalar_select 0, %s6, %s4
  // Predicated region
  $region2: #{transformer_forward.33} parent=0 // pred_check
    _
  $region3: #{transformer_forward.33} parent=0 // pred_check_branch
    %9 = sbr.rel (0) target = $region5
  $region4: #{transformer_forward.33} parent=0 // pred_region
    _
  $region5: #{transformer_forward.33} parent=0 // pred_fallthru
    _
  // Predicated region
  $region6: #{transformer_forward.33} parent=0 // pred_check
    _
  $region7: #{transformer_forward.33} parent=0 // pred_check_branch
    %11 = sbr.rel (0) target = $region9
  $region8: #{transformer_forward.33} parent=0 // pred_region
    _
  $region9: #{transformer_forward.33} parent=0 // pred_fallthru
    _
  // Predicated region
  $region10: #{transformer_forward.33} parent=0 // pred_check
    _
  $region11: #{transformer_forward.33} parent=0 // pred_check_branch
    %13 = sbr.rel (0) target = $region13
  $region12: #{transformer_forward.33} parent=0 // pred_region
    _
  $region13: #{transformer_forward.33} parent=0 // pred_fallthru
    _
  %v15 = vld [vmem:[%s0] sm:$0xff]
  %v16 = vld [vmem:[%s0 + $0x8] sm:$0xff]
  %v17 = vpack.c.bf16 %v16, %v15
  %v18 = vld [vmem:[%s1] sm:$0xf]
  %v19 = vld [vmem:[%s1 + $0x4] sm:$0xf]
  %v20 = vld [vmem:[%s1 + $0x8] sm:$0xf]
  %v21 = vld [vmem:[%s1 + $0xc] sm:$0xf]
  %v22 = vld [vmem:[%s2] sm:$0x1]
  %v24 = vperm.slane %v22, 0
  %v30 = vunpack.c.l.b16 %v18
  %v31 = vunpack.c.l.b16 %v19
  %v32 = vunpack.c.l.b16 %v20
  %v33 = vunpack.c.l.b16 %v21
  %v34 = vpack.c.b16 %v31, %v30
  %v35 = vpack.c.b16 %v33, %v32
  %vm38 = vcmask 261120
  %v40 = vsel %vm38, %v17, 0
  %42 = vmatpush.bf16.msra.mxu0 0
  %43 = vmatpush.bf16.msra.mxu0 0
  %44 = vmatpush.bf16.msra.mxu0 0
  %45 = vmatpush.bf16.msra.mxu0 0
  %46 = vmatpush.bf16.msra.mxu0 0
  %47 = vmatpush.bf16.msra.mxu0 0
  %48 = vmatpush.bf16.msra.mxu0 %v35
  %49 = vmatpush.bf16.msra.mxu0 %v34
  %50 = vmatmul.bf16.gmra.mxu0 %v40
  %v51 = vpop.f32.mrf.mxu0
  %v52 = vadd.f32 %v24, %v51
  %v53 = vpop.f32.mrf.mxu0
  %v54 = vadd.f32 %v24, %v53
  %55 = vdwg.mxu0
  %vm56 = vcmask 523264
  %57 = vst.msk [vmem:[%s3] sm:$0xff] %vm56, %v52
  %58 = vst.msk [vmem:[%s3 + $0x8] sm:$0xff] %vm56, %v54
  // Predicated region
  $region14: #{transformer_forward.33} parent=0 // pred_check
    _
  $region15: #{transformer_forward.33} parent=0 // pred_check_branch
    %60 = sbr.rel (0) target = $region17
  $region16: #{transformer_forward.33} parent=0 // pred_region
    _
  $region17: #{transformer_forward.33} parent=0 // pred_fallthru
    _
  // Predicated region
  $region18: #{transformer_forward.33} parent=0 // pred_check
    _
  $region19: #{transformer_forward.33} parent=0 // pred_check_branch
    %62 = sbr.rel (0) target = $region21
  $region20: #{transformer_forward.33} parent=0 // pred_region
    _
  $region21: #{transformer_forward.33} parent=0 // pred_fallthru
    _

// kernel: transformer_forward.39
$region0: #{transformer_forward.39}
  #allocation0 [shape = 'u32[]', space=smem, size = 0x4, offset = 0x4, fixed_abs, tag = 'smem constant byte address 0x4 - core index']
  #allocation1 [shape = 'u32[72,128]{1,0:T(1,128)}', space=vmem, size = 0x9000, scoped, tag = 'internal scratch']
  %s0 = inlined_call_operand.vmem [shape: f32[16,32], index: 0, kind: input, shape index: {}]
  %s1 = inlined_call_operand.vmem [shape: bf16[32,32], index: 1, kind: input, shape index: {}]
  %s2 = inlined_call_operand.hbm [shape: f32[1,32], index: 2, kind: input, shape index: {}]
  %s3 = inlined_call_operand.vmem [shape: f32[16,32], index: 3, kind: input, shape index: {}]
  %s4 = inlined_call_operand.hbm [shape: f32[1,32], index: 4, kind: input, shape index: {}]
  %s5 = inlined_call_operand.hbm [shape: f32[1,32], index: 5, kind: input, shape index: {}]
  %s6 = inlined_call_operand.vmem [shape: f32[16,32], index: 6, kind: output, shape index: {}]
  %s7 = sld [smem:[#allocation0]]
  $region46: #{transformer_forward.39} parent=0
    _
  %s9 = ssub.s32 1, %s7
  %s10 = scalar_select 0, %s9, %s7
  $region1: #{transformer_forward.39} parent=0
    #allocation2 [shape = 'u8[512]{0}', space=vmem, size = 0x400, scoped, tag = 'input window, operand 2, single buffered']
    #allocation3 [shape = 's32[1]{0}', space=sflag, size = 0x4, scoped, tag = 'scoped memory for transformer_forward.39']
    #allocation4 [shape = 'u8[512]{0}', space=vmem, size = 0x400, scoped, tag = 'input window, operand 4, single buffered']
    #allocation5 [shape = 's32[1]{0}', space=sflag, size = 0x4, scoped, tag = 'scoped memory for transformer_forward.39']
    #allocation6 [shape = 'u8[512]{0}', space=vmem, size = 0x400, scoped, tag = 'input window, operand 5, single buffered']
    %11 = vsyncpa [#allocation3], 0
    %12 = vsyncpa [#allocation5], 0
    // Predicated region
    $region2: #{transformer_forward.39} parent=1 // pred_check
      _
    $region3: #{transformer_forward.39} parent=1 // pred_check_branch
      %14 = sbr.rel (0) target = $region5
    $region4: #{transformer_forward.39} parent=1 // pred_region
      _
    $region5: #{transformer_forward.39} parent=1 // pred_fallthru
      _
    // Predicated region
    $region6: #{transformer_forward.39} parent=1 // pred_check
      _
    $region7: #{transformer_forward.39} parent=1 // pred_check_branch
      %16 = sbr.rel (0) target = $region9
    $region8: #{transformer_forward.39} parent=1 // pred_region
      _
    $region9: #{transformer_forward.39} parent=1 // pred_fallthru
      _
    // Predicated region
    $region10: #{transformer_forward.39} parent=1 // pred_check
      _
    $region11: #{transformer_forward.39} parent=1 // pred_check_branch
      %18 = sbr.rel (0) target = $region13
    $region12: #{transformer_forward.39} parent=1 // pred_region
      %20 = vsyncadd [#allocation3], 0
      %s22 = sshll.u32 %s2, 4
      %s23 = int_to_ptr.hbm [resolvable:$true] %s22
      %s24 = sshll.u32 [#allocation2], 4
      %s25 = int_to_ptr.vmem [resolvable:$true] %s24
      %27 = dma.hbm_to_vmem [thread:$0]  %s23, 16, %s25, [#allocation3]
    $region13: #{transformer_forward.39} parent=1 // pred_fallthru
      _
    // Predicated region
    $region14: #{transformer_forward.39} parent=1 // pred_check
      _
    $region15: #{transformer_forward.39} parent=1 // pred_check_branch
      %29 = sbr.rel (0) target = $region17
    $region16: #{transformer_forward.39} parent=1 // pred_region
      _
    $region17: #{transformer_forward.39} parent=1 // pred_fallthru
      _
    // Predicated region
    $region18: #{transformer_forward.39} parent=1 // pred_check
      _
    $region19: #{transformer_forward.39} parent=1 // pred_check_branch
      %31 = sbr.rel (0) target = $region21
    $region20: #{transformer_forward.39} parent=1 // pred_region
      %33 = vsyncadd [#allocation5], 0
      %s35 = sshll.u32 %s4, 4
      %s36 = int_to_ptr.hbm [resolvable:$true] %s35
      %s37 = sshll.u32 [#allocation4], 4
      %s38 = int_to_ptr.vmem [resolvable:$true] %s37
      %40 = dma.hbm_to_vmem [thread:$0]  %s36, 16, %s38, [#allocation5]
    $region21: #{transformer_forward.39} parent=1 // pred_fallthru
      _
    // Predicated region
    $region22: #{transformer_forward.39} parent=1 // pred_check
      _
    $region23: #{transformer_forward.39} parent=1 // pred_check_branch
      %42 = sbr.rel (0) target = $region25
    $region24: #{transformer_forward.39} parent=1 // pred_region
      %44 = vsyncadd [#allocation5], 0
      %s46 = sshll.u32 %s5, 4
      %s47 = int_to_ptr.hbm [resolvable:$true] %s46
      %s48 = sshll.u32 [#allocation6], 4
      %s49 = int_to_ptr.vmem [resolvable:$true] %s48
      %51 = dma.hbm_to_vmem [thread:$0]  %s47, 16, %s49, [#allocation5]
    $region25: #{transformer_forward.39} parent=1 // pred_fallthru
      _
    // Predicated region
    $region26: #{transformer_forward.39} parent=1 // pred_check
      _
    $region27: #{transformer_forward.39} parent=1 // pred_check_branch
      %53 = sbr.rel (0) target = $region29
    $region28: #{transformer_forward.39} parent=1 // pred_region
      %55 = dma.done [#allocation3], 16
    $region29: #{transformer_forward.39} parent=1 // pred_fallthru
      _
    // Predicated region
    $region30: #{transformer_forward.39} parent=1 // pred_check
      _
    $region31: #{transformer_forward.39} parent=1 // pred_check_branch
      %57 = sbr.rel (0) target = $region33
    $region32: #{transformer_forward.39} parent=1 // pred_region
      %59 = dma.done [#allocation5], 16
    $region33: #{transformer_forward.39} parent=1 // pred_fallthru
      _
    // Predicated region
    $region34: #{transformer_forward.39} parent=1 // pred_check
      _
    $region35: #{transformer_forward.39} parent=1 // pred_check_branch
      %61 = sbr.rel (0) target = $region37
    $region36: #{transformer_forward.39} parent=1 // pred_region
      %63 = dma.done [#allocation5], 16
    $region37: #{transformer_forward.39} parent=1 // pred_fallthru
      _
    %v65 = vld [vmem:[%s0] sm:$0xff]
    %v66 = vld [vmem:[%s0 + $0x8] sm:$0xff]
    %v67 = vpack.c.bf16 %v66, %v65
    %v68 = vld [vmem:[%s1] sm:$0xf]
    %v69 = vld [vmem:[%s1 + $0x4] sm:$0xf]
    %v70 = vld [vmem:[%s1 + $0x8] sm:$0xf]
    %v71 = vld [vmem:[%s1 + $0xc] sm:$0xf]
    %v72 = vld [vmem:[#allocation2] sm:$0x1]
    %v74 = vperm.slane %v72, 0
    %v80 = vunpack.c.l.b16 %v68
    %v81 = vunpack.c.l.b16 %v69
    %v82 = vunpack.c.l.b16 %v70
    %v83 = vunpack.c.l.b16 %v71
    %v84 = vpack.c.b16 %v81, %v80
    %v85 = vpack.c.b16 %v83, %v82
    %vm88 = vcmask 261120
    %v90 = vsel %vm88, %v67, 0
    %92 = vmatpush.bf16.msra.mxu0 0
    %93 = vmatpush.bf16.msra.mxu0 0
    %94 = vmatpush.bf16.msra.mxu0 0
    %95 = vmatpush.bf16.msra.mxu0 0
    %96 = vmatpush.bf16.msra.mxu0 0
    %97 = vmatpush.bf16.msra.mxu0 0
    %98 = vmatpush.bf16.msra.mxu0 %v85
    %99 = vmatpush.bf16.msra.mxu0 %v84
    %100 = vmatmul.bf16.gmra.mxu0 %v90
    %v101 = vpop.f32.mrf.mxu0
    %v102 = vadd.f32 %v74, %v101
    %v103 = vpop.f32.mrf.mxu0
    %v104 = vadd.f32 %v74, %v103
    %105 = vdwg.mxu0
    %v106 = vld [vmem:[%s3] sm:$0xff]
    %v107 = vld [vmem:[%s3 + $0x8] sm:$0xff]
    %v108 = vadd.f32 %v102, %v106
    %v109 = vadd.f32 %v104, %v107
    %v110 = vsel %vm88, %v108, 0.0
    %111 = vadd.xlane.f32.xlu0 %v110
    %v112 = vpop.xlane.xlu0 %111
    %v113 = vsel %vm88, %v109, 0.0
    %114 = vadd.xlane.f32.xlu0 %v113
    %v115 = vpop.xlane.xlu0 %114
    %v116 = vrcp.pop 32.0
    %v117 = vmul.f32 32.0, %v116
    %v118 = vsub.f32 1.0, %v117
    %v119 = vmul.f32 %v116, %v118
    %v120 = vadd.f32 %v116, %v119
    %vm121 = vweird.f32 %v116
    %v122 = vsel %vm121, %v116, %v120
    %v123 = vmul.f32 %v112, %v122
    %v124 = vmul.f32 %v115, %v122
    %v125 = vsub.f32 %v108, %v123
    %v126 = vsub.f32 %v109, %v124
    %v127 = vmul.f32 %v125, %v125
    %v128 = vmul.f32 %v126, %v126
    %v129 = vsel %vm88, %v127, 0.0
    %130 = vadd.xlane.f32.xlu0 %v129
    %v131 = vpop.xlane.xlu0 %130
    %v132 = vsel %vm88, %v128, 0.0
    %133 = vadd.xlane.f32.xlu0 %v132
    %v134 = vpop.xlane.xlu0 %133
    %v135 = vmul.f32 %v131, %v122
    %v136 = vmul.f32 %v134, %v122
    %v137 = vadd.f32 %v135, 1e-05
    %v138 = vadd.f32 %v136, 1e-05
    %v139 = vrsqrt.pop %v137
    %v140 = vmul.f32 %v139, %v137
    %v141 = vmul.f32 %v140, %v139
    %v142 = vmul.f32 0.5, %v141
    %v143 = vsub.f32 1.5, %v142
    %v144 = vmul.f32 %v139, %v143
    %vm145 = vweird.f32 %v137
    %vm146 = vweird.f32 %v139
    %vm147 = vmor %vm145, %vm146
    %v148 = vsel %vm147, %v139, %v144
    %v149 = vrsqrt.pop %v138
    %v150 = vmul.f32 %v149, %v138
    %v151 = vmul.f32 %v150, %v149
    %v152 = vmul.f32 0.5, %v151
    %v153 = vsub.f32 1.5, %v152
    %v154 = vmul.f32 %v149, %v153
    %vm155 = vweird.f32 %v138
    %vm156 = vweird.f32 %v149
    %vm157 = vmor %vm155, %vm156
    %v158 = vsel %vm157, %v149, %v154
    %v159 = vmul.f32 %v125, %v148
    %v160 = vmul.f32 %v126, %v158
    %v161 = vld [vmem:[#allocation4] sm:$0x1]
    %v163 = vperm.slane %v161, 0
    %v165 = vmul.f32 %v159, %v163
    %v166 = vmul.f32 %v160, %v163
    %v167 = vld [vmem:[#allocation6] sm:$0x1]
    %v169 = vperm.slane %v167, 0
    %v171 = vadd.f32 %v165, %v169
    %v172 = vadd.f32 %v166, %v169
    %173 = vst.msk [vmem:[%s6] sm:$0xff] %vm88, %v171
    %174 = vst.msk [vmem:[%s6 + $0x8] sm:$0xff] %vm88, %v172
    // Predicated region
    $region38: #{transformer_forward.39} parent=1 // pred_check
      _
    $region39: #{transformer_forward.39} parent=1 // pred_check_branch
      %176 = sbr.rel (0) target = $region41
    $region40: #{transformer_forward.39} parent=1 // pred_region
      _
    $region41: #{transformer_forward.39} parent=1 // pred_fallthru
      _
    // Predicated region
    $region42: #{transformer_forward.39} parent=1 // pred_check
      _
    $region43: #{transformer_forward.39} parent=1 // pred_check_branch
      %178 = sbr.rel (0) target = $region45
    $region44: #{transformer_forward.39} parent=1 // pred_region
      _
    $region45: #{transformer_forward.39} parent=1 // pred_fallthru
      _
    %179 = vsyncpa [#allocation3], 1
    %180 = vsyncpa [#allocation5], 1

// kernel: transformer_forward.35
$region0: #{transformer_forward.35}
  #allocation0 [shape = 'u32[]', space=smem, size = 0x4, offset = 0x4, fixed_abs, tag = 'smem constant byte address 0x4 - core index']
  #allocation1 [shape = 'u32[72,128]{1,0:T(1,128)}', space=vmem, size = 0x9000, scoped, tag = 'internal scratch']
  %s0 = inlined_call_operand.vmem [shape: f32[2,8,32], index: 0, kind: input, shape index: {}]
  %s1 = inlined_call_operand.vmem [shape: f32[2,8,64], index: 1, kind: input, shape index: {}]
  %s2 = inlined_call_operand.vmem [shape: f32[2,8,32], index: 2, kind: output, shape index: {}]
  %s3 = sld [smem:[#allocation0]]
  $region41: #{transformer_forward.35} parent=0
    _
  %s5 = ssub.s32 1, %s3
  %s6 = scalar_select 0, %s5, %s3
  loop: start=0, step=1, limit=4
  $region2: #{transformer_forward.35} parent=0 // loop_pre_header
    _
  $region3: #{transformer_forward.35} parent=0 // loop_header
    %s8 = sphi 0, %s12
    %p9 = scmp.ge.s32.totalorder %s8, 4
    %s18 = sphi 0, %s20
    %s21 = sphi 0, %s18
    %s22 = sphi 0, %s21
    %s38 = sphi 0, %s22
    %s44 = sphi 0, %s46
    %s47 = sphi 0, %s44
    %s48 = sphi 0, %s47
    %s64 = sphi 0, %s48
    %s70 = sphi 0, %s72
    %s73 = sphi 0, %s70
    %s74 = sphi 0, %s73
    %s90 = sphi 0, %s74
  $region4: #{transformer_forward.35} parent=0 // loop_header_branch
    %11 = sbr.rel (%p9) target = $region8
  $region5: #{transformer_forward.35} parent=0 // loop_body
    %s13 = ssub.s32 %s8, 1
    %s14 = ssub.s32 %s8, 2
    %s15 = sadd.s32 %s8, 1
    %s16 = ssub.s32 %s8, %s15
    %p17 = scmp.eq.s32.totalorder %s16, 0
    %s19 = sadd.s32 %s18, 1
    %s20 = scalar_select %p17, %s18, %s19
    %p23 = pneg %p17
    %p24 = scmp.eq.s32.totalorder %s8, 1
    %p25 = por %p23, %p24
    %p26 = scmp.ne.s32.totalorder %s18, %s21
    %p27 = scmp.eq.s32.totalorder %s8, 0
    %p28 = por %p26, %p27
    %p29 = scmp.ne.s32.totalorder %s18, %s21
    %p30 = scmp.eq.s32.totalorder %s13, 1
    %p31 = por %p29, %p30
    %p32 = scmp.ne.s32.totalorder %s21, %s22
    %p33 = scmp.eq.s32.totalorder %s13, 0
    %p34 = por %p32, %p33
    %p35 = scmp.ne.s32.totalorder %s21, %s22
    %p36 = scmp.eq.s32.totalorder %s14, 1
    %p37 = por %p35, %p36
    %p39 = scmp.ne.s32.totalorder %s22, %s38
    %p40 = scmp.eq.s32.totalorder %s14, 0
    %p41 = por %p39, %p40
    %s42 = ssub.s32 %s8, %s15
    %p43 = scmp.eq.s32.totalorder %s42, 0
    %s45 = sadd.s32 %s44, 1
    %s46 = scalar_select %p43, %s44, %s45
    %p49 = pneg %p43
    %p50 = scmp.eq.s32.totalorder %s8, 1
    %p51 = por %p49, %p50
    %p52 = scmp.ne.s32.totalorder %s44, %s47
    %p53 = scmp.eq.s32.totalorder %s8, 0
    %p54 = por %p52, %p53
    %p55 = scmp.ne.s32.totalorder %s44, %s47
    %p56 = scmp.eq.s32.totalorder %s13, 1
    %p57 = por %p55, %p56
    %p58 = scmp.ne.s32.totalorder %s47, %s48
    %p59 = scmp.eq.s32.totalorder %s13, 0
    %p60 = por %p58, %p59
    %p61 = scmp.ne.s32.totalorder %s47, %s48
    %p62 = scmp.eq.s32.totalorder %s14, 1
    %p63 = por %p61, %p62
    %p65 = scmp.ne.s32.totalorder %s48, %s64
    %p66 = scmp.eq.s32.totalorder %s14, 0
    %p67 = por %p65, %p66
    %s68 = ssub.s32 %s8, %s15
    %p69 = scmp.eq.s32.totalorder %s68, 0
    %s71 = sadd.s32 %s70, 1
    %s72 = scalar_select %p69, %s70, %s71
    %p75 = pneg %p69
    %p76 = scmp.eq.s32.totalorder %s8, 1
    %p77 = por %p75, %p76
    %p78 = scmp.ne.s32.totalorder %s70, %s73
    %p79 = scmp.eq.s32.totalorder %s8, 0
    %p80 = por %p78, %p79
    %p81 = scmp.ne.s32.totalorder %s70, %s73
    %p82 = scmp.eq.s32.totalorder %s13, 1
    %p83 = por %p81, %p82
    %p84 = scmp.ne.s32.totalorder %s73, %s74
    %p85 = scmp.eq.s32.totalorder %s13, 0
    %p86 = por %p84, %p85
    %p87 = scmp.ne.s32.totalorder %s73, %s74
    %p88 = scmp.eq.s32.totalorder %s14, 1
    %p89 = por %p87, %p88
    %p91 = scmp.ne.s32.totalorder %s74, %s90
    %p92 = scmp.eq.s32.totalorder %s14, 0
    %p93 = por %p91, %p92
    %p94 = scmp.le.s32.totalorder 1, %s8
    %p95 = scmp.lt.s32.totalorder %s8, 3
    %p96 = pnand %p94, %p95
    %p97 = pneg %p96
    // Predicated region
    $region9: #{transformer_forward.35} parent=5 // pred_check
      _
    $region10: #{transformer_forward.35} parent=5 // pred_check_branch
      %99 = sbr.rel (%p96) target = $region12
    $region11: #{transformer_forward.35} parent=5 // pred_region
      %s100 = ssub.s32 %s8, 1
    $region12: #{transformer_forward.35} parent=5 // pred_fallthru
      _
    %p101 = scmp.lt.s32.totalorder %s8, 2
    // Predicated region
    $region13: #{transformer_forward.35} parent=5 // pred_check
      %p102 = pneg %p101
    $region14: #{transformer_forward.35} parent=5 // pred_check_branch
      %104 = sbr.rel (%p102) target = $region16
    $region15: #{transformer_forward.35} parent=5 // pred_region
      // Predicated region
      $region17: #{transformer_forward.35} parent=15 // pred_check
        %p105 = pneg %p28
      $region18: #{transformer_forward.35} parent=15 // pred_check_branch
        %107 = sbr.rel (%p105) target = $region20
      $region19: #{transformer_forward.35} parent=15 // pred_region
        %p108 = scmp.lt.s32.totalorder %s8, 1
        %s109 = scalar_select %p108, %s8, 1
        %s110 = smul.addr %s109, 8
        %s111 = scalar_lea.vmem %s0, %s110
      $region20: #{transformer_forward.35} parent=15 // pred_fallthru
        _
      // Predicated region
      $region21: #{transformer_forward.35} parent=15 // pred_check
        %p112 = pneg %p54
      $region22: #{transformer_forward.35} parent=15 // pred_check_branch
        %114 = sbr.rel (%p112) target = $region24
      $region23: #{transformer_forward.35} parent=15 // pred_region
        %p115 = scmp.lt.s32.totalorder %s8, 1
        %s116 = scalar_select %p115, %s8, 1
        %s117 = smul.addr %s116, 8
        %s118 = scalar_lea.vmem %s1, %s117
      $region24: #{transformer_forward.35} parent=15 // pred_fallthru
        _
    $region16: #{transformer_forward.35} parent=5 // pred_fallthru
      _
    %p119 = scmp.le.s32.totalorder 1, %s8
    %p120 = scmp.lt.s32.totalorder %s8, 3
    %p121 = pnand %p119, %p120
    %p122 = pneg %p121
    // Predicated region
    $region25: #{transformer_forward.35} parent=5 // pred_check
      _
    $region26: #{transformer_forward.35} parent=5 // pred_check_branch
      %124 = sbr.rel (%p121) target = $region28
    $region27: #{transformer_forward.35} parent=5 // pred_region
      %s125 = ssub.s32 %s8, 1
      %p126 = scmp.lt.s32.totalorder %s13, 1
      %s127 = scalar_select %p126, %s13, 1
      %s128 = smul.addr %s127, 8
      %s129 = scalar_lea.vmem %s0, %s128
      %p130 = pneg %p34
      %p131 = pneg %p31
      %p132 = scmp.lt.s32.totalorder %s13, 1
      %s133 = scalar_select %p132, %s13, 1
      %s134 = smul.addr %s133, 8
      %s135 = scalar_lea.vmem %s1, %s134
      %p136 = pneg %p60
      %p137 = pneg %p57
      %p138 = pneg %p86
      %p139 = pneg %p83
      %p140 = scmp.lt.s32.totalorder %s13, 1
      %s141 = scalar_select %p140, %s13, 1
      %s142 = smul.addr %s141, 8
      %s143 = scalar_lea.vmem %s2, %s142
      %p144 = scmp.lt.s32.totalorder %s13, 1
      %s145 = scalar_select %p144, %s13, 1
      %s146 = smul.addr %s145, 8
      %s147 = scalar_lea.vmem %s0, %s146
      %p148 = scmp.lt.s32.totalorder %s13, 1
      %s149 = scalar_select %p148, %s13, 1
      %s150 = smul.addr %s149, 8
      %s151 = scalar_lea.vmem %s1, %s150
      %p152 = scmp.lt.s32.totalorder %s13, 1
      %s153 = scalar_select %p152, %s13, 1
      %s154 = smul.addr %s153, 8
      %s155 = scalar_lea.vmem %s2, %s154
      %v157 = vld [vmem:[%s147] sm:$0xff]
      %v158 = vmul.f32 %v157, 0.35355338
      %v159 = vpack.c.bf16 %v158, %v158
      %v160 = vld [vmem:[%s151] sm:$0xff]
      %v161 = vpack.c.bf16 %v160, %v160
      %v162 = vlaneseq
      %v163 = vshrl.u32 %v162, 7
      %v164 = vlaneseq
      %v165 = vand.u32 %v164, 127
      %vm166 = vcmp.gt.s32.totalorder %v165, %v163
      %v167 = vsel %vm166, -1e+30, 0.0
      %vm168 = vcmask 64512
      %v170 = vsel %vm168, %v159, 0
      %v173 = vsel %vm168, %v161, 0
      %175 = vmatpush.bf16.xpose.msra.mxu0 0
      %176 = vmatpush.bf16.xpose.msra.mxu0 0
      %177 = vmatpush.bf16.xpose.msra.mxu0 0
      %178 = vmatpush.bf16.xpose.msra.mxu0 0
      %179 = vmatpush.bf16.xpose.msra.mxu0 0
      %180 = vmatpush.bf16.xpose.msra.mxu0 0
      %181 = vmatpush.bf16.xpose.msra.mxu0 0
      %182 = vmatpush.bf16.xpose.msra.mxu0 %v173
      %183 = vmatmul.bf16.gmra.mxu0 %v170
      %v184 = vpop.f32.mrf.mxu0
      %v185 = vadd.f32 %v167, %v184
      %v186 = vpop.f32.mrf.mxu0
      %187 = vdwg.mxu0
      %v188 = vsel %vm168, %v185, -inf
      %189 = vmax.xlane.f32.xlu0 %v188
      %v190 = vpop.xlane.xlu0 %189
      %v191 = vsub.f32 %v185, %v190
      %v192 = vmul.f32 %v191, 1.442695
      %v193 = vpow.pop %v192
      %v194 = vsel %vm168, %v193, 0.0
      %195 = vadd.xlane.f32.xlu0 %v194
      %v196 = vpop.xlane.xlu0 %195
      %v197 = vrcp.pop %v196
      %v198 = vmul.f32 %v193, %v197
      %v199 = vpack.c.bf16 %v198, %v198
      %v201 = vunpack.c.l.b16 %v161
      %v202 = vpack.c.b16 %v201, %v201
      %203 = vrot.lane.b32.xlu0 %v202, 96
      %v204 = vpop.permute.xlu0 %203
      %v206 = vsel %vm168, %v199, 0
      %vm208 = vcmask 1043456
      %v210 = vsel %vm208, %v204, 0
      %212 = vmatpush.bf16.msra.mxu0 0
      %213 = vmatpush.bf16.msra.mxu0 0
      %214 = vmatpush.bf16.msra.mxu0 0
      %215 = vmatpush.bf16.msra.mxu0 0
      %216 = vmatpush.bf16.msra.mxu0 0
      %217 = vmatpush.bf16.msra.mxu0 0
      %218 = vmatpush.bf16.msra.mxu0 0
      %219 = vmatpush.bf16.msra.mxu0 %v210
      %220 = vmatmul.bf16.gmra.mxu0 %v206
      %v221 = vpop.f32.mrf.mxu0
      %v222 = vadd.f32 0.0, %v221
      %v223 = vpop.f32.mrf.mxu0
      %224 = vdwg.mxu0
      %v226 = vunpack.c.l.b16 %v159
      %v227 = vpack.c.b16 %v226, %v226
      %228 = vrot.lane.b32.xlu0 %v227, 120
      %v229 = vpop.permute.xlu0 %228
      %230 = vrot.lane.b32.xlu0 %v202, 120
      %v231 = vpop.permute.xlu0 %230
      %v233 = vsel %vm168, %v229, 0
      %v236 = vsel %vm168, %v231, 0
      %238 = vmatpush.bf16.xpose.msra.mxu0 0
      %239 = vmatpush.bf16.xpose.msra.mxu0 0
      %240 = vmatpush.bf16.xpose.msra.mxu0 0
      %241 = vmatpush.bf16.xpose.msra.mxu0 0
      %242 = vmatpush.bf16.xpose.msra.mxu0 0
      %243 = vmatpush.bf16.xpose.msra.mxu0 0
      %244 = vmatpush.bf16.xpose.msra.mxu0 0
      %245 = vmatpush.bf16.xpose.msra.mxu0 %v236
      %246 = vmatmul.bf16.gmra.mxu0 %v233
      %v247 = vpop.f32.mrf.mxu0
      %v248 = vadd.f32 %v167, %v247
      %v249 = vpop.f32.mrf.mxu0
      %250 = vdwg.mxu0
      %v251 = vsel %vm168, %v248, -inf
      %252 = vmax.xlane.f32.xlu0 %v251
      %v253 = vpop.xlane.xlu0 %252
      %v254 = vsub.f32 %v248, %v253
      %v255 = vmul.f32 %v254, 1.442695
      %v256 = vpow.pop %v255
      %v257 = vsel %vm168, %v256, 0.0
      %258 = vadd.xlane.f32.xlu0 %v257
      %v259 = vpop.xlane.xlu0 %258
      %v260 = vrcp.pop %v259
      %v261 = vmul.f32 %v256, %v260
      %v262 = vpack.c.bf16 %v261, %v261
      %263 = vrot.lane.b32.xlu0 %v202, 88
      %v264 = vpop.permute.xlu0 %263
      %v266 = vsel %vm168, %v262, 0
      %v269 = vsel %vm208, %v264, 0
      %271 = vmatpush.bf16.msra.mxu0 0
      %272 = vmatpush.bf16.msra.mxu0 0
      %273 = vmatpush.bf16.msra.mxu0 0
      %274 = vmatpush.bf16.msra.mxu0 0
      %275 = vmatpush.bf16.msra.mxu0 0
      %276 = vmatpush.bf16.msra.mxu0 0
      %277 = vmatpush.bf16.msra.mxu0 0
      %278 = vmatpush.bf16.msra.mxu0 %v269
      %279 = vmatmul.bf16.gmra.mxu0 %v266
      %v280 = vpop.f32.mrf.mxu0
      %v281 = vadd.f32 0.0, %v280
      %v282 = vpop.f32.mrf.mxu0
      %283 = vdwg.mxu0
      %284 = vrot.lane.b32.xlu0 %v227, 112
      %v285 = vpop.permute.xlu0 %284
      %286 = vrot.lane.b32.xlu0 %v202, 112
      %v287 = vpop.permute.xlu0 %286
      %v289 = vsel %vm168, %v285, 0
      %v292 = vsel %vm168, %v287, 0
      %294 = vmatpush.bf16.xpose.msra.mxu0 0
      %295 = vmatpush.bf16.xpose.msra.mxu0 0
      %296 = vmatpush.bf16.xpose.msra.mxu0 0
      %297 = vmatpush.bf16.xpose.msra.mxu0 0
      %298 = vmatpush.bf16.xpose.msra.mxu0 0
      %299 = vmatpush.bf16.xpose.msra.mxu0 0
      %300 = vmatpush.bf16.xpose.msra.mxu0 0
      %301 = vmatpush.bf16.xpose.msra.mxu0 %v292
      %302 = vmatmul.bf16.gmra.mxu0 %v289
      %v303 = vpop.f32.mrf.mxu0
      %v304 = vadd.f32 %v167, %v303
      %v305 = vpop.f32.mrf.mxu0
      %306 = vdwg.mxu0
      %v307 = vsel %vm168, %v304, -inf
      %308 = vmax.xlane.f32.xlu0 %v307
      %v309 = vpop.xlane.xlu0 %308
      %v310 = vsub.f32 %v304, %v309
      %v311 = vmul.f32 %v310, 1.442695
      %v312 = vpow.pop %v311
      %v313 = vsel %vm168, %v312, 0.0
      %314 = vadd.xlane.f32.xlu0 %v313
      %v315 = vpop.xlane.xlu0 %314
      %v316 = vrcp.pop %v315
      %v317 = vmul.f32 %v312, %v316
      %v318 = vpack.c.bf16 %v317, %v317
      %319 = vrot.lane.b32.xlu0 %v202, 80
      %v320 = vpop.permute.xlu0 %319
      %v322 = vsel %vm168, %v318, 0
      %v325 = vsel %vm208, %v320, 0
      %327 = vmatpush.bf16.msra.mxu0 0
      %328 = vmatpush.bf16.msra.mxu0 0
      %329 = vmatpush.bf16.msra.mxu0 0
      %330 = vmatpush.bf16.msra.mxu0 0
      %331 = vmatpush.bf16.msra.mxu0 0
      %332 = vmatpush.bf16.msra.mxu0 0
      %333 = vmatpush.bf16.msra.mxu0 0
      %334 = vmatpush.bf16.msra.mxu0 %v325
      %335 = vmatmul.bf16.gmra.mxu0 %v322
      %v336 = vpop.f32.mrf.mxu0
      %v337 = vadd.f32 0.0, %v336
      %v338 = vpop.f32.mrf.mxu0
      %339 = vdwg.mxu0
      %340 = vrot.lane.b32.xlu0 %v227, 104
      %v341 = vpop.permute.xlu0 %340
      %342 = vrot.lane.b32.xlu0 %v202, 104
      %v343 = vpop.permute.xlu0 %342
      %v345 = vsel %vm168, %v341, 0
      %v348 = vsel %vm168, %v343, 0
      %350 = vmatpush.bf16.xpose.msra.mxu0 0
      %351 = vmatpush.bf16.xpose.msra.mxu0 0
      %352 = vmatpush.bf16.xpose.msra.mxu0 0
      %353 = vmatpush.bf16.xpose.msra.mxu0 0
      %354 = vmatpush.bf16.xpose.msra.mxu0 0
      %355 = vmatpush.bf16.xpose.msra.mxu0 0
      %356 = vmatpush.bf16.xpose.msra.mxu0 0
      %357 = vmatpush.bf16.xpose.msra.mxu0 %v348
      %358 = vmatmul.bf16.gmra.mxu0 %v345
      %v359 = vpop.f32.mrf.mxu0
      %v360 = vadd.f32 %v167, %v359
      %v361 = vpop.f32.mrf.mxu0
      %362 = vdwg.mxu0
      %v363 = vsel %vm168, %v360, -inf
      %364 = vmax.xlane.f32.xlu0 %v363
      %v365 = vpop.xlane.xlu0 %364
      %v366 = vsub.f32 %v360, %v365
      %v367 = vmul.f32 %v366, 1.442695
      %v368 = vpow.pop %v367
      %v369 = vsel %vm168, %v368, 0.0
      %370 = vadd.xlane.f32.xlu0 %v369
      %v371 = vpop.xlane.xlu0 %370
      %v372 = vrcp.pop %v371
      %v373 = vmul.f32 %v368, %v372
      %v374 = vpack.c.bf16 %v373, %v373
      %375 = vrot.lane.b32.xlu0 %v202, 72
      %v376 = vpop.permute.xlu0 %375
      %v378 = vsel %vm168, %v374, 0
      %v381 = vsel %vm208, %v376, 0
      %383 = vmatpush.bf16.msra.mxu0 0
      %384 = vmatpush.bf16.msra.mxu0 0
      %385 = vmatpush.bf16.msra.mxu0 0
      %386 = vmatpush.bf16.msra.mxu0 0
      %387 = vmatpush.bf16.msra.mxu0 0
      %388 = vmatpush.bf16.msra.mxu0 0
      %389 = vmatpush.bf16.msra.mxu0 0
      %390 = vmatpush.bf16.msra.mxu0 %v381
      %391 = vmatmul.bf16.gmra.mxu0 %v378
      %v392 = vpop.f32.mrf.mxu0
      %v393 = vadd.f32 0.0, %v392
      %v394 = vpop.f32.mrf.mxu0
      %395 = vdwg.mxu0
      %397 = vrot.lane.b32.xlu0 %v281, 8
      %v398 = vpop.permute.xlu0 %397
      %401 = vrot.lane.b32.xlu0 %v337, 16
      %v402 = vpop.permute.xlu0 %401
      %405 = vrot.lane.b32.xlu0 %v393, 24
      %v406 = vpop.permute.xlu0 %405
      %v408 = vsel %vm168, %v222, %v398
      %vm409 = vcmask 130048
      %v410 = vsel %vm409, %v408, %v402
      %vm411 = vcmask 195584
      %v412 = vsel %vm411, %v410, %v406
      %vm413 = vcmask 261120
      %414 = vst.msk [vmem:[%s155] sm:$0xff] %vm413, %v412
      %p415 = scmp.lt.s32.totalorder %s13, 1
      %s416 = scalar_select %p415, %s13, 1
      %s417 = smul.addr %s416, 8
      %s418 = scalar_lea.vmem %s2, %s417
      // Predicated region
      $region29: #{transformer_forward.35} parent=27 // pred_check
        %p419 = pneg %p83
      $region30: #{transformer_forward.35} parent=27 // pred_check_branch
        %421 = sbr.rel (%p419) target = $region32
      $region31: #{transformer_forward.35} parent=27 // pred_region
        _
      $region32: #{transformer_forward.35} parent=27 // pred_fallthru
        _
    $region28: #{transformer_forward.35} parent=5 // pred_fallthru
      _
    %p422 = scmp.le.s32.totalorder 2, %s8
    // Predicated region
    $region33: #{transformer_forward.35} parent=5 // pred_check
      %p423 = pneg %p422
    $region34: #{transformer_forward.35} parent=5 // pred_check_branch
      %425 = sbr.rel (%p423) target = $region36
    $region35: #{transformer_forward.35} parent=5 // pred_region
      %s426 = ssub.s32 %s8, 2
      // Predicated region
      $region37: #{transformer_forward.35} parent=35 // pred_check
        %p427 = pneg %p89
      $region38: #{transformer_forward.35} parent=35 // pred_check_branch
        %429 = sbr.rel (%p427) target = $region40
      $region39: #{transformer_forward.35} parent=35 // pred_region
        %p430 = scmp.lt.s32.totalorder %s14, 1
        %s431 = scalar_select %p430, %s14, 1
        %s432 = smul.addr %s431, 8
        %s433 = scalar_lea.vmem %s2, %s432
      $region40: #{transformer_forward.35} parent=35 // pred_fallthru
        _
    $region36: #{transformer_forward.35} parent=5 // pred_fallthru
      _
  $region6: #{transformer_forward.35} parent=0 // loop_footer
    %s12 = sadd.s32 1, %s8
  $region7: #{transformer_forward.35} parent=0 // loop_footer_branch
    %7 = sbr.rel target = $region3
  $region8: #{transformer_forward.35} parent=0 // loop_exit
    _

// kernel: transformer_forward.42
$region0: #{transformer_forward.42}
  #allocation0 [shape = 'u32[]', space=smem, size = 0x4, offset = 0x4, fixed_abs, tag = 'smem constant byte address 0x4 - core index']
  #allocation1 [shape = 'u32[72,128]{1,0:T(1,128)}', space=vmem, size = 0x9000, scoped, tag = 'internal scratch']
  %s0 = inlined_call_operand.vmem [shape: f32[16,32], index: 0, kind: input, shape index: {}]
  %s1 = inlined_call_operand.vmem [shape: bf16[32,96], index: 1, kind: input, shape index: {}]
  %s2 = inlined_call_operand.hbm [shape: f32[1,96], index: 2, kind: input, shape index: {}]
  %s3 = inlined_call_operand.vmem [shape: f32[16,32], index: 3, kind: output, shape index: {0}]
  %s4 = inlined_call_operand.vmem [shape: f32[16,64], index: 4, kind: output, shape index: {1}]
  %5 = xla_tuple %s3, %s4
  %s6 = sld [smem:[#allocation0]]
  $region34: #{transformer_forward.42} parent=0
    _
  %s8 = ssub.s32 1, %s6
  %s9 = scalar_select 0, %s8, %s6
  $region1: #{transformer_forward.42} parent=0
    #allocation2 [shape = 'u8[512]{0}', space=vmem, size = 0x400, scoped, tag = 'input window, operand 2, single buffered']
    #allocation3 [shape = 's32[1]{0}', space=sflag, size = 0x4, scoped, tag = 'scoped memory for transformer_forward.42']
    %10 = vsyncpa [#allocation3], 0
    // Predicated region
    $region2: #{transformer_forward.42} parent=1 // pred_check
      _
    $region3: #{transformer_forward.42} parent=1 // pred_check_branch
      %12 = sbr.rel (0) target = $region5
    $region4: #{transformer_forward.42} parent=1 // pred_region
      _
    $region5: #{transformer_forward.42} parent=1 // pred_fallthru
      _
    // Predicated region
    $region6: #{transformer_forward.42} parent=1 // pred_check
      _
    $region7: #{transformer_forward.42} parent=1 // pred_check_branch
      %14 = sbr.rel (0) target = $region9
    $region8: #{transformer_forward.42} parent=1 // pred_region
      _
    $region9: #{transformer_forward.42} parent=1 // pred_fallthru
      _
    // Predicated region
    $region10: #{transformer_forward.42} parent=1 // pred_check
      _
    $region11: #{transformer_forward.42} parent=1 // pred_check_branch
      %16 = sbr.rel (0) target = $region13
    $region12: #{transformer_forward.42} parent=1 // pred_region
      %18 = vsyncadd [#allocation3], 0
      %s20 = sshll.u32 %s2, 4
      %s21 = int_to_ptr.hbm [resolvable:$true] %s20
      %s22 = sshll.u32 [#allocation2], 4
      %s23 = int_to_ptr.vmem [resolvable:$true] %s22
      %25 = dma.hbm_to_vmem [thread:$0]  %s21, 16, %s23, [#allocation3]
    $region13: #{transformer_forward.42} parent=1 // pred_fallthru
      _
    // Predicated region
    $region14: #{transformer_forward.42} parent=1 // pred_check
      _
    $region15: #{transformer_forward.42} parent=1 // pred_check_branch
      %27 = sbr.rel (0) target = $region17
    $region16: #{transformer_forward.42} parent=1 // pred_region
      %29 = dma.done [#allocation3], 16
    $region17: #{transformer_forward.42} parent=1 // pred_fallthru
      _
    %v31 = vld [vmem:[%s0] sm:$0xff]
    %v32 = vld [vmem:[%s0 + $0x8] sm:$0xff]
    %v33 = vpack.c.bf16 %v32, %v31
    %v34 = vld [vmem:[%s1] sm:$0xf]
    %v35 = vld [vmem:[%s1 + $0x4] sm:$0xf]
    %v36 = vld [vmem:[%s1 + $0x8] sm:$0xf]
    %v37 = vld [vmem:[%s1 + $0xc] sm:$0xf]
    %v38 = vld [vmem:[#allocation2] sm:$0x1]
    %v40 = vperm.slane %v38, 0
    %v46 = vunpack.c.l.b16 %v34
    %v47 = vunpack.c.l.b16 %v35
    %v48 = vunpack.c.l.b16 %v36
    %v49 = vunpack.c.l.b16 %v37
    %v50 = vpack.c.b16 %v47, %v46
    %v51 = vpack.c.b16 %v49, %v48
    %vm54 = vcmask 261120
    %v56 = vsel %vm54, %v33, 0
    %58 = vmatpush.bf16.msra.mxu0 0
    %59 = vmatpush.bf16.msra.mxu0 0
    %60 = vmatpush.bf16.msra.mxu0 0
    %61 = vmatpush.bf16.msra.mxu0 0
    %62 = vmatpush.bf16.msra.mxu0 0
    %63 = vmatpush.bf16.msra.mxu0 0
    %64 = vmatpush.bf16.msra.mxu0 %v51
    %65 = vmatpush.bf16.msra.mxu0 %v50
    %66 = vmatmul.bf16.gmra.mxu0 %v56
    %v67 = vpop.f32.mrf.mxu0
    %v68 = vadd.f32 %v40, %v67
    %v69 = vpop.f32.mrf.mxu0
    %v70 = vadd.f32 %v40, %v69
    %71 = vdwg.mxu0
    %72 = vst.msk [vmem:[%s3] sm:$0xff] %vm54, %v68
    %73 = vst.msk [vmem:[%s3 + $0x8] sm:$0xff] %vm54, %v70
    %76 = vrot.lane.b32.xlu0 %v68, 96
    %v77 = vpop.permute.xlu0 %76
    %78 = vrot.lane.b32.xlu0 %v70, 96
    %v79 = vpop.permute.xlu0 %78
    %vm82 = vcmask 523264
    %83 = vst.msk [vmem:[%s4] sm:$0xff] %vm82, %v77
    %84 = vst.msk [vmem:[%s4 + $0x8] sm:$0xff] %vm82, %v79
    // Predicated region
    $region18: #{transformer_forward.42} parent=1 // pred_check
      _
    $region19: #{transformer_forward.42} parent=1 // pred_check_branch
      %86 = sbr.rel (0) target = $region21
    $region20: #{transformer_forward.42} parent=1 // pred_region
      _
    $region21: #{transformer_forward.42} parent=1 // pred_fallthru
      _
    // Predicated region
    $region22: #{transformer_forward.42} parent=1 // pred_check
      _
    $region23: #{transformer_forward.42} parent=1 // pred_check_branch
      %88 = sbr.rel (0) target = $region25
    $region24: #{transformer_forward.42} parent=1 // pred_region
      _
    $region25: #{transformer_forward.42} parent=1 // pred_fallthru
      _
    // Predicated region
    $region26: #{transformer_forward.42} parent=1 // pred_check
      _
    $region27: #{transformer_forward.42} parent=1 // pred_check_branch
      %90 = sbr.rel (0) target = $region29
    $region28: #{transformer_forward.42} parent=1 // pred_region
      _
    $region29: #{transformer_forward.42} parent=1 // pred_fallthru
      _
    // Predicated region
    $region30: #{transformer_forward.42} parent=1 // pred_check
      _
    $region31: #{transformer_forward.42} parent=1 // pred_check_branch
      %92 = sbr.rel (0) target = $region33
    $region32: #{transformer_forward.42} parent=1 // pred_region
      _
    $region33: #{transformer_forward.42} parent=1 // pred_fallthru
      _
    %93 = vsyncpa [#allocation3], 1

// kernel: transformer_forward.45
$region0: #{transformer_forward.45}
  #allocation0 [shape = 'u32[]', space=smem, size = 0x4, offset = 0x4, fixed_abs, tag = 'smem constant byte address 0x4 - core index']
  #allocation1 [shape = 'u32[72,128]{1,0:T(1,128)}', space=vmem, size = 0x9000, scoped, tag = 'internal scratch']
  %s0 = inlined_call_operand.vmem [shape: f32[16,32], index: 0, kind: input, shape index: {}]
  %s1 = inlined_call_operand.vmem [shape: bf16[32,32], index: 1, kind: input, shape index: {}]
  %s2 = inlined_call_operand.hbm [shape: f32[1,32], index: 2, kind: input, shape index: {}]
  %s3 = inlined_call_operand.vmem [shape: f32[16,32], index: 3, kind: output, shape index: {}]
  %s4 = sld [smem:[#allocation0]]
  $region26: #{transformer_forward.45} parent=0
    _
  %s6 = ssub.s32 1, %s4
  %s7 = scalar_select 0, %s6, %s4
  $region1: #{transformer_forward.45} parent=0
    #allocation2 [shape = 'u8[512]{0}', space=vmem, size = 0x400, scoped, tag = 'input window, operand 2, single buffered']
    #allocation3 [shape = 's32[1]{0}', space=sflag, size = 0x4, scoped, tag = 'scoped memory for transformer_forward.45']
    %8 = vsyncpa [#allocation3], 0
    // Predicated region
    $region2: #{transformer_forward.45} parent=1 // pred_check
      _
    $region3: #{transformer_forward.45} parent=1 // pred_check_branch
      %10 = sbr.rel (0) target = $region5
    $region4: #{transformer_forward.45} parent=1 // pred_region
      _
    $region5: #{transformer_forward.45} parent=1 // pred_fallthru
      _
    // Predicated region
    $region6: #{transformer_forward.45} parent=1 // pred_check
      _
    $region7: #{transformer_forward.45} parent=1 // pred_check_branch
      %12 = sbr.rel (0) target = $region9
    $region8: #{transformer_forward.45} parent=1 // pred_region
      _
    $region9: #{transformer_forward.45} parent=1 // pred_fallthru
      _
    // Predicated region
    $region10: #{transformer_forward.45} parent=1 // pred_check
      _
    $region11: #{transformer_forward.45} parent=1 // pred_check_branch
      %14 = sbr.rel (0) target = $region13
    $region12: #{transformer_forward.45} parent=1 // pred_region
      %16 = vsyncadd [#allocation3], 0
      %s18 = sshll.u32 %s2, 4
      %s19 = int_to_ptr.hbm [resolvable:$true] %s18
      %s20 = sshll.u32 [#allocation2], 4
      %s21 = int_to_ptr.vmem [resolvable:$true] %s20
      %23 = dma.hbm_to_vmem [thread:$0]  %s19, 16, %s21, [#allocation3]
    $region13: #{transformer_forward.45} parent=1 // pred_fallthru
      _
    // Predicated region
    $region14: #{transformer_forward.45} parent=1 // pred_check
      _
    $region15: #{transformer_forward.45} parent=1 // pred_check_branch
      %25 = sbr.rel (0) target = $region17
    $region16: #{transformer_forward.45} parent=1 // pred_region
      %27 = dma.done [#allocation3], 16
    $region17: #{transformer_forward.45} parent=1 // pred_fallthru
      _
    %v29 = vld [vmem:[%s0] sm:$0xff]
    %v30 = vld [vmem:[%s0 + $0x8] sm:$0xff]
    %v31 = vpack.c.bf16 %v30, %v29
    %v32 = vld [vmem:[%s1] sm:$0xf]
    %v33 = vld [vmem:[%s1 + $0x4] sm:$0xf]
    %v34 = vld [vmem:[%s1 + $0x8] sm:$0xf]
    %v35 = vld [vmem:[%s1 + $0xc] sm:$0xf]
    %v36 = vld [vmem:[#allocation2] sm:$0x1]
    %v38 = vperm.slane %v36, 0
    %v44 = vunpack.c.l.b16 %v32
    %v45 = vunpack.c.l.b16 %v33
    %v46 = vunpack.c.l.b16 %v34
    %v47 = vunpack.c.l.b16 %v35
    %v48 = vpack.c.b16 %v45, %v44
    %v49 = vpack.c.b16 %v47, %v46
    %vm52 = vcmask 261120
    %v54 = vsel %vm52, %v31, 0
    %56 = vmatpush.bf16.msra.mxu0 0
    %57 = vmatpush.bf16.msra.mxu0 0
    %58 = vmatpush.bf16.msra.mxu0 0
    %59 = vmatpush.bf16.msra.mxu0 0
    %60 = vmatpush.bf16.msra.mxu0 0
    %61 = vmatpush.bf16.msra.mxu0 0
    %62 = vmatpush.bf16.msra.mxu0 %v49
    %63 = vmatpush.bf16.msra.mxu0 %v48
    %64 = vmatmul.bf16.gmra.mxu0 %v54
    %v65 = vpop.f32.mrf.mxu0
    %v66 = vadd.f32 %v38, %v65
    %v67 = vpop.f32.mrf.mxu0
    %v68 = vadd.f32 %v38, %v67
    %69 = vdwg.mxu0
    %70 = vst.msk [vmem:[%s3] sm:$0xff] %vm52, %v66
    %71 = vst.msk [vmem:[%s3 + $0x8] sm:$0xff] %vm52, %v68
    // Predicated region
    $region18: #{transformer_forward.45} parent=1 // pred_check
      _
    $region19: #{transformer_forward.45} parent=1 // pred_check_branch
      %73 = sbr.rel (0) target = $region21
    $region20: #{transformer_forward.45} parent=1 // pred_region
      _
    $region21: #{transformer_forward.45} parent=1 // pred_fallthru
      _
    // Predicated region
    $region22: #{transformer_forward.45} parent=1 // pred_check
      _
    $region23: #{transformer_forward.45} parent=1 // pred_check_branch
      %75 = sbr.rel (0) target = $region25
    $region24: #{transformer_forward.45} parent=1 // pred_region
      _
    $region25: #{transformer_forward.45} parent=1 // pred_fallthru
      _
    %76 = vsyncpa [#allocation3], 1

// kernel: transformer_forward.41
$region0: #{transformer_forward.41}
  #allocation0 [shape = 'u32[]', space=smem, size = 0x4, offset = 0x4, fixed_abs, tag = 'smem constant byte address 0x4 - core index']
  #allocation1 [shape = 'u32[72,128]{1,0:T(1,128)}', space=vmem, size = 0x9000, scoped, tag = 'internal scratch']
  %s0 = inlined_call_operand.vmem [shape: f32[16,32], index: 0, kind: input, shape index: {}]
  %s1 = inlined_call_operand.vmem [shape: bf16[32,64], index: 1, kind: input, shape index: {}]
  %s2 = inlined_call_operand.hbm [shape: f32[1,64], index: 2, kind: input, shape index: {}]
  %s3 = inlined_call_operand.vmem [shape: f32[16,64], index: 3, kind: output, shape index: {}]
  %s4 = sld [smem:[#allocation0]]
  $region26: #{transformer_forward.41} parent=0
    _
  %s6 = ssub.s32 1, %s4
  %s7 = scalar_select 0, %s6, %s4
  $region1: #{transformer_forward.41} parent=0
    #allocation2 [shape = 'u8[512]{0}', space=vmem, size = 0x400, scoped, tag = 'input window, operand 2, single buffered']
    #allocation3 [shape = 's32[1]{0}', space=sflag, size = 0x4, scoped, tag = 'scoped memory for transformer_forward.41']
    %8 = vsyncpa [#allocation3], 0
    // Predicated region
    $region2: #{transformer_forward.41} parent=1 // pred_check
      _
    $region3: #{transformer_forward.41} parent=1 // pred_check_branch
      %10 = sbr.rel (0) target = $region5
    $region4: #{transformer_forward.41} parent=1 // pred_region
      _
    $region5: #{transformer_forward.41} parent=1 // pred_fallthru
      _
    // Predicated region
    $region6: #{transformer_forward.41} parent=1 // pred_check
      _
    $region7: #{transformer_forward.41} parent=1 // pred_check_branch
      %12 = sbr.rel (0) target = $region9
    $region8: #{transformer_forward.41} parent=1 // pred_region
      _
    $region9: #{transformer_forward.41} parent=1 // pred_fallthru
      _
    // Predicated region
    $region10: #{transformer_forward.41} parent=1 // pred_check
      _
    $region11: #{transformer_forward.41} parent=1 // pred_check_branch
      %14 = sbr.rel (0) target = $region13
    $region12: #{transformer_forward.41} parent=1 // pred_region
      %16 = vsyncadd [#allocation3], 0
      %s18 = sshll.u32 %s2, 4
      %s19 = int_to_ptr.hbm [resolvable:$true] %s18
      %s20 = sshll.u32 [#allocation2], 4
      %s21 = int_to_ptr.vmem [resolvable:$true] %s20
      %23 = dma.hbm_to_vmem [thread:$0]  %s19, 16, %s21, [#allocation3]
    $region13: #{transformer_forward.41} parent=1 // pred_fallthru
      _
    // Predicated region
    $region14: #{transformer_forward.41} parent=1 // pred_check
      _
    $region15: #{transformer_forward.41} parent=1 // pred_check_branch
      %25 = sbr.rel (0) target = $region17
    $region16: #{transformer_forward.41} parent=1 // pred_region
      %27 = dma.done [#allocation3], 16
    $region17: #{transformer_forward.41} parent=1 // pred_fallthru
      _
    %v29 = vld [vmem:[%s0] sm:$0xff]
    %v30 = vld [vmem:[%s0 + $0x8] sm:$0xff]
    %v31 = vpack.c.bf16 %v30, %v29
    %v32 = vld [vmem:[%s1] sm:$0xf]
    %v33 = vld [vmem:[%s1 + $0x4] sm:$0xf]
    %v34 = vld [vmem:[%s1 + $0x8] sm:$0xf]
    %v35 = vld [vmem:[%s1 + $0xc] sm:$0xf]
    %v36 = vld [vmem:[#allocation2] sm:$0x1]
    %v38 = vperm.slane %v36, 0
    %v44 = vunpack.c.l.b16 %v32
    %v45 = vunpack.c.l.b16 %v33
    %v46 = vunpack.c.l.b16 %v34
    %v47 = vunpack.c.l.b16 %v35
    %v48 = vpack.c.b16 %v45, %v44
    %v49 = vpack.c.b16 %v47, %v46
    %vm52 = vcmask 261120
    %v54 = vsel %vm52, %v31, 0
    %56 = vmatpush.bf16.msra.mxu0 0
    %57 = vmatpush.bf16.msra.mxu0 0
    %58 = vmatpush.bf16.msra.mxu0 0
    %59 = vmatpush.bf16.msra.mxu0 0
    %60 = vmatpush.bf16.msra.mxu0 0
    %61 = vmatpush.bf16.msra.mxu0 0
    %62 = vmatpush.bf16.msra.mxu0 %v49
    %63 = vmatpush.bf16.msra.mxu0 %v48
    %64 = vmatmul.bf16.gmra.mxu0 %v54
    %v65 = vpop.f32.mrf.mxu0
    %v66 = vadd.f32 %v38, %v65
    %v67 = vpop.f32.mrf.mxu0
    %v68 = vadd.f32 %v38, %v67
    %69 = vdwg.mxu0
    %vm70 = vcmask 523264
    %71 = vst.msk [vmem:[%s3] sm:$0xff] %vm70, %v66
    %72 = vst.msk [vmem:[%s3 + $0x8] sm:$0xff] %vm70, %v68
    // Predicated region
    $region18: #{transformer_forward.41} parent=1 // pred_check
      _
    $region19: #{transformer_forward.41} parent=1 // pred_check_branch
      %74 = sbr.rel (0) target = $region21
    $region20: #{transformer_forward.41} parent=1 // pred_region
      _
    $region21: #{transformer_forward.41} parent=1 // pred_fallthru
      _
    // Predicated region
    $region22: #{transformer_forward.41} parent=1 // pred_check
      _
    $region23: #{transformer_forward.41} parent=1 // pred_check_branch
      %76 = sbr.rel (0) target = $region25
    $region24: #{transformer_forward.41} parent=1 // pred_region
      _
    $region25: #{transformer_forward.41} parent=1 // pred_fallthru
      _
    %77 = vsyncpa [#allocation3], 1

// kernel: transformer_forward.40
$region0: #{transformer_forward.40}
  #allocation0 [shape = 'u32[]', space=smem, size = 0x4, offset = 0x4, fixed_abs, tag = 'smem constant byte address 0x4 - core index']
  #allocation1 [shape = 'u32[72,128]{1,0:T(1,128)}', space=vmem, size = 0x9000, scoped, tag = 'internal scratch']
  #allocation2 [shape = 'f32[16,32]{1,0:T(8,128)}', space=vmem, size = 0x2000, scoped, tag = 'scratch operand']
  %s0 = inlined_call_operand.vmem [shape: f32[16,32], index: 0, kind: input, shape index: {}, may-alias: {0,5}]
  %s1 = inlined_call_operand.vmem [shape: bf16[32,64], index: 1, kind: input, shape index: {}]
  %s2 = inlined_call_operand.hbm [shape: f32[1,64], index: 2, kind: input, shape index: {}]
  %s3 = inlined_call_operand.vmem [shape: bf16[64,32], index: 3, kind: input, shape index: {}]
  %s4 = inlined_call_operand.hbm [shape: f32[1,32], index: 4, kind: input, shape index: {}]
  %s5 = inlined_call_operand.vmem [shape: f32[16,32], index: 5, kind: input, shape index: {}, may-alias: {0,5}]
  %s6 = inlined_call_operand.hbm [shape: f32[1,32], index: 6, kind: input, shape index: {}]
  %s7 = inlined_call_operand.hbm [shape: f32[1,32], index: 7, kind: input, shape index: {}]
  %s8 = inlined_call_operand.vmem [shape: f32[16,32], index: 8, kind: output, shape index: {}]
  %s9 = sld [smem:[#allocation0]]
  $region66: #{transformer_forward.40} parent=0
    _
  %s11 = ssub.s32 1, %s9
  %s12 = scalar_select 0, %s11, %s9
  $region1: #{transformer_forward.40} parent=0
    #allocation3 [shape = 'u8[512]{0}', space=vmem, size = 0x400, scoped, tag = 'input window, operand 2, single buffered']
    #allocation4 [shape = 's32[1]{0}', space=sflag, size = 0x4, scoped, tag = 'scoped memory for transformer_forward.40']
    #allocation5 [shape = 'u8[512]{0}', space=vmem, size = 0x400, scoped, tag = 'input window, operand 4, single buffered']
    #allocation6 [shape = 's32[1]{0}', space=sflag, size = 0x4, scoped, tag = 'scoped memory for transformer_forward.40']
    #allocation7 [shape = 'u8[512]{0}', space=vmem, size = 0x400, scoped, tag = 'input window, operand 6, single buffered']
    #allocation8 [shape = 'u8[512]{0}', space=vmem, size = 0x400, scoped, tag = 'input window, operand 7, single buffered']
    #allocation9 [shape = 's32[1]{0}', space=sflag, size = 0x4, scoped, tag = 'scoped memory for transformer_forward.40']
    %13 = vsyncpa [#allocation4], 0
    %14 = vsyncpa [#allocation6], 0
    %15 = vsyncpa [#allocation9], 0
    // Predicated region
    $region2: #{transformer_forward.40} parent=1 // pred_check
      _
    $region3: #{transformer_forward.40} parent=1 // pred_check_branch
      %17 = sbr.rel (0) target = $region5
    $region4: #{transformer_forward.40} parent=1 // pred_region
      _
    $region5: #{transformer_forward.40} parent=1 // pred_fallthru
      _
    // Predicated region
    $region6: #{transformer_forward.40} parent=1 // pred_check
      _
    $region7: #{transformer_forward.40} parent=1 // pred_check_branch
      %19 = sbr.rel (0) target = $region9
    $region8: #{transformer_forward.40} parent=1 // pred_region
      _
    $region9: #{transformer_forward.40} parent=1 // pred_fallthru
      _
    // Predicated region
    $region10: #{transformer_forward.40} parent=1 // pred_check
      _
    $region11: #{transformer_forward.40} parent=1 // pred_check_branch
      %21 = sbr.rel (0) target = $region13
    $region12: #{transformer_forward.40} parent=1 // pred_region
      %23 = vsyncadd [#allocation4], 0
      %s25 = sshll.u32 %s2, 4
      %s26 = int_to_ptr.hbm [resolvable:$true] %s25
      %s27 = sshll.u32 [#allocation3], 4
      %s28 = int_to_ptr.vmem [resolvable:$true] %s27
      %30 = dma.hbm_to_vmem [thread:$0]  %s26, 16, %s28, [#allocation4]
    $region13: #{transformer_forward.40} parent=1 // pred_fallthru
      _
    // Predicated region
    $region14: #{transformer_forward.40} parent=1 // pred_check
      _
    $region15: #{transformer_forward.40} parent=1 // pred_check_branch
      %32 = sbr.rel (0) target = $region17
    $region16: #{transformer_forward.40} parent=1 // pred_region
      _
    $region17: #{transformer_forward.40} parent=1 // pred_fallthru
      _
    // Predicated region
    $region18: #{transformer_forward.40} parent=1 // pred_check
      _
    $region19: #{transformer_forward.40} parent=1 // pred_check_branch
      %34 = sbr.rel (0) target = $region21
    $region20: #{transformer_forward.40} parent=1 // pred_region
      %36 = vsyncadd [#allocation6], 0
      %s38 = sshll.u32 %s4, 4
      %s39 = int_to_ptr.hbm [resolvable:$true] %s38
      %s40 = sshll.u32 [#allocation5], 4
      %s41 = int_to_ptr.vmem [resolvable:$true] %s40
      %43 = dma.hbm_to_vmem [thread:$0]  %s39, 16, %s41, [#allocation6]
    $region21: #{transformer_forward.40} parent=1 // pred_fallthru
      _
    // Predicated region
    $region22: #{transformer_forward.40} parent=1 // pred_check
      _
    $region23: #{transformer_forward.40} parent=1 // pred_check_branch
      %45 = sbr.rel (0) target = $region25
    $region24: #{transformer_forward.40} parent=1 // pred_region
      _
    $region25: #{transformer_forward.40} parent=1 // pred_fallthru
      _
    // Predicated region
    $region26: #{transformer_forward.40} parent=1 // pred_check
      _
    $region27: #{transformer_forward.40} parent=1 // pred_check_branch
      %47 = sbr.rel (0) target = $region29
    $region28: #{transformer_forward.40} parent=1 // pred_region
      %49 = vsyncadd [#allocation6], 0
      %s51 = sshll.u32 %s6, 4
      %s52 = int_to_ptr.hbm [resolvable:$true] %s51
      %s53 = sshll.u32 [#allocation7], 4
      %s54 = int_to_ptr.vmem [resolvable:$true] %s53
      %56 = dma.hbm_to_vmem [thread:$0]  %s52, 16, %s54, [#allocation6]
    $region29: #{transformer_forward.40} parent=1 // pred_fallthru
      _
    // Predicated region
    $region30: #{transformer_forward.40} parent=1 // pred_check
      _
    $region31: #{transformer_forward.40} parent=1 // pred_check_branch
      %58 = sbr.rel (0) target = $region33
    $region32: #{transformer_forward.40} parent=1 // pred_region
      %60 = vsyncadd [#allocation9], 0
      %s62 = sshll.u32 %s7, 4
      %s63 = int_to_ptr.hbm [resolvable:$true] %s62
      %s64 = sshll.u32 [#allocation8], 4
      %s65 = int_to_ptr.vmem [resolvable:$true] %s64
      %67 = dma.hbm_to_vmem [thread:$0]  %s63, 16, %s65, [#allocation9]
    $region33: #{transformer_forward.40} parent=1 // pred_fallthru
      _
    // Predicated region
    $region34: #{transformer_forward.40} parent=1 // pred_check
      _
    $region35: #{transformer_forward.40} parent=1 // pred_check_branch
      %69 = sbr.rel (0) target = $region37
    $region36: #{transformer_forward.40} parent=1 // pred_region
      %71 = dma.done [#allocation4], 16
    $region37: #{transformer_forward.40} parent=1 // pred_fallthru
      _
    // Predicated region
    $region38: #{transformer_forward.40} parent=1 // pred_check
      _
    $region39: #{transformer_forward.40} parent=1 // pred_check_branch
      %73 = sbr.rel (0) target = $region41
    $region40: #{transformer_forward.40} parent=1 // pred_region
      %75 = dma.done [#allocation6], 16
    $region41: #{transformer_forward.40} parent=1 // pred_fallthru
      _
    // Predicated region
    $region42: #{transformer_forward.40} parent=1 // pred_check
      _
    $region43: #{transformer_forward.40} parent=1 // pred_check_branch
      %77 = sbr.rel (0) target = $region45
    $region44: #{transformer_forward.40} parent=1 // pred_region
      %79 = dma.done [#allocation6], 16
    $region45: #{transformer_forward.40} parent=1 // pred_fallthru
      _
    // Predicated region
    $region46: #{transformer_forward.40} parent=1 // pred_check
      _
    $region47: #{transformer_forward.40} parent=1 // pred_check_branch
      %81 = sbr.rel (0) target = $region49
    $region48: #{transformer_forward.40} parent=1 // pred_region
      %83 = dma.done [#allocation9], 16
    $region49: #{transformer_forward.40} parent=1 // pred_fallthru
      _
    %p85 = scmp.eq.s32.totalorder 0, 0
    // Predicated region
    $region50: #{transformer_forward.40} parent=1 // pred_check
      %p86 = pneg %p85
    $region51: #{transformer_forward.40} parent=1 // pred_check_branch
      %88 = sbr.rel (%p86) target = $region53
    $region52: #{transformer_forward.40} parent=1 // pred_region
      %vm89 = vcmask 261120
      %90 = vst.msk [vmem:[#allocation2] sm:$0xff] %vm89, 0.0
      %91 = vst.msk [vmem:[#allocation2 + $0x8] sm:$0xff] %vm89, 0.0
    $region53: #{transformer_forward.40} parent=1 // pred_fallthru
      _
    %v92 = vld [vmem:[%s0] sm:$0xff]
    %v93 = vld [vmem:[%s0 + $0x8] sm:$0xff]
    %v94 = vpack.c.bf16 %v93, %v92
    %v95 = vld [vmem:[%s1] sm:$0xf]
    %v96 = vld [vmem:[%s1 + $0x4] sm:$0xf]
    %v97 = vld [vmem:[%s1 + $0x8] sm:$0xf]
    %v98 = vld [vmem:[%s1 + $0xc] sm:$0xf]
    %v99 = vld [vmem:[#allocation3] sm:$0x1]
    %v101 = vperm.slane %v99, 0
    %v107 = vunpack.c.l.b16 %v95
    %v108 = vunpack.c.l.b16 %v96
    %v109 = vunpack.c.l.b16 %v97
    %v110 = vunpack.c.l.b16 %v98
    %v111 = vpack.c.b16 %v108, %v107
    %v112 = vpack.c.b16 %v110, %v109
    %vm115 = vcmask 261120
    %v117 = vsel %vm115, %v94, 0
    %119 = vmatpush.bf16.msra.mxu0 0
    %120 = vmatpush.bf16.msra.mxu0 0
    %121 = vmatpush.bf16.msra.mxu0 0
    %122 = vmatpush.bf16.msra.mxu0 0
    %123 = vmatpush.bf16.msra.mxu0 0
    %124 = vmatpush.bf16.msra.mxu0 0
    %125 = vmatpush.bf16.msra.mxu0 %v112
    %126 = vmatpush.bf16.msra.mxu0 %v111
    %127 = vmatmul.bf16.gmra.mxu0 %v117
    %v128 = vpop.f32.mrf.mxu0
    %v129 = vadd.f32 %v101, %v128
    %v130 = vpop.f32.mrf.mxu0
    %v131 = vadd.f32 %v101, %v130
    %132 = vdwg.mxu0
    %v133 = vmax.f32 %v129, 0.0
    %v134 = vmax.f32 %v131, 0.0
    %v135 = vpack.c.bf16 %v134, %v133
    %v136 = vld [vmem:[#allocation2] sm:$0xff]
    %v137 = vld [vmem:[#allocation2 + $0x8] sm:$0xff]
    %v138 = vld [vmem:[%s3] sm:$0xf]
    %v139 = vld [vmem:[%s3 + $0x4] sm:$0xf]
    %v140 = vld [vmem:[%s3 + $0x8] sm:$0xf]
    %v141 = vld [vmem:[%s3 + $0xc] sm:$0xf]
    %v142 = vld [vmem:[%s3 + $0x10] sm:$0xf]
    %v143 = vld [vmem:[%s3 + $0x14] sm:$0xf]
    %v144 = vld [vmem:[%s3 + $0x18] sm:$0xf]
    %v145 = vld [vmem:[%s3 + $0x1c] sm:$0xf]
    %v154 = vunpack.c.l.b16 %v138
    %v155 = vunpack.c.l.b16 %v139
    %v156 = vunpack.c.l.b16 %v140
    %v157 = vunpack.c.l.b16 %v141
    %v158 = vunpack.c.l.b16 %v142
    %v159 = vunpack.c.l.b16 %v143
    %v160 = vunpack.c.l.b16 %v144
    %v161 = vunpack.c.l.b16 %v145
    %v162 = vpack.c.b16 %v155, %v154
    %v163 = vpack.c.b16 %v157, %v156
    %v164 = vpack.c.b16 %v159, %v158
    %v165 = vpack.c.b16 %v161, %v160
    %vm170 = vcmask 523264
    %v172 = vsel %vm170, %v135, 0
    %174 = vmatpush.bf16.msra.mxu0 0
    %175 = vmatpush.bf16.msra.mxu0 0
    %176 = vmatpush.bf16.msra.mxu0 0
    %177 = vmatpush.bf16.msra.mxu0 0
    %178 = vmatpush.bf16.msra.mxu0 %v165
    %179 = vmatpush.bf16.msra.mxu0 %v164
    %180 = vmatpush.bf16.msra.mxu0 %v163
    %181 = vmatpush.bf16.msra.mxu0 %v162
    %182 = vmatmul.bf16.gmra.mxu0 %v172
    %v183 = vpop.f32.mrf.mxu0
    %v184 = vadd.f32 0.0, %v183
    %v185 = vpop.f32.mrf.mxu0
    %v186 = vadd.f32 0.0, %v185
    %187 = vdwg.mxu0
    %v188 = vadd.f32 %v136, %v184
    %v189 = vadd.f32 %v137, %v186
    %190 = vst.msk [vmem:[#allocation2] sm:$0xff] %vm115, %v188
    %191 = vst.msk [vmem:[#allocation2 + $0x8] sm:$0xff] %vm115, %v189
    // Predicated region
    $region54: #{transformer_forward.40} parent=1 // pred_check
      %p192 = pneg %p85
    $region55: #{transformer_forward.40} parent=1 // pred_check_branch
      %194 = sbr.rel (%p192) target = $region57
    $region56: #{transformer_forward.40} parent=1 // pred_region
      %v195 = vld [vmem:[#allocation2] sm:$0xff]
      %v196 = vld [vmem:[#allocation2 + $0x8] sm:$0xff]
      %v197 = vld [vmem:[#allocation5] sm:$0x1]
      %v199 = vperm.slane %v197, 0
      %v201 = vadd.f32 %v195, %v199
      %v202 = vadd.f32 %v196, %v199
      %v203 = vld [vmem:[%s5] sm:$0xff]
      %v204 = vld [vmem:[%s5 + $0x8] sm:$0xff]
      %v205 = vadd.f32 %v201, %v203
      %v206 = vadd.f32 %v202, %v204
      %v207 = vsel %vm115, %v205, 0.0
      %208 = vadd.xlane.f32.xlu0 %v207
      %v209 = vpop.xlane.xlu0 %208
      %v210 = vsel %vm115, %v206, 0.0
      %211 = vadd.xlane.f32.xlu0 %v210
      %v212 = vpop.xlane.xlu0 %211
      %v213 = vrcp.pop 32.0
      %v214 = vmul.f32 32.0, %v213
      %v215 = vsub.f32 1.0, %v214
      %v216 = vmul.f32 %v213, %v215
      %v217 = vadd.f32 %v213, %v216
      %vm218 = vweird.f32 %v213
      %v219 = vsel %vm218, %v213, %v217
      %v220 = vmul.f32 %v209, %v219
      %v221 = vmul.f32 %v212, %v219
      %v222 = vsub.f32 %v205, %v220
      %v223 = vsub.f32 %v206, %v221
      %v224 = vmul.f32 %v222, %v222
      %v225 = vmul.f32 %v223, %v223
      %v226 = vsel %vm115, %v224, 0.0
      %227 = vadd.xlane.f32.xlu0 %v226
      %v228 = vpop.xlane.xlu0 %227
      %v229 = vsel %vm115, %v225, 0.0
      %230 = vadd.xlane.f32.xlu0 %v229
      %v231 = vpop.xlane.xlu0 %230
      %v232 = vmul.f32 %v228, %v219
      %v233 = vmul.f32 %v231, %v219
      %v234 = vadd.f32 %v232, 1e-05
      %v235 = vadd.f32 %v233, 1e-05
      %v236 = vrsqrt.pop %v234
      %v237 = vmul.f32 %v236, %v234
      %v238 = vmul.f32 %v237, %v236
      %v239 = vmul.f32 0.5, %v238
      %v240 = vsub.f32 1.5, %v239
      %v241 = vmul.f32 %v236, %v240
      %vm242 = vweird.f32 %v234
      %vm243 = vweird.f32 %v236
      %vm244 = vmor %vm242, %vm243
      %v245 = vsel %vm244, %v236, %v241
      %v246 = vrsqrt.pop %v235
      %v247 = vmul.f32 %v246, %v235
      %v248 = vmul.f32 %v247, %v246
      %v249 = vmul.f32 0.5, %v248
      %v250 = vsub.f32 1.5, %v249
      %v251 = vmul.f32 %v246, %v250
      %vm252 = vweird.f32 %v235
      %vm253 = vweird.f32 %v246
      %vm254 = vmor %vm252, %vm253
      %v255 = vsel %vm254, %v246, %v251
      %v256 = vmul.f32 %v222, %v245
      %v257 = vmul.f32 %v223, %v255
      %v258 = vld [vmem:[#allocation7] sm:$0x1]
      %v260 = vperm.slane %v258, 0
      %v262 = vmul.f32 %v256, %v260
      %v263 = vmul.f32 %v257, %v260
      %v264 = vld [vmem:[#allocation8] sm:$0x1]
      %v266 = vperm.slane %v264, 0
      %v268 = vadd.f32 %v262, %v266
      %v269 = vadd.f32 %v263, %v266
      %270 = vst.msk [vmem:[%s8] sm:$0xff] %vm115, %v268
      %271 = vst.msk [vmem:[%s8 + $0x8] sm:$0xff] %vm115, %v269
    $region57: #{transformer_forward.40} parent=1 // pred_fallthru
      _
    // Predicated region
    $region58: #{transformer_forward.40} parent=1 // pred_check
      _
    $region59: #{transformer_forward.40} parent=1 // pred_check_branch
      %273 = sbr.rel (0) target = $region61
    $region60: #{transformer_forward.40} parent=1 // pred_region
      _
    $region61: #{transformer_forward.40} parent=1 // pred_fallthru
      _
    // Predicated region
    $region62: #{transformer_forward.40} parent=1 // pred_check
      _
    $region63: #{transformer_forward.40} parent=1 // pred_check_branch
      %275 = sbr.rel (0) target = $region65
    $region64: #{transformer_forward.40} parent=1 // pred_region
      _
    $region65: #{transformer_forward.40} parent=1 // pred_fallthru
      _
    %276 = vsyncpa [#allocation4], 1
    %277 = vsyncpa [#allocation6], 1
    %278 = vsyncpa [#allocation9], 1

// kernel: transformer_forward.49
$region0: #{transformer_forward.49}
  #allocation0 [shape = 'u32[]', space=smem, size = 0x4, offset = 0x4, fixed_abs, tag = 'smem constant byte address 0x4 - core index']
  #allocation1 [shape = 'u32[72,128]{1,0:T(1,128)}', space=vmem, size = 0x9000, scoped, tag = 'internal scratch']
  %s0 = inlined_call_operand.vmem [shape: f32[16,32], index: 0, kind: input, shape index: {}]
  %s1 = inlined_call_operand.vmem [shape: bf16[32,40], index: 1, kind: input, shape index: {}]
  %s2 = inlined_call_operand.vmem [shape: f32[1,40], index: 2, kind: input, shape index: {}]
  %s3 = inlined_call_operand.hbm [shape: f32[16,40], index: 3, kind: output, shape index: {}]
  %s4 = sld [smem:[#allocation0]]
  $region22: #{transformer_forward.49} parent=0
    _
  %s6 = ssub.s32 1, %s4
  %s7 = scalar_select 0, %s6, %s4
  $region1: #{transformer_forward.49} parent=0
    #allocation2 [shape = 'u8[8192]{0}', space=vmem, size = 0x2000, scoped, tag = 'output window, operand 0, single buffered']
    #allocation3 [shape = 's32[1]{0}', space=sflag, size = 0x4, scoped, tag = 'scoped memory for transformer_forward.49']
    %8 = vsyncpa [#allocation3], 0
    // Predicated region
    $region2: #{transformer_forward.49} parent=1 // pred_check
      _
    $region3: #{transformer_forward.49} parent=1 // pred_check_branch
      %10 = sbr.rel (0) target = $region5
    $region4: #{transformer_forward.49} parent=1 // pred_region
      _
    $region5: #{transformer_forward.49} parent=1 // pred_fallthru
      _
    // Predicated region
    $region6: #{transformer_forward.49} parent=1 // pred_check
      _
    $region7: #{transformer_forward.49} parent=1 // pred_check_branch
      %12 = sbr.rel (0) target = $region9
    $region8: #{transformer_forward.49} parent=1 // pred_region
      _
    $region9: #{transformer_forward.49} parent=1 // pred_fallthru
      _
    // Predicated region
    $region10: #{transformer_forward.49} parent=1 // pred_check
      _
    $region11: #{transformer_forward.49} parent=1 // pred_check_branch
      %14 = sbr.rel (0) target = $region13
    $region12: #{transformer_forward.49} parent=1 // pred_region
      _
    $region13: #{transformer_forward.49} parent=1 // pred_fallthru
      _
    %v16 = vld [vmem:[%s0] sm:$0xff]
    %v17 = vld [vmem:[%s0 + $0x8] sm:$0xff]
    %v18 = vpack.c.bf16 %v17, %v16
    %v19 = vld [vmem:[%s1] sm:$0xf]
    %v20 = vld [vmem:[%s1 + $0x4] sm:$0xf]
    %v21 = vld [vmem:[%s1 + $0x8] sm:$0xf]
    %v22 = vld [vmem:[%s1 + $0xc] sm:$0xf]
    %v23 = vld [vmem:[%s2] sm:$0x1]
    %v25 = vperm.slane %v23, 0
    %v31 = vunpack.c.l.b16 %v19
    %v32 = vunpack.c.l.b16 %v20
    %v33 = vunpack.c.l.b16 %v21
    %v34 = vunpack.c.l.b16 %v22
    %v35 = vpack.c.b16 %v32, %v31
    %v36 = vpack.c.b16 %v34, %v33
    %vm39 = vcmask 261120
    %v41 = vsel %vm39, %v18, 0
    %43 = vmatpush.bf16.msra.mxu0 0
    %44 = vmatpush.bf16.msra.mxu0 0
    %45 = vmatpush.bf16.msra.mxu0 0
    %46 = vmatpush.bf16.msra.mxu0 0
    %47 = vmatpush.bf16.msra.mxu0 0
    %48 = vmatpush.bf16.msra.mxu0 0
    %49 = vmatpush.bf16.msra.mxu0 %v36
    %50 = vmatpush.bf16.msra.mxu0 %v35
    %51 = vmatmul.bf16.gmra.mxu0 %v41
    %v52 = vpop.f32.mrf.mxu0
    %v53 = vadd.f32 %v25, %v52
    %v54 = vpop.f32.mrf.mxu0
    %v55 = vadd.f32 %v25, %v54
    %56 = vdwg.mxu0
    %vm57 = vcmask 326656
    %58 = vst.msk [vmem:[#allocation2] sm:$0xff] %vm57, %v53
    %59 = vst.msk [vmem:[#allocation2 + $0x8] sm:$0xff] %vm57, %v55
    // Predicated region
    $region14: #{transformer_forward.49} parent=1 // pred_check
      _
    $region15: #{transformer_forward.49} parent=1 // pred_check_branch
      %61 = sbr.rel (0) target = $region17
    $region16: #{transformer_forward.49} parent=1 // pred_region
      %63 = vsyncadd [#allocation3], 0
      %s64 = sshll.u32 [#allocation2], 4
      %s65 = int_to_ptr.vmem [resolvable:$true] %s64
      %s66 = sshll.u32 %s3, 4
      %s67 = int_to_ptr.hbm [resolvable:$true] %s66
      %72 = dma.vmem_to_hbm [thread:$0]  %s65, 256, %s67, [#allocation3], 128, 128, 8
    $region17: #{transformer_forward.49} parent=1 // pred_fallthru
      _
    // Predicated region
    $region18: #{transformer_forward.49} parent=1 // pred_check
      _
    $region19: #{transformer_forward.49} parent=1 // pred_check_branch
      %74 = sbr.rel (0) target = $region21
    $region20: #{transformer_forward.49} parent=1 // pred_region
      %76 = dma.done [#allocation3], 256
    $region21: #{transformer_forward.49} parent=1 // pred_fallthru
      _
    %77 = vsyncpa [#allocation3], 1

</llo_original>
